<compile_context>
chip_gen: v7x
topology: tpu7x:2x2x1
jax: 0.10.0
libtpu: 0.0.40
codegen_flags: <defaults>
</compile_context>

<pallas_src>
import functools

import jax
import jax.numpy as jnp
from jax.experimental import pallas as pl
from jax.experimental.pallas import tpu as pltpu


def _bottleneck_kernel(x_ref, w1_ref, b1_ref, w2_ref, b2_ref, w3_ref, b3_ref,
                       out_ref, hpad_ref, *, H, W, planes, dilation):
    """Fused Bottleneck forward for one batch sample (NHWC, BN pre-folded)."""
    Cin = x_ref.shape[-1]          # == 4 * planes (identity residual)
    d = dilation

    x = x_ref[...]                 # (H, W, Cin)
    x2d = x.reshape(H * W, Cin)

    # conv1 (1x1) + bn1 (folded) + relu  ->  (H*W, planes)
    h1 = jnp.dot(x2d, w1_ref[...], preferred_element_type=jnp.float32) + b1_ref[...]
    h1 = jnp.maximum(h1, 0.0)

    # Zero-padded copy of h1 for the 3x3 dilated conv (padding = dilation).
    hpad_ref[...] = jnp.zeros_like(hpad_ref)
    hpad_ref[d:d + H, d:d + W, :] = h1.reshape(H, W, planes)

    # conv2 (3x3, stride 1, dilation d) + bn2 (folded) + relu
    # 9 taps = 9 accumulated MXU matmuls with M = H*W rows.
    acc = jnp.zeros((H * W, planes), jnp.float32)
    for ky in range(3):
        for kx in range(3):
            win = hpad_ref[ky * d:ky * d + H, kx * d:kx * d + W, :]   # (H, W, planes)
            acc = acc + jnp.dot(win.reshape(H * W, planes), w2_ref[3 * ky + kx],
                                preferred_element_type=jnp.float32)
    h2 = jnp.maximum(acc + b2_ref[...], 0.0)

    # conv3 (1x1) + bn3 (folded), identity residual add, relu
    h3 = jnp.dot(h2, w3_ref[...], preferred_element_type=jnp.float32) + b3_ref[...]
    out = jnp.maximum(h3 + x2d, 0.0)
    out_ref[...] = out.reshape(H, W, Cin).astype(out_ref.dtype)


def bottleneck_pallas(x_nchw, params, *, stride=1, dilation=1, eps=1e-5):
    assert stride == 1, "stride > 1 (with downsample) not implemented"
    N, Cin, H, W = x_nchw.shape
    planes = params["conv1_w"].shape[0]
    assert Cin == 4 * planes, "identity residual requires inplanes == 4*planes"

    # ---- Fold BatchNorm (eval mode) into the conv weights / per-channel bias ----
    s1 = params["bn1_g"] / jnp.sqrt(params["bn1_v"] + eps)
    w1 = (params["conv1_w"][:, :, 0, 0] * s1[:, None]).T                  # (Cin, planes)
    b1 = (params["bn1_b"] - params["bn1_m"] * s1)[None, :]                # (1, planes)

    s2 = params["bn2_g"] / jnp.sqrt(params["bn2_v"] + eps)
    w2 = params["conv2_w"] * s2[:, None, None, None]                      # (planes, planes, 3, 3)
    w2 = jnp.transpose(w2, (2, 3, 1, 0)).reshape(9, planes, planes)       # (tap, in, out)
    b2 = (params["bn2_b"] - params["bn2_m"] * s2)[None, :]                # (1, planes)

    s3 = params["bn3_g"] / jnp.sqrt(params["bn3_v"] + eps)
    w3 = (params["conv3_w"][:, :, 0, 0] * s3[:, None]).T                  # (planes, 4*planes)
    b3 = (params["bn3_b"] - params["bn3_m"] * s3)[None, :]                # (1, 4*planes)

    # NCHW -> NHWC (channels on the lane dim)
    x = jnp.transpose(x_nchw, (0, 2, 3, 1)).astype(jnp.float32)

    kernel = functools.partial(_bottleneck_kernel,
                               H=H, W=W, planes=planes, dilation=dilation)

    rep2 = lambda i: (0, 0)
    rep3 = lambda i: (0, 0, 0)

    out_nhwc = pl.pallas_call(
        kernel,
        out_shape=jax.ShapeDtypeStruct((N, H, W, Cin), jnp.float32),
        grid=(N,),
        in_specs=[
            pl.BlockSpec((None, H, W, Cin), lambda i: (i, 0, 0, 0)),   # per-sample activation
            pl.BlockSpec(w1.shape, rep2),                              # replicated weights
            pl.BlockSpec(b1.shape, rep2),
            pl.BlockSpec(w2.shape, rep3),
            pl.BlockSpec(b2.shape, rep2),
            pl.BlockSpec(w3.shape, rep2),
            pl.BlockSpec(b3.shape, rep2),
        ],
        out_specs=pl.BlockSpec((None, H, W, Cin), lambda i: (i, 0, 0, 0)),
        scratch_shapes=[
            pltpu.VMEM((H + 2 * dilation, W + 2 * dilation, planes), jnp.float32),
        ],
        compiler_params=pltpu.CompilerParams(dimension_semantics=("parallel",)),
    )(x, w1, b1, w2, b2, w3, b3)

    return jnp.transpose(out_nhwc, (0, 3, 1, 2))


# ------------------------- pure-JAX reference ------------------------------
def bottleneck_reference(x, p, *, stride=1, dilation=1, eps=1e-5):
    def conv(x, w, s, d, pad):
        return jax.lax.conv_general_dilated(
            x, w, window_strides=(s, s),
            padding=[(pad, pad), (pad, pad)],
            rhs_dilation=(d, d),
            dimension_numbers=("NCHW", "OIHW", "NCHW"))

    def bn(x, g, b, m, v):
        inv = 1.0 / jnp.sqrt(v + eps)
        return (x - m[None, :, None, None]) * (g * inv)[None, :, None, None] \
               + b[None, :, None, None]

    out = conv(x, p["conv1_w"], 1, 1, 0)
    out = jax.nn.relu(bn(out, p["bn1_g"], p["bn1_b"], p["bn1_m"], p["bn1_v"]))
    out = conv(out, p["conv2_w"], stride, dilation, dilation)
    out = jax.nn.relu(bn(out, p["bn2_g"], p["bn2_b"], p["bn2_m"], p["bn2_v"]))
    out = conv(out, p["conv3_w"], 1, 1, 0)
    out = bn(out, p["bn3_g"], p["bn3_b"], p["bn3_m"], p["bn3_v"])
    return jax.nn.relu(out + x)


def make_params(key, inplanes, planes):
    ks = jax.random.split(key, 6)

    def conv_init(k, cout, cin, kh, kw):
        bound = 1.0 / ((cin * kh * kw) ** 0.5)
        return jax.random.uniform(k, (cout, cin, kh, kw), jnp.float32, -bound, bound)

    p = {
        "conv1_w": conv_init(ks[0], planes, inplanes, 1, 1),
        "conv2_w": conv_init(ks[1], planes, planes, 3, 3),
        "conv3_w": conv_init(ks[2], 4 * planes, planes, 1, 1),
    }
    for i, (name, c) in enumerate([("bn1", planes), ("bn2", planes), ("bn3", 4 * planes)]):
        kg, kb, km, kv = jax.random.split(ks[3 + i], 4)
        p[f"{name}_g"] = jax.random.uniform(kg, (c,), jnp.float32, 0.5, 1.5)
        p[f"{name}_b"] = jax.random.uniform(kb, (c,), jnp.float32, -0.5, 0.5)
        p[f"{name}_m"] = jax.random.uniform(km, (c,), jnp.float32, -0.5, 0.5)
        p[f"{name}_v"] = jax.random.uniform(kv, (c,), jnp.float32, 0.5, 1.5)
    return p


if __name__ == "__main__":
    # Small shapes consistent with the module: batch=2, planes=32,
    # inplanes = 4*planes = 128 (identity residual), 16x16 spatial, stride=1.
    batch, planes, H, W = 2, 32, 16, 16
    inplanes = 4 * planes

    key = jax.random.PRNGKey(0)
    kx, kp = jax.random.split(key)
    x = jax.random.normal(kx, (batch, inplanes, H, W), jnp.float32)
    params = make_params(kp, inplanes, planes)

    out = bottleneck_pallas(x, params)
    out = jax.block_until_ready(out)

    ref = bottleneck_reference(x, params)
    assert out.shape == (batch, inplanes, H, W), out.shape
    max_err = float(jnp.max(jnp.abs(out - ref)))
    assert jnp.allclose(out, ref, atol=2e-4, rtol=2e-4), f"max_err={max_err}"

    print("KERNEL_OK")
</pallas_src>

<mosaic_0001>
module attributes {stable_mosaic.version = 11 : i64} {
  func.func @_bottleneck_kernel(%arg0: i32, %arg1: memref<1x16x16x128xf32, #tpu.memory_space<vmem>>, %arg2: memref<128x32xf32, #tpu.memory_space<vmem>>, %arg3: memref<1x32xf32, #tpu.memory_space<vmem>>, %arg4: memref<9x32x32xf32, #tpu.memory_space<vmem>>, %arg5: memref<1x32xf32, #tpu.memory_space<vmem>>, %arg6: memref<32x128xf32, #tpu.memory_space<vmem>>, %arg7: memref<1x128xf32, #tpu.memory_space<vmem>>, %arg8: memref<1x16x16x128xf32, #tpu.memory_space<vmem>>, %arg9: memref<18x18x32xf32, #tpu.memory_space<vmem>>) attributes {dimension_semantics = [#tpu.dimension_semantics<parallel>], iteration_bounds = array<i64: 2>, scalar_prefetch = 0 : i64, scratch_operands = 1 : i64, tpu.core_type = #tpu.core_type<tc>, window_params = [{transform_indices = @transform_0, window_bounds = array<i64: 1, 16, 16, 128>}, {pipeline_mode = #tpu.pipeline_mode<synchronous>, transform_indices = @transform_1, window_bounds = array<i64: 128, 32>}, {pipeline_mode = #tpu.pipeline_mode<synchronous>, transform_indices = @transform_2, window_bounds = array<i64: 1, 32>}, {pipeline_mode = #tpu.pipeline_mode<synchronous>, transform_indices = @transform_3, window_bounds = array<i64: 9, 32, 32>}, {pipeline_mode = #tpu.pipeline_mode<synchronous>, transform_indices = @transform_4, window_bounds = array<i64: 1, 32>}, {pipeline_mode = #tpu.pipeline_mode<synchronous>, transform_indices = @transform_5, window_bounds = array<i64: 32, 128>}, {pipeline_mode = #tpu.pipeline_mode<synchronous>, transform_indices = @transform_6, window_bounds = array<i64: 1, 128>}, {transform_indices = @transform_7, window_bounds = array<i64: 1, 16, 16, 128>}]} {
    %c0 = arith.constant 0 : index
    %c0_0 = arith.constant 0 : index
    %c0_1 = arith.constant 0 : index
    %c0_2 = arith.constant 0 : index
    %0 = vector.load %arg1[%c0, %c0_0, %c0_1, %c0_2] : memref<1x16x16x128xf32, #tpu.memory_space<vmem>>, vector<1x16x16x128xf32>
    %1 = vector.shape_cast %0 : vector<1x16x16x128xf32> to vector<16x16x128xf32>
    %2 = vector.shape_cast %1 : vector<16x16x128xf32> to vector<256x128xf32>
    %c0_3 = arith.constant 0 : index
    %c0_4 = arith.constant 0 : index
    %3 = vector.load %arg2[%c0_3, %c0_4] : memref<128x32xf32, #tpu.memory_space<vmem>>, vector<128x32xf32>
    %cst = arith.constant dense<0.000000e+00> : vector<256x32xf32>
    %4 = tpu.matmul %2, %3, %cst {dimension_numbers = #tpu.dot_dimension_numbers<[1], [0], [0], [1], [0, 0, 1, 1], [], []>} : vector<256x128xf32>, vector<128x32xf32>, vector<256x32xf32> -> vector<256x32xf32>
    %c0_5 = arith.constant 0 : index
    %c0_6 = arith.constant 0 : index
    %5 = vector.load %arg3[%c0_5, %c0_6] : memref<1x32xf32, #tpu.memory_space<vmem>>, vector<1x32xf32>
    %6 = vector.broadcast %5 : vector<1x32xf32> to vector<256x32xf32>
    %7 = arith.addf %4, %6 : vector<256x32xf32>
    %cst_7 = arith.constant 0.000000e+00 : f32
    %8 = vector.broadcast %cst_7 : f32 to vector<256x32xf32>
    %9 = arith.maximumf %7, %8 : vector<256x32xf32>
    %cst_8 = arith.constant 0.000000e+00 : f32
    %10 = vector.broadcast %cst_8 : f32 to vector<18x18x32xf32>
    %c0_9 = arith.constant 0 : index
    %c0_10 = arith.constant 0 : index
    %c0_11 = arith.constant 0 : index
    %11 = vector.load %arg9[%c0_9, %c0_10, %c0_11] : memref<18x18x32xf32, #tpu.memory_space<vmem>>, vector<18x18x32xf32>
    tpu.vector_store %arg9[%c0_9, %c0_10, %c0_11], %10 {strides = array<i32>} : memref<18x18x32xf32, #tpu.memory_space<vmem>>, vector<18x18x32xf32>,
    %12 = vector.shape_cast %9 : vector<256x32xf32> to vector<16x16x32xf32>
    %c1 = arith.constant 1 : index
    %c1_12 = arith.constant 1 : index
    %c0_13 = arith.constant 0 : index
    %13 = vector.load %arg9[%c1, %c1_12, %c0_13] : memref<18x18x32xf32, #tpu.memory_space<vmem>>, vector<16x16x32xf32>
    tpu.vector_store %arg9[%c1, %c1_12, %c0_13], %12 {strides = array<i32>} : memref<18x18x32xf32, #tpu.memory_space<vmem>>, vector<16x16x32xf32>,
    %cst_14 = arith.constant 0.000000e+00 : f32
    %14 = vector.broadcast %cst_14 : f32 to vector<256x32xf32>
    %c0_15 = arith.constant 0 : index
    %c0_16 = arith.constant 0 : index
    %c0_17 = arith.constant 0 : index
    %15 = vector.load %arg9[%c0_15, %c0_16, %c0_17] : memref<18x18x32xf32, #tpu.memory_space<vmem>>, vector<16x16x32xf32>
    %16 = vector.shape_cast %15 : vector<16x16x32xf32> to vector<256x32xf32>
    %c0_18 = arith.constant 0 : index
    %c0_19 = arith.constant 0 : index
    %c0_20 = arith.constant 0 : index
    %17 = vector.load %arg4[%c0_18, %c0_19, %c0_20] : memref<9x32x32xf32, #tpu.memory_space<vmem>>, vector<1x32x32xf32>
    %18 = vector.shape_cast %17 : vector<1x32x32xf32> to vector<32x32xf32>
    %cst_21 = arith.constant dense<0.000000e+00> : vector<256x32xf32>
    %19 = tpu.matmul %16, %18, %cst_21 {dimension_numbers = #tpu.dot_dimension_numbers<[1], [0], [0], [1], [0, 0, 1, 1], [], []>} : vector<256x32xf32>, vector<32x32xf32>, vector<256x32xf32> -> vector<256x32xf32>
    %20 = arith.addf %14, %19 : vector<256x32xf32>
    %c0_22 = arith.constant 0 : index
    %c1_23 = arith.constant 1 : index
    %c0_24 = arith.constant 0 : index
    %21 = vector.load %arg9[%c0_22, %c1_23, %c0_24] : memref<18x18x32xf32, #tpu.memory_space<vmem>>, vector<16x16x32xf32>
    %22 = vector.shape_cast %21 : vector<16x16x32xf32> to vector<256x32xf32>
    %c1_25 = arith.constant 1 : index
    %c0_26 = arith.constant 0 : index
    %c0_27 = arith.constant 0 : index
    %23 = vector.load %arg4[%c1_25, %c0_26, %c0_27] : memref<9x32x32xf32, #tpu.memory_space<vmem>>, vector<1x32x32xf32>
    %24 = vector.shape_cast %23 : vector<1x32x32xf32> to vector<32x32xf32>
    %cst_28 = arith.constant dense<0.000000e+00> : vector<256x32xf32>
    %25 = tpu.matmul %22, %24, %cst_28 {dimension_numbers = #tpu.dot_dimension_numbers<[1], [0], [0], [1], [0, 0, 1, 1], [], []>} : vector<256x32xf32>, vector<32x32xf32>, vector<256x32xf32> -> vector<256x32xf32>
    %26 = arith.addf %20, %25 : vector<256x32xf32>
    %c0_29 = arith.constant 0 : index
    %c2 = arith.constant 2 : index
    %c0_30 = arith.constant 0 : index
    %27 = vector.load %arg9[%c0_29, %c2, %c0_30] : memref<18x18x32xf32, #tpu.memory_space<vmem>>, vector<16x16x32xf32>
    %28 = vector.shape_cast %27 : vector<16x16x32xf32> to vector<256x32xf32>
    %c2_31 = arith.constant 2 : index
    %c0_32 = arith.constant 0 : index
    %c0_33 = arith.constant 0 : index
    %29 = vector.load %arg4[%c2_31, %c0_32, %c0_33] : memref<9x32x32xf32, #tpu.memory_space<vmem>>, vector<1x32x32xf32>
    %30 = vector.shape_cast %29 : vector<1x32x32xf32> to vector<32x32xf32>
    %cst_34 = arith.constant dense<0.000000e+00> : vector<256x32xf32>
    %31 = tpu.matmul %28, %30, %cst_34 {dimension_numbers = #tpu.dot_dimension_numbers<[1], [0], [0], [1], [0, 0, 1, 1], [], []>} : vector<256x32xf32>, vector<32x32xf32>, vector<256x32xf32> -> vector<256x32xf32>
    %32 = arith.addf %26, %31 : vector<256x32xf32>
    %c1_35 = arith.constant 1 : index
    %c0_36 = arith.constant 0 : index
    %c0_37 = arith.constant 0 : index
    %33 = vector.load %arg9[%c1_35, %c0_36, %c0_37] : memref<18x18x32xf32, #tpu.memory_space<vmem>>, vector<16x16x32xf32>
    %34 = vector.shape_cast %33 : vector<16x16x32xf32> to vector<256x32xf32>
    %c3 = arith.constant 3 : index
    %c0_38 = arith.constant 0 : index
    %c0_39 = arith.constant 0 : index
    %35 = vector.load %arg4[%c3, %c0_38, %c0_39] : memref<9x32x32xf32, #tpu.memory_space<vmem>>, vector<1x32x32xf32>
    %36 = vector.shape_cast %35 : vector<1x32x32xf32> to vector<32x32xf32>
    %cst_40 = arith.constant dense<0.000000e+00> : vector<256x32xf32>
    %37 = tpu.matmul %34, %36, %cst_40 {dimension_numbers = #tpu.dot_dimension_numbers<[1], [0], [0], [1], [0, 0, 1, 1], [], []>} : vector<256x32xf32>, vector<32x32xf32>, vector<256x32xf32> -> vector<256x32xf32>
    %38 = arith.addf %32, %37 : vector<256x32xf32>
    %c1_41 = arith.constant 1 : index
    %c1_42 = arith.constant 1 : index
    %c0_43 = arith.constant 0 : index
    %39 = vector.load %arg9[%c1_41, %c1_42, %c0_43] : memref<18x18x32xf32, #tpu.memory_space<vmem>>, vector<16x16x32xf32>
    %40 = vector.shape_cast %39 : vector<16x16x32xf32> to vector<256x32xf32>
    %c4 = arith.constant 4 : index
    %c0_44 = arith.constant 0 : index
    %c0_45 = arith.constant 0 : index
    %41 = vector.load %arg4[%c4, %c0_44, %c0_45] : memref<9x32x32xf32, #tpu.memory_space<vmem>>, vector<1x32x32xf32>
    %42 = vector.shape_cast %41 : vector<1x32x32xf32> to vector<32x32xf32>
    %cst_46 = arith.constant dense<0.000000e+00> : vector<256x32xf32>
    %43 = tpu.matmul %40, %42, %cst_46 {dimension_numbers = #tpu.dot_dimension_numbers<[1], [0], [0], [1], [0, 0, 1, 1], [], []>} : vector<256x32xf32>, vector<32x32xf32>, vector<256x32xf32> -> vector<256x32xf32>
    %44 = arith.addf %38, %43 : vector<256x32xf32>
    %c1_47 = arith.constant 1 : index
    %c2_48 = arith.constant 2 : index
    %c0_49 = arith.constant 0 : index
    %45 = vector.load %arg9[%c1_47, %c2_48, %c0_49] : memref<18x18x32xf32, #tpu.memory_space<vmem>>, vector<16x16x32xf32>
    %46 = vector.shape_cast %45 : vector<16x16x32xf32> to vector<256x32xf32>
    %c5 = arith.constant 5 : index
    %c0_50 = arith.constant 0 : index
    %c0_51 = arith.constant 0 : index
    %47 = vector.load %arg4[%c5, %c0_50, %c0_51] : memref<9x32x32xf32, #tpu.memory_space<vmem>>, vector<1x32x32xf32>
    %48 = vector.shape_cast %47 : vector<1x32x32xf32> to vector<32x32xf32>
    %cst_52 = arith.constant dense<0.000000e+00> : vector<256x32xf32>
    %49 = tpu.matmul %46, %48, %cst_52 {dimension_numbers = #tpu.dot_dimension_numbers<[1], [0], [0], [1], [0, 0, 1, 1], [], []>} : vector<256x32xf32>, vector<32x32xf32>, vector<256x32xf32> -> vector<256x32xf32>
    %50 = arith.addf %44, %49 : vector<256x32xf32>
    %c2_53 = arith.constant 2 : index
    %c0_54 = arith.constant 0 : index
    %c0_55 = arith.constant 0 : index
    %51 = vector.load %arg9[%c2_53, %c0_54, %c0_55] : memref<18x18x32xf32, #tpu.memory_space<vmem>>, vector<16x16x32xf32>
    %52 = vector.shape_cast %51 : vector<16x16x32xf32> to vector<256x32xf32>
    %c6 = arith.constant 6 : index
    %c0_56 = arith.constant 0 : index
    %c0_57 = arith.constant 0 : index
    %53 = vector.load %arg4[%c6, %c0_56, %c0_57] : memref<9x32x32xf32, #tpu.memory_space<vmem>>, vector<1x32x32xf32>
    %54 = vector.shape_cast %53 : vector<1x32x32xf32> to vector<32x32xf32>
    %cst_58 = arith.constant dense<0.000000e+00> : vector<256x32xf32>
    %55 = tpu.matmul %52, %54, %cst_58 {dimension_numbers = #tpu.dot_dimension_numbers<[1], [0], [0], [1], [0, 0, 1, 1], [], []>} : vector<256x32xf32>, vector<32x32xf32>, vector<256x32xf32> -> vector<256x32xf32>
    %56 = arith.addf %50, %55 : vector<256x32xf32>
    %c2_59 = arith.constant 2 : index
    %c1_60 = arith.constant 1 : index
    %c0_61 = arith.constant 0 : index
    %57 = vector.load %arg9[%c2_59, %c1_60, %c0_61] : memref<18x18x32xf32, #tpu.memory_space<vmem>>, vector<16x16x32xf32>
    %58 = vector.shape_cast %57 : vector<16x16x32xf32> to vector<256x32xf32>
    %c7 = arith.constant 7 : index
    %c0_62 = arith.constant 0 : index
    %c0_63 = arith.constant 0 : index
    %59 = vector.load %arg4[%c7, %c0_62, %c0_63] : memref<9x32x32xf32, #tpu.memory_space<vmem>>, vector<1x32x32xf32>
    %60 = vector.shape_cast %59 : vector<1x32x32xf32> to vector<32x32xf32>
    %cst_64 = arith.constant dense<0.000000e+00> : vector<256x32xf32>
    %61 = tpu.matmul %58, %60, %cst_64 {dimension_numbers = #tpu.dot_dimension_numbers<[1], [0], [0], [1], [0, 0, 1, 1], [], []>} : vector<256x32xf32>, vector<32x32xf32>, vector<256x32xf32> -> vector<256x32xf32>
    %62 = arith.addf %56, %61 : vector<256x32xf32>
    %c2_65 = arith.constant 2 : index
    %c2_66 = arith.constant 2 : index
    %c0_67 = arith.constant 0 : index
    %63 = vector.load %arg9[%c2_65, %c2_66, %c0_67] : memref<18x18x32xf32, #tpu.memory_space<vmem>>, vector<16x16x32xf32>
    %64 = vector.shape_cast %63 : vector<16x16x32xf32> to vector<256x32xf32>
    %c8 = arith.constant 8 : index
    %c0_68 = arith.constant 0 : index
    %c0_69 = arith.constant 0 : index
    %65 = vector.load %arg4[%c8, %c0_68, %c0_69] : memref<9x32x32xf32, #tpu.memory_space<vmem>>, vector<1x32x32xf32>
    %66 = vector.shape_cast %65 : vector<1x32x32xf32> to vector<32x32xf32>
    %cst_70 = arith.constant dense<0.000000e+00> : vector<256x32xf32>
    %67 = tpu.matmul %64, %66, %cst_70 {dimension_numbers = #tpu.dot_dimension_numbers<[1], [0], [0], [1], [0, 0, 1, 1], [], []>} : vector<256x32xf32>, vector<32x32xf32>, vector<256x32xf32> -> vector<256x32xf32>
    %68 = arith.addf %62, %67 : vector<256x32xf32>
    %c0_71 = arith.constant 0 : index
    %c0_72 = arith.constant 0 : index
    %69 = vector.load %arg5[%c0_71, %c0_72] : memref<1x32xf32, #tpu.memory_space<vmem>>, vector<1x32xf32>
    %70 = vector.broadcast %69 : vector<1x32xf32> to vector<256x32xf32>
    %71 = arith.addf %68, %70 : vector<256x32xf32>
    %cst_73 = arith.constant 0.000000e+00 : f32
    %72 = vector.broadcast %cst_73 : f32 to vector<256x32xf32>
    %73 = arith.maximumf %71, %72 : vector<256x32xf32>
    %c0_74 = arith.constant 0 : index
    %c0_75 = arith.constant 0 : index
    %74 = vector.load %arg6[%c0_74, %c0_75] : memref<32x128xf32, #tpu.memory_space<vmem>>, vector<32x128xf32>
    %cst_76 = arith.constant dense<0.000000e+00> : vector<256x128xf32>
    %75 = tpu.matmul %73, %74, %cst_76 {dimension_numbers = #tpu.dot_dimension_numbers<[1], [0], [0], [1], [0, 0, 1, 1], [], []>} : vector<256x32xf32>, vector<32x128xf32>, vector<256x128xf32> -> vector<256x128xf32>
    %c0_77 = arith.constant 0 : index
    %c0_78 = arith.constant 0 : index
    %76 = vector.load %arg7[%c0_77, %c0_78] : memref<1x128xf32, #tpu.memory_space<vmem>>, vector<1x128xf32>
    %77 = vector.broadcast %76 : vector<1x128xf32> to vector<256x128xf32>
    %78 = arith.addf %75, %77 : vector<256x128xf32>
    %79 = arith.addf %78, %2 : vector<256x128xf32>
    %cst_79 = arith.constant 0.000000e+00 : f32
    %80 = vector.broadcast %cst_79 : f32 to vector<256x128xf32>
    %81 = arith.maximumf %79, %80 : vector<256x128xf32>
    %82 = vector.shape_cast %81 : vector<256x128xf32> to vector<16x16x128xf32>
    %c0_80 = arith.constant 0 : index
    %c0_81 = arith.constant 0 : index
    %c0_82 = arith.constant 0 : index
    %c0_83 = arith.constant 0 : index
    %83 = vector.load %arg8[%c0_80, %c0_81, %c0_82, %c0_83] : memref<1x16x16x128xf32, #tpu.memory_space<vmem>>, vector<1x16x16x128xf32>
    %84 = vector.shape_cast %83 : vector<1x16x16x128xf32> to vector<16x16x128xf32>
    %85 = vector.shape_cast %82 : vector<16x16x128xf32> to vector<1x16x16x128xf32>
    tpu.vector_store %arg8[%c0_80, %c0_81, %c0_82, %c0_83], %85 {strides = array<i32>} : memref<1x16x16x128xf32, #tpu.memory_space<vmem>>, vector<1x16x16x128xf32>,
    return
  }
  func.func @transform_0(%arg0: i32) -> (i32, i32, i32, i32) {
    %c0_i32 = arith.constant 0 : i32
    %c0_i32_0 = arith.constant 0 : i32
    %c0_i32_1 = arith.constant 0 : i32
    %c0_i32_2 = arith.constant 0 : i32
    return %arg0, %c0_i32, %c0_i32_0, %c0_i32_1 : i32, i32, i32, i32
  }
  func.func @transform_1(%arg0: i32) -> (i32, i32) {
    %c0_i32 = arith.constant 0 : i32
    %c0_i32_0 = arith.constant 0 : i32
    %c0_i32_1 = arith.constant 0 : i32
    return %c0_i32, %c0_i32_0 : i32, i32
  }
  func.func @transform_2(%arg0: i32) -> (i32, i32) {
    %c0_i32 = arith.constant 0 : i32
    %c0_i32_0 = arith.constant 0 : i32
    %c0_i32_1 = arith.constant 0 : i32
    return %c0_i32, %c0_i32_0 : i32, i32
  }
  func.func @transform_3(%arg0: i32) -> (i32, i32, i32) {
    %c0_i32 = arith.constant 0 : i32
    %c0_i32_0 = arith.constant 0 : i32
    %c0_i32_1 = arith.constant 0 : i32
    %c0_i32_2 = arith.constant 0 : i32
    return %c0_i32, %c0_i32_0, %c0_i32_1 : i32, i32, i32
  }
  func.func @transform_4(%arg0: i32) -> (i32, i32) {
    %c0_i32 = arith.constant 0 : i32
    %c0_i32_0 = arith.constant 0 : i32
    %c0_i32_1 = arith.constant 0 : i32
    return %c0_i32, %c0_i32_0 : i32, i32
  }
  func.func @transform_5(%arg0: i32) -> (i32, i32) {
    %c0_i32 = arith.constant 0 : i32
    %c0_i32_0 = arith.constant 0 : i32
    %c0_i32_1 = arith.constant 0 : i32
    return %c0_i32, %c0_i32_0 : i32, i32
  }
  func.func @transform_6(%arg0: i32) -> (i32, i32) {
    %c0_i32 = arith.constant 0 : i32
    %c0_i32_0 = arith.constant 0 : i32
    %c0_i32_1 = arith.constant 0 : i32
    return %c0_i32, %c0_i32_0 : i32, i32
  }
  func.func @transform_7(%arg0: i32) -> (i32, i32, i32, i32) {
    %c0_i32 = arith.constant 0 : i32
    %c0_i32_0 = arith.constant 0 : i32
    %c0_i32_1 = arith.constant 0 : i32
    %c0_i32_2 = arith.constant 0 : i32
    return %arg0, %c0_i32, %c0_i32_0, %c0_i32_1 : i32, i32, i32, i32
  }
}

</mosaic_0001>

<llo_original>
// kernel: tpu_custom_call.1
$region0: #{tpu_custom_call.1}
  #allocation0 [shape = 'u32[]', space=smem, size = 0x4, offset = 0x4, fixed_abs, tag = 'smem constant byte address 0x4 - core index']
  #allocation1 [shape = 'u32[144,128]{1,0:T(1,128)}', space=vmem, size = 0x12000, scoped, tag = 'internal scratch']
  #allocation2 [shape = 'f32[18,18,32]{2,1,0:T(8,128)}', space=vmem, size = 0x36000, scoped, tag = 'scratch operand']
  %s0 = inlined_call_operand.hbm [shape: f32[2,16,16,128], index: 0, kind: input, shape index: {}]
  %s1 = inlined_call_operand.vmem [shape: f32[128,32], index: 1, kind: input, shape index: {}]
  %s2 = inlined_call_operand.vmem [shape: f32[1,32], index: 2, kind: input, shape index: {}]
  %s3 = inlined_call_operand.hbm [shape: f32[9,32,32], index: 3, kind: input, shape index: {}]
  %s4 = inlined_call_operand.vmem [shape: f32[1,32], index: 4, kind: input, shape index: {}]
  %s5 = inlined_call_operand.vmem [shape: f32[32,128], index: 5, kind: input, shape index: {}]
  %s6 = inlined_call_operand.vmem [shape: f32[1,128], index: 6, kind: input, shape index: {}]
  %s7 = inlined_call_operand.hbm [shape: f32[2,16,16,128], index: 7, kind: output, shape index: {}]
  %s8 = sld [smem:[#allocation0]]
  $region69: #{tpu_custom_call.1} parent=0
    _
  %s10 = ssub.s32 1, %s8
  %s11 = scalar_select 0, %s10, %s8
  $region1: #{tpu_custom_call.1} parent=0
    #allocation3 [shape = 'u8[262144]{0}', space=vmem, size = 0x40000, scoped, tag = 'input window, operand 0']
    #allocation4 [shape = 's32[2]{0}', space=sflag, size = 0x8, scoped, tag = 'scoped memory for tpu_custom_call.1']
    #allocation5 [shape = 's32[2]{0}', space=sflag, size = 0x8, scoped, tag = 'scoped memory for tpu_custom_call.1']
    #allocation6 [shape = 'u8[147456]{0}', space=vmem, size = 0x24000, scoped, tag = 'input window, operand 3, single buffered']
    #allocation7 [shape = 's32[1]{0}', space=sflag, size = 0x4, scoped, tag = 'scoped memory for tpu_custom_call.1']
    #allocation8 [shape = 'u8[262144]{0}', space=vmem, size = 0x40000, scoped, tag = 'output window, operand 0']
    %12 = vsyncpa [#allocation4], 0
    %s13 = scalar_lea.sflag [#allocation4], 1
    %14 = vsyncpa %s13, 0
    %15 = vsyncpa [#allocation7], 0
    %16 = vsyncpa [#allocation5], 0
    %s17 = scalar_lea.sflag [#allocation5], 1
    %18 = vsyncpa %s17, 0
    loop: start=0, step=1, limit=4
    $region2: #{tpu_custom_call.1} parent=1 // loop_pre_header
      _
    $region3: #{tpu_custom_call.1} parent=1 // loop_header
      %s20 = sphi 0, %s24
      %p21 = scmp.ge.s32.totalorder %s20, 4
      %s30 = sphi 0, %s32
      %s33 = sphi 0, %s30
      %s34 = sphi 0, %s33
      %s50 = sphi 0, %s34
      %s54 = sphi 0, %s54
      %s56 = sphi 0, %s54
      %s57 = sphi 0, %s56
      %s71 = sphi 0, %s57
      %s75 = sphi 0, %s75
      %s77 = sphi 0, %s75
      %s78 = sphi 0, %s77
      %s92 = sphi 0, %s78
      %s96 = sphi 0, %s96
      %s98 = sphi 0, %s96
      %s99 = sphi 0, %s98
      %s113 = sphi 0, %s99
      %s117 = sphi 0, %s117
      %s119 = sphi 0, %s117
      %s120 = sphi 0, %s119
      %s134 = sphi 0, %s120
      %s138 = sphi 0, %s138
      %s140 = sphi 0, %s138
      %s141 = sphi 0, %s140
      %s155 = sphi 0, %s141
      %s159 = sphi 0, %s159
      %s161 = sphi 0, %s159
      %s162 = sphi 0, %s161
      %s176 = sphi 0, %s162
      %s182 = sphi 0, %s184
      %s185 = sphi 0, %s182
      %s186 = sphi 0, %s185
      %s202 = sphi 0, %s186
    $region4: #{tpu_custom_call.1} parent=1 // loop_header_branch
      %23 = sbr.rel (%p21) target = $region8
    $region5: #{tpu_custom_call.1} parent=1 // loop_body
      %s25 = ssub.s32 %s20, 1
      %s26 = ssub.s32 %s20, 2
      %s27 = sadd.s32 %s20, 1
      %s28 = ssub.s32 %s20, %s27
      %p29 = scmp.eq.s32.totalorder %s28, 0
      %s31 = sadd.s32 %s30, 1
      %s32 = scalar_select %p29, %s30, %s31
      %p35 = pneg %p29
      %p36 = scmp.eq.s32.totalorder %s20, 1
      %p37 = por %p35, %p36
      %p38 = scmp.ne.s32.totalorder %s30, %s33
      %p39 = scmp.eq.s32.totalorder %s20, 0
      %p40 = por %p38, %p39
      %p41 = scmp.ne.s32.totalorder %s30, %s33
      %p42 = scmp.eq.s32.totalorder %s25, 1
      %p43 = por %p41, %p42
      %p44 = scmp.ne.s32.totalorder %s33, %s34
      %p45 = scmp.eq.s32.totalorder %s25, 0
      %p46 = por %p44, %p45
      %p47 = scmp.ne.s32.totalorder %s33, %s34
      %p48 = scmp.eq.s32.totalorder %s26, 1
      %p49 = por %p47, %p48
      %p51 = scmp.ne.s32.totalorder %s34, %s50
      %p52 = scmp.eq.s32.totalorder %s26, 0
      %p53 = por %p51, %p52
      %s55 = sadd.s32 %s54, 1
      %p58 = scmp.eq.s32.totalorder %s20, 1
      %p59 = scmp.ne.s32.totalorder %s54, %s56
      %p60 = scmp.eq.s32.totalorder %s20, 0
      %p61 = por %p59, %p60
      %p62 = scmp.ne.s32.totalorder %s54, %s56
      %p63 = scmp.eq.s32.totalorder %s25, 1
      %p64 = por %p62, %p63
      %p65 = scmp.ne.s32.totalorder %s56, %s57
      %p66 = scmp.eq.s32.totalorder %s25, 0
      %p67 = por %p65, %p66
      %p68 = scmp.ne.s32.totalorder %s56, %s57
      %p69 = scmp.eq.s32.totalorder %s26, 1
      %p70 = por %p68, %p69
      %p72 = scmp.ne.s32.totalorder %s57, %s71
      %p73 = scmp.eq.s32.totalorder %s26, 0
      %p74 = por %p72, %p73
      %s76 = sadd.s32 %s75, 1
      %p79 = scmp.eq.s32.totalorder %s20, 1
      %p80 = scmp.ne.s32.totalorder %s75, %s77
      %p81 = scmp.eq.s32.totalorder %s20, 0
      %p82 = por %p80, %p81
      %p83 = scmp.ne.s32.totalorder %s75, %s77
      %p84 = scmp.eq.s32.totalorder %s25, 1
      %p85 = por %p83, %p84
      %p86 = scmp.ne.s32.totalorder %s77, %s78
      %p87 = scmp.eq.s32.totalorder %s25, 0
      %p88 = por %p86, %p87
      %p89 = scmp.ne.s32.totalorder %s77, %s78
      %p90 = scmp.eq.s32.totalorder %s26, 1
      %p91 = por %p89, %p90
      %p93 = scmp.ne.s32.totalorder %s78, %s92
      %p94 = scmp.eq.s32.totalorder %s26, 0
      %p95 = por %p93, %p94
      %s97 = sadd.s32 %s96, 1
      %p100 = scmp.eq.s32.totalorder %s20, 1
      %p101 = scmp.ne.s32.totalorder %s96, %s98
      %p102 = scmp.eq.s32.totalorder %s20, 0
      %p103 = por %p101, %p102
      %p104 = scmp.ne.s32.totalorder %s96, %s98
      %p105 = scmp.eq.s32.totalorder %s25, 1
      %p106 = por %p104, %p105
      %p107 = scmp.ne.s32.totalorder %s98, %s99
      %p108 = scmp.eq.s32.totalorder %s25, 0
      %p109 = por %p107, %p108
      %p110 = scmp.ne.s32.totalorder %s98, %s99
      %p111 = scmp.eq.s32.totalorder %s26, 1
      %p112 = por %p110, %p111
      %p114 = scmp.ne.s32.totalorder %s99, %s113
      %p115 = scmp.eq.s32.totalorder %s26, 0
      %p116 = por %p114, %p115
      %s118 = sadd.s32 %s117, 1
      %p121 = scmp.eq.s32.totalorder %s20, 1
      %p122 = scmp.ne.s32.totalorder %s117, %s119
      %p123 = scmp.eq.s32.totalorder %s20, 0
      %p124 = por %p122, %p123
      %p125 = scmp.ne.s32.totalorder %s117, %s119
      %p126 = scmp.eq.s32.totalorder %s25, 1
      %p127 = por %p125, %p126
      %p128 = scmp.ne.s32.totalorder %s119, %s120
      %p129 = scmp.eq.s32.totalorder %s25, 0
      %p130 = por %p128, %p129
      %p131 = scmp.ne.s32.totalorder %s119, %s120
      %p132 = scmp.eq.s32.totalorder %s26, 1
      %p133 = por %p131, %p132
      %p135 = scmp.ne.s32.totalorder %s120, %s134
      %p136 = scmp.eq.s32.totalorder %s26, 0
      %p137 = por %p135, %p136
      %s139 = sadd.s32 %s138, 1
      %p142 = scmp.eq.s32.totalorder %s20, 1
      %p143 = scmp.ne.s32.totalorder %s138, %s140
      %p144 = scmp.eq.s32.totalorder %s20, 0
      %p145 = por %p143, %p144
      %p146 = scmp.ne.s32.totalorder %s138, %s140
      %p147 = scmp.eq.s32.totalorder %s25, 1
      %p148 = por %p146, %p147
      %p149 = scmp.ne.s32.totalorder %s140, %s141
      %p150 = scmp.eq.s32.totalorder %s25, 0
      %p151 = por %p149, %p150
      %p152 = scmp.ne.s32.totalorder %s140, %s141
      %p153 = scmp.eq.s32.totalorder %s26, 1
      %p154 = por %p152, %p153
      %p156 = scmp.ne.s32.totalorder %s141, %s155
      %p157 = scmp.eq.s32.totalorder %s26, 0
      %p158 = por %p156, %p157
      %s160 = sadd.s32 %s159, 1
      %p163 = scmp.eq.s32.totalorder %s20, 1
      %p164 = scmp.ne.s32.totalorder %s159, %s161
      %p165 = scmp.eq.s32.totalorder %s20, 0
      %p166 = por %p164, %p165
      %p167 = scmp.ne.s32.totalorder %s159, %s161
      %p168 = scmp.eq.s32.totalorder %s25, 1
      %p169 = por %p167, %p168
      %p170 = scmp.ne.s32.totalorder %s161, %s162
      %p171 = scmp.eq.s32.totalorder %s25, 0
      %p172 = por %p170, %p171
      %p173 = scmp.ne.s32.totalorder %s161, %s162
      %p174 = scmp.eq.s32.totalorder %s26, 1
      %p175 = por %p173, %p174
      %p177 = scmp.ne.s32.totalorder %s162, %s176
      %p178 = scmp.eq.s32.totalorder %s26, 0
      %p179 = por %p177, %p178
      %s180 = ssub.s32 %s20, %s27
      %p181 = scmp.eq.s32.totalorder %s180, 0
      %s183 = sadd.s32 %s182, 1
      %s184 = scalar_select %p181, %s182, %s183
      %p187 = pneg %p181
      %p188 = scmp.eq.s32.totalorder %s20, 1
      %p189 = por %p187, %p188
      %p190 = scmp.ne.s32.totalorder %s182, %s185
      %p191 = scmp.eq.s32.totalorder %s20, 0
      %p192 = por %p190, %p191
      %p193 = scmp.ne.s32.totalorder %s182, %s185
      %p194 = scmp.eq.s32.totalorder %s25, 1
      %p195 = por %p193, %p194
      %p196 = scmp.ne.s32.totalorder %s185, %s186
      %p197 = scmp.eq.s32.totalorder %s25, 0
      %p198 = por %p196, %p197
      %p199 = scmp.ne.s32.totalorder %s185, %s186
      %p200 = scmp.eq.s32.totalorder %s26, 1
      %p201 = por %p199, %p200
      %p203 = scmp.ne.s32.totalorder %s186, %s202
      %p204 = scmp.eq.s32.totalorder %s26, 0
      %p205 = por %p203, %p204
      %p206 = scmp.le.s32.totalorder 1, %s20
      %p207 = scmp.lt.s32.totalorder %s20, 3
      %p208 = pnand %p206, %p207
      %p209 = pneg %p208
      // Predicated region
      $region9: #{tpu_custom_call.1} parent=5 // pred_check
        _
      $region10: #{tpu_custom_call.1} parent=5 // pred_check_branch
        %211 = sbr.rel (%p208) target = $region12
      $region11: #{tpu_custom_call.1} parent=5 // pred_region
        %s212 = ssub.s32 %s20, 1
        // Predicated region
        $region13: #{tpu_custom_call.1} parent=11 // pred_check
          %p213 = pneg %p67
        $region14: #{tpu_custom_call.1} parent=11 // pred_check_branch
          %215 = sbr.rel (%p213) target = $region16
        $region15: #{tpu_custom_call.1} parent=11 // pred_region
          _
        $region16: #{tpu_custom_call.1} parent=11 // pred_fallthru
          _
        // Predicated region
        $region17: #{tpu_custom_call.1} parent=11 // pred_check
          %p216 = pneg %p88
        $region18: #{tpu_custom_call.1} parent=11 // pred_check_branch
          %218 = sbr.rel (%p216) target = $region20
        $region19: #{tpu_custom_call.1} parent=11 // pred_region
          _
        $region20: #{tpu_custom_call.1} parent=11 // pred_fallthru
          _
        // Predicated region
        $region21: #{tpu_custom_call.1} parent=11 // pred_check
          %p219 = pneg %p109
        $region22: #{tpu_custom_call.1} parent=11 // pred_check_branch
          %221 = sbr.rel (%p219) target = $region24
        $region23: #{tpu_custom_call.1} parent=11 // pred_region
          %s223 = ssub.s32 4608, 4608
          %224 = vsyncadd [#allocation7], %s223
          %s225 = sshll.u32 [#allocation6], 4
          %s226 = int_to_ptr.vmem [resolvable:$true] %s225
          %231 = dma.hbm_to_vmem [thread:$0]  %s3, 4608, %s226, [#allocation7], 128, 128, 8
        $region24: #{tpu_custom_call.1} parent=11 // pred_fallthru
          _
        // Predicated region
        $region25: #{tpu_custom_call.1} parent=11 // pred_check
          %p232 = pneg %p130
        $region26: #{tpu_custom_call.1} parent=11 // pred_check_branch
          %234 = sbr.rel (%p232) target = $region28
        $region27: #{tpu_custom_call.1} parent=11 // pred_region
          _
        $region28: #{tpu_custom_call.1} parent=11 // pred_fallthru
          _
        // Predicated region
        $region29: #{tpu_custom_call.1} parent=11 // pred_check
          %p235 = pneg %p151
        $region30: #{tpu_custom_call.1} parent=11 // pred_check_branch
          %237 = sbr.rel (%p235) target = $region32
        $region31: #{tpu_custom_call.1} parent=11 // pred_region
          _
        $region32: #{tpu_custom_call.1} parent=11 // pred_fallthru
          _
        // Predicated region
        $region33: #{tpu_custom_call.1} parent=11 // pred_check
          %p238 = pneg %p172
        $region34: #{tpu_custom_call.1} parent=11 // pred_check_branch
          %240 = sbr.rel (%p238) target = $region36
        $region35: #{tpu_custom_call.1} parent=11 // pred_region
          _
        $region36: #{tpu_custom_call.1} parent=11 // pred_fallthru
          _
      $region12: #{tpu_custom_call.1} parent=5 // pred_fallthru
        _
      %p241 = scmp.lt.s32.totalorder %s20, 2
      // Predicated region
      $region37: #{tpu_custom_call.1} parent=5 // pred_check
        %p242 = pneg %p241
      $region38: #{tpu_custom_call.1} parent=5 // pred_check_branch
        %244 = sbr.rel (%p242) target = $region40
      $region39: #{tpu_custom_call.1} parent=5 // pred_region
        // Predicated region
        $region41: #{tpu_custom_call.1} parent=39 // pred_check
          %p245 = pneg %p40
        $region42: #{tpu_custom_call.1} parent=39 // pred_check_branch
          %247 = sbr.rel (%p245) target = $region44
        $region43: #{tpu_custom_call.1} parent=39 // pred_region
          %s248 = sand.u32 %s30, 1
          %s249 = scalar_lea.sflag [#allocation4], %s248
          %s250 = sand.u32 %s30, 1
          %s251 = smul.addr %s250, 256
          %s252 = scalar_lea.vmem [#allocation3], %s251
          %s254 = ssub.s32 4096, 4096
          %255 = vsyncadd %s249, %s254
          %s256 = smul.addr %s20, 32
          %s257 = smul.addr %s256, 128
          %s258 = scalar_lea.hbm %s0, %s257
          %s259 = sshll.u32 %s252, 4
          %s260 = int_to_ptr.vmem [resolvable:$true] %s259
          %265 = dma.hbm_to_vmem [thread:$0]  %s258, 4096, %s260, %s249, 128, 128, 8
        $region44: #{tpu_custom_call.1} parent=39 // pred_fallthru
          _
      $region40: #{tpu_custom_call.1} parent=5 // pred_fallthru
        _
      %p266 = scmp.le.s32.totalorder 1, %s20
      %p267 = scmp.lt.s32.totalorder %s20, 3
      %p268 = pnand %p266, %p267
      %p269 = pneg %p268
      // Predicated region
      $region45: #{tpu_custom_call.1} parent=5 // pred_check
        _
      $region46: #{tpu_custom_call.1} parent=5 // pred_check_branch
        %271 = sbr.rel (%p268) target = $region48
      $region47: #{tpu_custom_call.1} parent=5 // pred_region
        %s272 = ssub.s32 %s20, 1
        %s273 = sand.u32 %s33, 1
        %s274 = scalar_lea.sflag [#allocation4], %s273
        %s275 = sand.u32 %s33, 1
        %s276 = smul.addr %s275, 256
        %s277 = scalar_lea.vmem [#allocation3], %s276
        // Predicated region
        $region49: #{tpu_custom_call.1} parent=47 // pred_check
          %p278 = pneg %p46
        $region50: #{tpu_custom_call.1} parent=47 // pred_check_branch
          %280 = sbr.rel (%p278) target = $region52
        $region51: #{tpu_custom_call.1} parent=47 // pred_region
          %281 = dma.done %s274, 4096
        $region52: #{tpu_custom_call.1} parent=47 // pred_fallthru
          _
        // Predicated region
        $region53: #{tpu_custom_call.1} parent=47 // pred_check
          %p282 = pneg %p109
        $region54: #{tpu_custom_call.1} parent=47 // pred_check_branch
          %284 = sbr.rel (%p282) target = $region56
        $region55: #{tpu_custom_call.1} parent=47 // pred_region
          %285 = dma.done [#allocation7], 4608
        $region56: #{tpu_custom_call.1} parent=47 // pred_fallthru
          _
        %s286 = sand.u32 %s33, 1
        %s287 = scalar_lea.sflag [#allocation4], %s286
        %s288 = sand.u32 %s33, 1
        %s289 = smul.addr %s288, 256
        %s290 = scalar_lea.vmem [#allocation3], %s289
        %p291 = pneg %p46
        %p292 = pneg %p43
        %p293 = pneg %p67
        %p294 = pneg %p64
        %p295 = pneg %p88
        %p296 = pneg %p85
        %p297 = pneg %p109
        %p298 = pneg %p106
        %p299 = pneg %p130
        %p300 = pneg %p127
        %p301 = pneg %p151
        %p302 = pneg %p148
        %p303 = pneg %p172
        %p304 = pneg %p169
        %p305 = pneg %p198
        %p306 = pneg %p195
        %s307 = sand.u32 %s185, 1
        %s308 = scalar_lea.sflag [#allocation5], %s307
        %s309 = sand.u32 %s185, 1
        %s310 = smul.addr %s309, 256
        %s311 = scalar_lea.vmem [#allocation8], %s310
        %v312 = vld [vmem:[%s277] sm:$0xff]
        %v313 = vld [vmem:[%s277 + $0x8] sm:$0xff]
        %v314 = vld [vmem:[%s277 + $0x10] sm:$0xff]
        %v315 = vld [vmem:[%s277 + $0x18] sm:$0xff]
        %v316 = vld [vmem:[%s277 + $0x20] sm:$0xff]
        %v317 = vld [vmem:[%s277 + $0x28] sm:$0xff]
        %v318 = vld [vmem:[%s277 + $0x30] sm:$0xff]
        %v319 = vld [vmem:[%s277 + $0x38] sm:$0xff]
        %v320 = vld [vmem:[%s277 + $0x40] sm:$0xff]
        %v321 = vld [vmem:[%s277 + $0x48] sm:$0xff]
        %v322 = vld [vmem:[%s277 + $0x50] sm:$0xff]
        %v323 = vld [vmem:[%s277 + $0x58] sm:$0xff]
        %v324 = vld [vmem:[%s277 + $0x60] sm:$0xff]
        %v325 = vld [vmem:[%s277 + $0x68] sm:$0xff]
        %v326 = vld [vmem:[%s277 + $0x70] sm:$0xff]
        %v327 = vld [vmem:[%s277 + $0x78] sm:$0xff]
        %v328 = vld [vmem:[%s277 + $0x80] sm:$0xff]
        %v329 = vld [vmem:[%s277 + $0x88] sm:$0xff]
        %v330 = vld [vmem:[%s277 + $0x90] sm:$0xff]
        %v331 = vld [vmem:[%s277 + $0x98] sm:$0xff]
        %v332 = vld [vmem:[%s277 + $0xa0] sm:$0xff]
        %v333 = vld [vmem:[%s277 + $0xa8] sm:$0xff]
        %v334 = vld [vmem:[%s277 + $0xb0] sm:$0xff]
        %v335 = vld [vmem:[%s277 + $0xb8] sm:$0xff]
        %v336 = vld [vmem:[%s277 + $0xc0] sm:$0xff]
        %v337 = vld [vmem:[%s277 + $0xc8] sm:$0xff]
        %v338 = vld [vmem:[%s277 + $0xd0] sm:$0xff]
        %v339 = vld [vmem:[%s277 + $0xd8] sm:$0xff]
        %v340 = vld [vmem:[%s277 + $0xe0] sm:$0xff]
        %v341 = vld [vmem:[%s277 + $0xe8] sm:$0xff]
        %v342 = vld [vmem:[%s277 + $0xf0] sm:$0xff]
        %v343 = vld [vmem:[%s277 + $0xf8] sm:$0xff]
        %v344 = vld [vmem:[%s1] sm:$0xff]
        %v345 = vld [vmem:[%s1 + $0x8] sm:$0xff]
        %v346 = vld [vmem:[%s1 + $0x10] sm:$0xff]
        %v347 = vld [vmem:[%s1 + $0x18] sm:$0xff]
        %v348 = vld [vmem:[%s1 + $0x20] sm:$0xff]
        %v349 = vld [vmem:[%s1 + $0x28] sm:$0xff]
        %v350 = vld [vmem:[%s1 + $0x30] sm:$0xff]
        %v351 = vld [vmem:[%s1 + $0x38] sm:$0xff]
        %v352 = vld [vmem:[%s1 + $0x40] sm:$0xff]
        %v353 = vld [vmem:[%s1 + $0x48] sm:$0xff]
        %v354 = vld [vmem:[%s1 + $0x50] sm:$0xff]
        %v355 = vld [vmem:[%s1 + $0x58] sm:$0xff]
        %v356 = vld [vmem:[%s1 + $0x60] sm:$0xff]
        %v357 = vld [vmem:[%s1 + $0x68] sm:$0xff]
        %v358 = vld [vmem:[%s1 + $0x70] sm:$0xff]
        %v359 = vld [vmem:[%s1 + $0x78] sm:$0xff]
        %v360 = vld [vmem:[%s2] sm:$0x1]
        %v362 = vlaneseq
        %v363 = vshrl.u32 %v362, 7
        %v364 = vsub.s32 0, %v363
        %v365 = vrot.slane %v360, %v364
        %367 = vmatprep.subr.mxu0 0.0
        %368 = vmatpush1.msra.mxu0 %v344
        %369 = vmatprep.subr.mxu0 0.0
        %370 = vmatpush1.msra.mxu0 %v345
        %371 = vmatprep.subr.mxu0 0.0
        %372 = vmatpush1.msra.mxu0 %v346
        %373 = vmatprep.subr.mxu0 0.0
        %374 = vmatpush1.msra.mxu0 %v347
        %375 = vmatprep.subr.mxu0 0.0
        %376 = vmatpush1.msra.mxu0 %v348
        %377 = vmatprep.subr.mxu0 0.0
        %378 = vmatpush1.msra.mxu0 %v349
        %379 = vmatprep.subr.mxu0 0.0
        %380 = vmatpush1.msra.mxu0 %v350
        %381 = vmatprep.subr.mxu0 0.0
        %382 = vmatpush1.msra.mxu0 %v351
        %383 = vmatprep.subr.mxu0 0.0
        %384 = vmatpush1.msra.mxu0 %v352
        %385 = vmatprep.subr.mxu0 0.0
        %386 = vmatpush1.msra.mxu0 %v353
        %387 = vmatprep.subr.mxu0 0.0
        %388 = vmatpush1.msra.mxu0 %v354
        %389 = vmatprep.subr.mxu0 0.0
        %390 = vmatpush1.msra.mxu0 %v355
        %391 = vmatprep.subr.mxu0 0.0
        %392 = vmatpush1.msra.mxu0 %v356
        %393 = vmatprep.subr.mxu0 0.0
        %394 = vmatpush1.msra.mxu0 %v357
        %395 = vmatprep.subr.mxu0 0.0
        %396 = vmatpush1.msra.mxu0 %v358
        %397 = vmatprep.subr.mxu0 0.0
        %398 = vmatpush1.msra.mxu0 %v359
        %399 = vmatprep.subr.mxu0 0.0
        %400 = vmatpush1.msra.mxu0 0.0
        %401 = vmatprep.subr.mxu0 0.0
        %402 = vmatpush1.msra.mxu0 0.0
        %403 = vmatprep.subr.mxu0 0.0
        %404 = vmatpush1.msra.mxu0 0.0
        %405 = vmatprep.subr.mxu0 0.0
        %406 = vmatpush1.msra.mxu0 0.0
        %407 = vmatprep.subr.mxu0 0.0
        %408 = vmatpush1.msra.mxu0 0.0
        %409 = vmatprep.subr.mxu0 0.0
        %410 = vmatpush1.msra.mxu0 0.0
        %411 = vmatprep.subr.mxu0 0.0
        %412 = vmatpush1.msra.mxu0 0.0
        %413 = vmatprep.subr.mxu0 0.0
        %414 = vmatpush1.msra.mxu0 0.0
        %415 = vmatprep.subr.mxu0 0.0
        %416 = vmatpush1.msra.mxu0 0.0
        %417 = vmatprep.subr.mxu0 0.0
        %418 = vmatpush1.msra.mxu0 0.0
        %419 = vmatprep.subr.mxu0 0.0
        %420 = vmatpush1.msra.mxu0 0.0
        %421 = vmatprep.subr.mxu0 0.0
        %422 = vmatpush1.msra.mxu0 0.0
        %423 = vmatprep.subr.mxu0 0.0
        %424 = vmatpush1.msra.mxu0 0.0
        %425 = vmatprep.subr.mxu0 0.0
        %426 = vmatpush1.msra.mxu0 0.0
        %427 = vmatprep.subr.mxu0 0.0
        %428 = vmatpush1.msra.mxu0 0.0
        %429 = vmatprep.subr.mxu0 0.0
        %430 = vmatpush1.msra.mxu0 0.0
        %431 = vmatprep.mubr.f32.mxu0 0.0
        %432 = vmatmul.mubr.f32.gmra.mrb[0].mxu0 %v312
        %v433 = vpop.f32.mrb[0].mxu0
        %v434 = vadd.f32 %v365, %v433
        %v435 = vpop.f32.mrb[0].mxu0
        %436 = vmatprep.mubr.f32.mxu0 0.0
        %437 = vmatmul.mubr.f32.gmra.mrb[0].mxu0 %v313
        %v438 = vpop.f32.mrb[0].mxu0
        %v439 = vadd.f32 %v365, %v438
        %v440 = vpop.f32.mrb[0].mxu0
        %441 = vmatprep.mubr.f32.mxu0 0.0
        %442 = vmatmul.mubr.f32.gmra.mrb[0].mxu0 %v314
        %v443 = vpop.f32.mrb[0].mxu0
        %v444 = vadd.f32 %v365, %v443
        %v445 = vpop.f32.mrb[0].mxu0
        %446 = vmatprep.mubr.f32.mxu0 0.0
        %447 = vmatmul.mubr.f32.gmra.mrb[0].mxu0 %v315
        %v448 = vpop.f32.mrb[0].mxu0
        %v449 = vadd.f32 %v365, %v448
        %v450 = vpop.f32.mrb[0].mxu0
        %451 = vmatprep.mubr.f32.mxu0 0.0
        %452 = vmatmul.mubr.f32.gmra.mrb[0].mxu0 %v316
        %v453 = vpop.f32.mrb[0].mxu0
        %v454 = vadd.f32 %v365, %v453
        %v455 = vpop.f32.mrb[0].mxu0
        %456 = vmatprep.mubr.f32.mxu0 0.0
        %457 = vmatmul.mubr.f32.gmra.mrb[0].mxu0 %v317
        %v458 = vpop.f32.mrb[0].mxu0
        %v459 = vadd.f32 %v365, %v458
        %v460 = vpop.f32.mrb[0].mxu0
        %461 = vmatprep.mubr.f32.mxu0 0.0
        %462 = vmatmul.mubr.f32.gmra.mrb[0].mxu0 %v318
        %v463 = vpop.f32.mrb[0].mxu0
        %v464 = vadd.f32 %v365, %v463
        %v465 = vpop.f32.mrb[0].mxu0
        %466 = vmatprep.mubr.f32.mxu0 0.0
        %467 = vmatmul.mubr.f32.gmra.mrb[0].mxu0 %v319
        %v468 = vpop.f32.mrb[0].mxu0
        %v469 = vadd.f32 %v365, %v468
        %v470 = vpop.f32.mrb[0].mxu0
        %471 = vmatprep.mubr.f32.mxu0 0.0
        %472 = vmatmul.mubr.f32.gmra.mrb[0].mxu0 %v320
        %v473 = vpop.f32.mrb[0].mxu0
        %v474 = vadd.f32 %v365, %v473
        %v475 = vpop.f32.mrb[0].mxu0
        %476 = vmatprep.mubr.f32.mxu0 0.0
        %477 = vmatmul.mubr.f32.gmra.mrb[0].mxu0 %v321
        %v478 = vpop.f32.mrb[0].mxu0
        %v479 = vadd.f32 %v365, %v478
        %v480 = vpop.f32.mrb[0].mxu0
        %481 = vmatprep.mubr.f32.mxu0 0.0
        %482 = vmatmul.mubr.f32.gmra.mrb[0].mxu0 %v322
        %v483 = vpop.f32.mrb[0].mxu0
        %v484 = vadd.f32 %v365, %v483
        %v485 = vpop.f32.mrb[0].mxu0
        %486 = vmatprep.mubr.f32.mxu0 0.0
        %487 = vmatmul.mubr.f32.gmra.mrb[0].mxu0 %v323
        %v488 = vpop.f32.mrb[0].mxu0
        %v489 = vadd.f32 %v365, %v488
        %v490 = vpop.f32.mrb[0].mxu0
        %491 = vmatprep.mubr.f32.mxu0 0.0
        %492 = vmatmul.mubr.f32.gmra.mrb[0].mxu0 %v324
        %v493 = vpop.f32.mrb[0].mxu0
        %v494 = vadd.f32 %v365, %v493
        %v495 = vpop.f32.mrb[0].mxu0
        %496 = vmatprep.mubr.f32.mxu0 0.0
        %497 = vmatmul.mubr.f32.gmra.mrb[0].mxu0 %v325
        %v498 = vpop.f32.mrb[0].mxu0
        %v499 = vadd.f32 %v365, %v498
        %v500 = vpop.f32.mrb[0].mxu0
        %501 = vmatprep.mubr.f32.mxu0 0.0
        %502 = vmatmul.mubr.f32.gmra.mrb[0].mxu0 %v326
        %v503 = vpop.f32.mrb[0].mxu0
        %v504 = vadd.f32 %v365, %v503
        %v505 = vpop.f32.mrb[0].mxu0
        %506 = vmatprep.mubr.f32.mxu0 0.0
        %507 = vmatmul.mubr.f32.gmra.mrb[0].mxu0 %v327
        %v508 = vpop.f32.mrb[0].mxu0
        %v509 = vadd.f32 %v365, %v508
        %v510 = vpop.f32.mrb[0].mxu0
        %511 = vmatprep.mubr.f32.mxu0 0.0
        %512 = vmatmul.mubr.f32.gmra.mrb[0].mxu0 %v328
        %v513 = vpop.f32.mrb[0].mxu0
        %v514 = vadd.f32 %v365, %v513
        %v515 = vpop.f32.mrb[0].mxu0
        %516 = vmatprep.mubr.f32.mxu0 0.0
        %517 = vmatmul.mubr.f32.gmra.mrb[0].mxu0 %v329
        %v518 = vpop.f32.mrb[0].mxu0
        %v519 = vadd.f32 %v365, %v518
        %v520 = vpop.f32.mrb[0].mxu0
        %521 = vmatprep.mubr.f32.mxu0 0.0
        %522 = vmatmul.mubr.f32.gmra.mrb[0].mxu0 %v330
        %v523 = vpop.f32.mrb[0].mxu0
        %v524 = vadd.f32 %v365, %v523
        %v525 = vpop.f32.mrb[0].mxu0
        %526 = vmatprep.mubr.f32.mxu0 0.0
        %527 = vmatmul.mubr.f32.gmra.mrb[0].mxu0 %v331
        %v528 = vpop.f32.mrb[0].mxu0
        %v529 = vadd.f32 %v365, %v528
        %v530 = vpop.f32.mrb[0].mxu0
        %531 = vmatprep.mubr.f32.mxu0 0.0
        %532 = vmatmul.mubr.f32.gmra.mrb[0].mxu0 %v332
        %v533 = vpop.f32.mrb[0].mxu0
        %v534 = vadd.f32 %v365, %v533
        %v535 = vpop.f32.mrb[0].mxu0
        %536 = vmatprep.mubr.f32.mxu0 0.0
        %537 = vmatmul.mubr.f32.gmra.mrb[0].mxu0 %v333
        %v538 = vpop.f32.mrb[0].mxu0
        %v539 = vadd.f32 %v365, %v538
        %v540 = vpop.f32.mrb[0].mxu0
        %541 = vmatprep.mubr.f32.mxu0 0.0
        %542 = vmatmul.mubr.f32.gmra.mrb[0].mxu0 %v334
        %v543 = vpop.f32.mrb[0].mxu0
        %v544 = vadd.f32 %v365, %v543
        %v545 = vpop.f32.mrb[0].mxu0
        %546 = vmatprep.mubr.f32.mxu0 0.0
        %547 = vmatmul.mubr.f32.gmra.mrb[0].mxu0 %v335
        %v548 = vpop.f32.mrb[0].mxu0
        %v549 = vadd.f32 %v365, %v548
        %v550 = vpop.f32.mrb[0].mxu0
        %551 = vmatprep.mubr.f32.mxu0 0.0
        %552 = vmatmul.mubr.f32.gmra.mrb[0].mxu0 %v336
        %v553 = vpop.f32.mrb[0].mxu0
        %v554 = vadd.f32 %v365, %v553
        %v555 = vpop.f32.mrb[0].mxu0
        %556 = vmatprep.mubr.f32.mxu0 0.0
        %557 = vmatmul.mubr.f32.gmra.mrb[0].mxu0 %v337
        %v558 = vpop.f32.mrb[0].mxu0
        %v559 = vadd.f32 %v365, %v558
        %v560 = vpop.f32.mrb[0].mxu0
        %561 = vmatprep.mubr.f32.mxu0 0.0
        %562 = vmatmul.mubr.f32.gmra.mrb[0].mxu0 %v338
        %v563 = vpop.f32.mrb[0].mxu0
        %v564 = vadd.f32 %v365, %v563
        %v565 = vpop.f32.mrb[0].mxu0
        %566 = vmatprep.mubr.f32.mxu0 0.0
        %567 = vmatmul.mubr.f32.gmra.mrb[0].mxu0 %v339
        %v568 = vpop.f32.mrb[0].mxu0
        %v569 = vadd.f32 %v365, %v568
        %v570 = vpop.f32.mrb[0].mxu0
        %571 = vmatprep.mubr.f32.mxu0 0.0
        %572 = vmatmul.mubr.f32.gmra.mrb[0].mxu0 %v340
        %v573 = vpop.f32.mrb[0].mxu0
        %v574 = vadd.f32 %v365, %v573
        %v575 = vpop.f32.mrb[0].mxu0
        %576 = vmatprep.mubr.f32.mxu0 0.0
        %577 = vmatmul.mubr.f32.gmra.mrb[0].mxu0 %v341
        %v578 = vpop.f32.mrb[0].mxu0
        %v579 = vadd.f32 %v365, %v578
        %v580 = vpop.f32.mrb[0].mxu0
        %581 = vmatprep.mubr.f32.mxu0 0.0
        %582 = vmatmul.mubr.f32.gmra.mrb[0].mxu0 %v342
        %v583 = vpop.f32.mrb[0].mxu0
        %v584 = vadd.f32 %v365, %v583
        %v585 = vpop.f32.mrb[0].mxu0
        %586 = vmatprep.mubr.f32.mxu0 0.0
        %587 = vmatmul.mubr.f32.gmra.mrb[0].mxu0 %v343
        %v588 = vpop.f32.mrb[0].mxu0
        %v589 = vadd.f32 %v365, %v588
        %v590 = vpop.f32.mrb[0].mxu0
        %591 = vdwg.mxu0
        %v592 = vmax.f32 %v434, 0.0
        %v593 = vmax.f32 %v439, 0.0
        %v594 = vmax.f32 %v444, 0.0
        %v595 = vmax.f32 %v449, 0.0
        %v596 = vmax.f32 %v454, 0.0
        %v597 = vmax.f32 %v459, 0.0
        %v598 = vmax.f32 %v464, 0.0
        %v599 = vmax.f32 %v469, 0.0
        %v600 = vmax.f32 %v474, 0.0
        %v601 = vmax.f32 %v479, 0.0
        %v602 = vmax.f32 %v484, 0.0
        %v603 = vmax.f32 %v489, 0.0
        %v604 = vmax.f32 %v494, 0.0
        %v605 = vmax.f32 %v499, 0.0
        %v606 = vmax.f32 %v504, 0.0
        %v607 = vmax.f32 %v509, 0.0
        %v608 = vmax.f32 %v514, 0.0
        %v609 = vmax.f32 %v519, 0.0
        %v610 = vmax.f32 %v524, 0.0
        %v611 = vmax.f32 %v529, 0.0
        %v612 = vmax.f32 %v534, 0.0
        %v613 = vmax.f32 %v539, 0.0
        %v614 = vmax.f32 %v544, 0.0
        %v615 = vmax.f32 %v549, 0.0
        %v616 = vmax.f32 %v554, 0.0
        %v617 = vmax.f32 %v559, 0.0
        %v618 = vmax.f32 %v564, 0.0
        %v619 = vmax.f32 %v569, 0.0
        %v620 = vmax.f32 %v574, 0.0
        %v621 = vmax.f32 %v579, 0.0
        %v622 = vmax.f32 %v584, 0.0
        %v623 = vmax.f32 %v589, 0.0
        %vm624 = vcmask 261120
        %625 = vst.msk [vmem:[#allocation2] sm:$0xff] %vm624, 0.0
        %626 = vst.msk [vmem:[#allocation2 + $0x8] sm:$0xff] %vm624, 0.0
        %vm627 = vcmask 254976
        %628 = vst.msk [vmem:[#allocation2 + $0x10] sm:$0x3] %vm627, 0.0
        %629 = vst.msk [vmem:[#allocation2 + $0x18] sm:$0xff] %vm624, 0.0
        %630 = vst.msk [vmem:[#allocation2 + $0x20] sm:$0xff] %vm624, 0.0
        %631 = vst.msk [vmem:[#allocation2 + $0x28] sm:$0x3] %vm627, 0.0
        %632 = vst.msk [vmem:[#allocation2 + $0x30] sm:$0xff] %vm624, 0.0
        %633 = vst.msk [vmem:[#allocation2 + $0x38] sm:$0xff] %vm624, 0.0
        %634 = vst.msk [vmem:[#allocation2 + $0x40] sm:$0x3] %vm627, 0.0
        %635 = vst.msk [vmem:[#allocation2 + $0x48] sm:$0xff] %vm624, 0.0
        %636 = vst.msk [vmem:[#allocation2 + $0x50] sm:$0xff] %vm624, 0.0
        %637 = vst.msk [vmem:[#allocation2 + $0x58] sm:$0x3] %vm627, 0.0
        %638 = vst.msk [vmem:[#allocation2 + $0x60] sm:$0xff] %vm624, 0.0
        %639 = vst.msk [vmem:[#allocation2 + $0x68] sm:$0xff] %vm624, 0.0
        %640 = vst.msk [vmem:[#allocation2 + $0x70] sm:$0x3] %vm627, 0.0
        %641 = vst.msk [vmem:[#allocation2 + $0x78] sm:$0xff] %vm624, 0.0
        %642 = vst.msk [vmem:[#allocation2 + $0x80] sm:$0xff] %vm624, 0.0
        %643 = vst.msk [vmem:[#allocation2 + $0x88] sm:$0x3] %vm627, 0.0
        %644 = vst.msk [vmem:[#allocation2 + $0x90] sm:$0xff] %vm624, 0.0
        %645 = vst.msk [vmem:[#allocation2 + $0x98] sm:$0xff] %vm624, 0.0
        %646 = vst.msk [vmem:[#allocation2 + $0xa0] sm:$0x3] %vm627, 0.0
        %647 = vst.msk [vmem:[#allocation2 + $0xa8] sm:$0xff] %vm624, 0.0
        %648 = vst.msk [vmem:[#allocation2 + $0xb0] sm:$0xff] %vm624, 0.0
        %649 = vst.msk [vmem:[#allocation2 + $0xb8] sm:$0x3] %vm627, 0.0
        %650 = vst.msk [vmem:[#allocation2 + $0xc0] sm:$0xff] %vm624, 0.0
        %651 = vst.msk [vmem:[#allocation2 + $0xc8] sm:$0xff] %vm624, 0.0
        %652 = vst.msk [vmem:[#allocation2 + $0xd0] sm:$0x3] %vm627, 0.0
        %653 = vst.msk [vmem:[#allocation2 + $0xd8] sm:$0xff] %vm624, 0.0
        %654 = vst.msk [vmem:[#allocation2 + $0xe0] sm:$0xff] %vm624, 0.0
        %655 = vst.msk [vmem:[#allocation2 + $0xe8] sm:$0x3] %vm627, 0.0
        %656 = vst.msk [vmem:[#allocation2 + $0xf0] sm:$0xff] %vm624, 0.0
        %657 = vst.msk [vmem:[#allocation2 + $0xf8] sm:$0xff] %vm624, 0.0
        %658 = vst.msk [vmem:[#allocation2 + $0x100] sm:$0x3] %vm627, 0.0
        %659 = vst.msk [vmem:[#allocation2 + $0x108] sm:$0xff] %vm624, 0.0
        %660 = vst.msk [vmem:[#allocation2 + $0x110] sm:$0xff] %vm624, 0.0
        %661 = vst.msk [vmem:[#allocation2 + $0x118] sm:$0x3] %vm627, 0.0
        %662 = vst.msk [vmem:[#allocation2 + $0x120] sm:$0xff] %vm624, 0.0
        %663 = vst.msk [vmem:[#allocation2 + $0x128] sm:$0xff] %vm624, 0.0
        %664 = vst.msk [vmem:[#allocation2 + $0x130] sm:$0x3] %vm627, 0.0
        %665 = vst.msk [vmem:[#allocation2 + $0x138] sm:$0xff] %vm624, 0.0
        %666 = vst.msk [vmem:[#allocation2 + $0x140] sm:$0xff] %vm624, 0.0
        %667 = vst.msk [vmem:[#allocation2 + $0x148] sm:$0x3] %vm627, 0.0
        %668 = vst.msk [vmem:[#allocation2 + $0x150] sm:$0xff] %vm624, 0.0
        %669 = vst.msk [vmem:[#allocation2 + $0x158] sm:$0xff] %vm624, 0.0
        %670 = vst.msk [vmem:[#allocation2 + $0x160] sm:$0x3] %vm627, 0.0
        %671 = vst.msk [vmem:[#allocation2 + $0x168] sm:$0xff] %vm624, 0.0
        %672 = vst.msk [vmem:[#allocation2 + $0x170] sm:$0xff] %vm624, 0.0
        %673 = vst.msk [vmem:[#allocation2 + $0x178] sm:$0x3] %vm627, 0.0
        %674 = vst.msk [vmem:[#allocation2 + $0x180] sm:$0xff] %vm624, 0.0
        %675 = vst.msk [vmem:[#allocation2 + $0x188] sm:$0xff] %vm624, 0.0
        %676 = vst.msk [vmem:[#allocation2 + $0x190] sm:$0x3] %vm627, 0.0
        %677 = vst.msk [vmem:[#allocation2 + $0x198] sm:$0xff] %vm624, 0.0
        %678 = vst.msk [vmem:[#allocation2 + $0x1a0] sm:$0xff] %vm624, 0.0
        %679 = vst.msk [vmem:[#allocation2 + $0x1a8] sm:$0x3] %vm627, 0.0
        %s680 = scalar_lea.vmem [#allocation2], 24
        %681 = vst.msk [vmem:[%s680 + $0x1] sm:$0xff] %vm624, %v592
        %682 = vst.msk [vmem:[%s680 + $0x9] sm:$0xff] %vm624, %v593
        %683 = vst.msk [vmem:[%s680 + $0x19] sm:$0xff] %vm624, %v594
        %684 = vst.msk [vmem:[%s680 + $0x21] sm:$0xff] %vm624, %v595
        %685 = vst.msk [vmem:[%s680 + $0x31] sm:$0xff] %vm624, %v596
        %686 = vst.msk [vmem:[%s680 + $0x39] sm:$0xff] %vm624, %v597
        %687 = vst.msk [vmem:[%s680 + $0x49] sm:$0xff] %vm624, %v598
        %688 = vst.msk [vmem:[%s680 + $0x51] sm:$0xff] %vm624, %v599
        %689 = vst.msk [vmem:[%s680 + $0x61] sm:$0xff] %vm624, %v600
        %690 = vst.msk [vmem:[%s680 + $0x69] sm:$0xff] %vm624, %v601
        %691 = vst.msk [vmem:[%s680 + $0x79] sm:$0xff] %vm624, %v602
        %692 = vst.msk [vmem:[%s680 + $0x81] sm:$0xff] %vm624, %v603
        %693 = vst.msk [vmem:[%s680 + $0x91] sm:$0xff] %vm624, %v604
        %694 = vst.msk [vmem:[%s680 + $0x99] sm:$0xff] %vm624, %v605
        %695 = vst.msk [vmem:[%s680 + $0xa9] sm:$0xff] %vm624, %v606
        %696 = vst.msk [vmem:[%s680 + $0xb1] sm:$0xff] %vm624, %v607
        %697 = vst.msk [vmem:[%s680 + $0xc1] sm:$0xff] %vm624, %v608
        %698 = vst.msk [vmem:[%s680 + $0xc9] sm:$0xff] %vm624, %v609
        %699 = vst.msk [vmem:[%s680 + $0xd9] sm:$0xff] %vm624, %v610
        %700 = vst.msk [vmem:[%s680 + $0xe1] sm:$0xff] %vm624, %v611
        %701 = vst.msk [vmem:[%s680 + $0xf1] sm:$0xff] %vm624, %v612
        %702 = vst.msk [vmem:[%s680 + $0xf9] sm:$0xff] %vm624, %v613
        %703 = vst.msk [vmem:[%s680 + $0x109] sm:$0xff] %vm624, %v614
        %704 = vst.msk [vmem:[%s680 + $0x111] sm:$0xff] %vm624, %v615
        %705 = vst.msk [vmem:[%s680 + $0x121] sm:$0xff] %vm624, %v616
        %706 = vst.msk [vmem:[%s680 + $0x129] sm:$0xff] %vm624, %v617
        %707 = vst.msk [vmem:[%s680 + $0x139] sm:$0xff] %vm624, %v618
        %708 = vst.msk [vmem:[%s680 + $0x141] sm:$0xff] %vm624, %v619
        %709 = vst.msk [vmem:[%s680 + $0x151] sm:$0xff] %vm624, %v620
        %710 = vst.msk [vmem:[%s680 + $0x159] sm:$0xff] %vm624, %v621
        %711 = vst.msk [vmem:[%s680 + $0x169] sm:$0xff] %vm624, %v622
        %712 = vst.msk [vmem:[%s680 + $0x171] sm:$0xff] %vm624, %v623
        %v713 = vld [vmem:[#allocation2] sm:$0xff]
        %v714 = vld [vmem:[#allocation2 + $0x8] sm:$0xff]
        %v715 = vld [vmem:[#allocation2 + $0x18] sm:$0xff]
        %v716 = vld [vmem:[#allocation2 + $0x20] sm:$0xff]
        %v717 = vld [vmem:[#allocation2 + $0x30] sm:$0xff]
        %v718 = vld [vmem:[#allocation2 + $0x38] sm:$0xff]
        %v719 = vld [vmem:[#allocation2 + $0x48] sm:$0xff]
        %v720 = vld [vmem:[#allocation2 + $0x50] sm:$0xff]
        %v721 = vld [vmem:[#allocation2 + $0x60] sm:$0xff]
        %v722 = vld [vmem:[#allocation2 + $0x68] sm:$0xff]
        %v723 = vld [vmem:[#allocation2 + $0x78] sm:$0xff]
        %v724 = vld [vmem:[#allocation2 + $0x80] sm:$0xff]
        %v725 = vld [vmem:[#allocation2 + $0x90] sm:$0xff]
        %v726 = vld [vmem:[#allocation2 + $0x98] sm:$0xff]
        %v727 = vld [vmem:[#allocation2 + $0xa8] sm:$0xff]
        %v728 = vld [vmem:[#allocation2 + $0xb0] sm:$0xff]
        %v729 = vld [vmem:[#allocation2 + $0xc0] sm:$0xff]
        %v730 = vld [vmem:[#allocation2 + $0xc8] sm:$0xff]
        %v731 = vld [vmem:[#allocation2 + $0xd8] sm:$0xff]
        %v732 = vld [vmem:[#allocation2 + $0xe0] sm:$0xff]
        %v733 = vld [vmem:[#allocation2 + $0xf0] sm:$0xff]
        %v734 = vld [vmem:[#allocation2 + $0xf8] sm:$0xff]
        %v735 = vld [vmem:[#allocation2 + $0x108] sm:$0xff]
        %v736 = vld [vmem:[#allocation2 + $0x110] sm:$0xff]
        %v737 = vld [vmem:[#allocation2 + $0x120] sm:$0xff]
        %v738 = vld [vmem:[#allocation2 + $0x128] sm:$0xff]
        %v739 = vld [vmem:[#allocation2 + $0x138] sm:$0xff]
        %v740 = vld [vmem:[#allocation2 + $0x140] sm:$0xff]
        %v741 = vld [vmem:[#allocation2 + $0x150] sm:$0xff]
        %v742 = vld [vmem:[#allocation2 + $0x158] sm:$0xff]
        %v743 = vld [vmem:[#allocation2 + $0x168] sm:$0xff]
        %v744 = vld [vmem:[#allocation2 + $0x170] sm:$0xff]
        %v745 = vld [vmem:[#allocation6] sm:$0xff]
        %v746 = vld [vmem:[#allocation6 + $0x8] sm:$0xff]
        %v747 = vld [vmem:[#allocation6 + $0x10] sm:$0xff]
        %v748 = vld [vmem:[#allocation6 + $0x18] sm:$0xff]
        %v749 = vld [vmem:[#allocation2 + $0x1] sm:$0xff]
        %v750 = vld [vmem:[#allocation2 + $0x9] sm:$0xff]
        %v751 = vld [vmem:[#allocation2 + $0x19] sm:$0xff]
        %v752 = vld [vmem:[#allocation2 + $0x21] sm:$0xff]
        %v753 = vld [vmem:[#allocation2 + $0x31] sm:$0xff]
        %v754 = vld [vmem:[#allocation2 + $0x39] sm:$0xff]
        %v755 = vld [vmem:[#allocation2 + $0x49] sm:$0xff]
        %v756 = vld [vmem:[#allocation2 + $0x51] sm:$0xff]
        %v757 = vld [vmem:[#allocation2 + $0x61] sm:$0xff]
        %v758 = vld [vmem:[#allocation2 + $0x69] sm:$0xff]
        %v759 = vld [vmem:[#allocation2 + $0x79] sm:$0xff]
        %v760 = vld [vmem:[#allocation2 + $0x81] sm:$0xff]
        %v761 = vld [vmem:[#allocation2 + $0x91] sm:$0xff]
        %v762 = vld [vmem:[#allocation2 + $0x99] sm:$0xff]
        %v763 = vld [vmem:[#allocation2 + $0xa9] sm:$0xff]
        %v764 = vld [vmem:[#allocation2 + $0xb1] sm:$0xff]
        %v765 = vld [vmem:[#allocation2 + $0xc1] sm:$0xff]
        %v766 = vld [vmem:[#allocation2 + $0xc9] sm:$0xff]
        %v767 = vld [vmem:[#allocation2 + $0xd9] sm:$0xff]
        %v768 = vld [vmem:[#allocation2 + $0xe1] sm:$0xff]
        %v769 = vld [vmem:[#allocation2 + $0xf1] sm:$0xff]
        %v770 = vld [vmem:[#allocation2 + $0xf9] sm:$0xff]
        %v771 = vld [vmem:[#allocation2 + $0x109] sm:$0xff]
        %v772 = vld [vmem:[#allocation2 + $0x111] sm:$0xff]
        %v773 = vld [vmem:[#allocation2 + $0x121] sm:$0xff]
        %v774 = vld [vmem:[#allocation2 + $0x129] sm:$0xff]
        %v775 = vld [vmem:[#allocation2 + $0x139] sm:$0xff]
        %v776 = vld [vmem:[#allocation2 + $0x141] sm:$0xff]
        %v777 = vld [vmem:[#allocation2 + $0x151] sm:$0xff]
        %v778 = vld [vmem:[#allocation2 + $0x159] sm:$0xff]
        %v779 = vld [vmem:[#allocation2 + $0x169] sm:$0xff]
        %v780 = vld [vmem:[#allocation2 + $0x171] sm:$0xff]
        %s781 = scalar_lea.vmem [#allocation6], 32
        %v782 = vld [vmem:[%s781] sm:$0xff]
        %v783 = vld [vmem:[%s781 + $0x8] sm:$0xff]
        %v784 = vld [vmem:[%s781 + $0x10] sm:$0xff]
        %v785 = vld [vmem:[%s781 + $0x18] sm:$0xff]
        %v787 = vsel %vm624, %v749, 0
        %v790 = vsel %vm624, %v750, 0
        %v793 = vsel %vm624, %v751, 0
        %v796 = vsel %vm624, %v752, 0
        %v799 = vsel %vm624, %v753, 0
        %v802 = vsel %vm624, %v754, 0
        %v805 = vsel %vm624, %v755, 0
        %v808 = vsel %vm624, %v756, 0
        %v811 = vsel %vm624, %v757, 0
        %v814 = vsel %vm624, %v758, 0
        %v817 = vsel %vm624, %v759, 0
        %v820 = vsel %vm624, %v760, 0
        %v823 = vsel %vm624, %v761, 0
        %v826 = vsel %vm624, %v762, 0
        %v829 = vsel %vm624, %v763, 0
        %v832 = vsel %vm624, %v764, 0
        %v835 = vsel %vm624, %v765, 0
        %v838 = vsel %vm624, %v766, 0
        %v841 = vsel %vm624, %v767, 0
        %v844 = vsel %vm624, %v768, 0
        %v847 = vsel %vm624, %v769, 0
        %v850 = vsel %vm624, %v770, 0
        %v853 = vsel %vm624, %v771, 0
        %v856 = vsel %vm624, %v772, 0
        %v859 = vsel %vm624, %v773, 0
        %v862 = vsel %vm624, %v774, 0
        %v865 = vsel %vm624, %v775, 0
        %v868 = vsel %vm624, %v776, 0
        %v871 = vsel %vm624, %v777, 0
        %v874 = vsel %vm624, %v778, 0
        %v877 = vsel %vm624, %v779, 0
        %v880 = vsel %vm624, %v780, 0
        %882 = vmatprep.subr.mxu0 0.0
        %883 = vmatpush1.msra.mxu0 %v782
        %884 = vmatprep.subr.mxu0 0.0
        %885 = vmatpush1.msra.mxu0 %v783
        %886 = vmatprep.subr.mxu0 0.0
        %887 = vmatpush1.msra.mxu0 %v784
        %888 = vmatprep.subr.mxu0 0.0
        %889 = vmatpush1.msra.mxu0 %v785
        %890 = vmatprep.subr.mxu0 0.0
        %891 = vmatpush1.msra.mxu0 0.0
        %892 = vmatprep.subr.mxu0 0.0
        %893 = vmatpush1.msra.mxu0 0.0
        %894 = vmatprep.subr.mxu0 0.0
        %895 = vmatpush1.msra.mxu0 0.0
        %896 = vmatprep.subr.mxu0 0.0
        %897 = vmatpush1.msra.mxu0 0.0
        %898 = vmatprep.subr.mxu0 0.0
        %899 = vmatpush1.msra.mxu0 0.0
        %900 = vmatprep.subr.mxu0 0.0
        %901 = vmatpush1.msra.mxu0 0.0
        %902 = vmatprep.subr.mxu0 0.0
        %903 = vmatpush1.msra.mxu0 0.0
        %904 = vmatprep.subr.mxu0 0.0
        %905 = vmatpush1.msra.mxu0 0.0
        %906 = vmatprep.subr.mxu0 0.0
        %907 = vmatpush1.msra.mxu0 0.0
        %908 = vmatprep.subr.mxu0 0.0
        %909 = vmatpush1.msra.mxu0 0.0
        %910 = vmatprep.subr.mxu0 0.0
        %911 = vmatpush1.msra.mxu0 0.0
        %912 = vmatprep.subr.mxu0 0.0
        %913 = vmatpush1.msra.mxu0 0.0
        %914 = vmatprep.subr.mxu0 0.0
        %915 = vmatpush1.msra.mxu0 0.0
        %916 = vmatprep.subr.mxu0 0.0
        %917 = vmatpush1.msra.mxu0 0.0
        %918 = vmatprep.subr.mxu0 0.0
        %919 = vmatpush1.msra.mxu0 0.0
        %920 = vmatprep.subr.mxu0 0.0
        %921 = vmatpush1.msra.mxu0 0.0
        %922 = vmatprep.subr.mxu0 0.0
        %923 = vmatpush1.msra.mxu0 0.0
        %924 = vmatprep.subr.mxu0 0.0
        %925 = vmatpush1.msra.mxu0 0.0
        %926 = vmatprep.subr.mxu0 0.0
        %927 = vmatpush1.msra.mxu0 0.0
        %928 = vmatprep.subr.mxu0 0.0
        %929 = vmatpush1.msra.mxu0 0.0
        %930 = vmatprep.subr.mxu0 0.0
        %931 = vmatpush1.msra.mxu0 0.0
        %932 = vmatprep.subr.mxu0 0.0
        %933 = vmatpush1.msra.mxu0 0.0
        %934 = vmatprep.subr.mxu0 0.0
        %935 = vmatpush1.msra.mxu0 0.0
        %936 = vmatprep.subr.mxu0 0.0
        %937 = vmatpush1.msra.mxu0 0.0
        %938 = vmatprep.subr.mxu0 0.0
        %939 = vmatpush1.msra.mxu0 0.0
        %940 = vmatprep.subr.mxu0 0.0
        %941 = vmatpush1.msra.mxu0 0.0
        %942 = vmatprep.subr.mxu0 0.0
        %943 = vmatpush1.msra.mxu0 0.0
        %944 = vmatprep.subr.mxu0 0.0
        %945 = vmatpush1.msra.mxu0 0.0
        %946 = vmatprep.mubr.f32.mxu0 0.0
        %947 = vmatmul.mubr.f32.gmra.mrb[0].mxu0 %v787
        %v948 = vpop.f32.mrb[0].mxu0
        %v949 = vadd.f32 0.0, %v948
        %v950 = vpop.f32.mrb[0].mxu0
        %951 = vmatprep.mubr.f32.mxu0 0.0
        %952 = vmatmul.mubr.f32.gmra.mrb[0].mxu0 %v790
        %v953 = vpop.f32.mrb[0].mxu0
        %v954 = vadd.f32 0.0, %v953
        %v955 = vpop.f32.mrb[0].mxu0
        %956 = vmatprep.mubr.f32.mxu0 0.0
        %957 = vmatmul.mubr.f32.gmra.mrb[0].mxu0 %v793
        %v958 = vpop.f32.mrb[0].mxu0
        %v959 = vadd.f32 0.0, %v958
        %v960 = vpop.f32.mrb[0].mxu0
        %961 = vmatprep.mubr.f32.mxu0 0.0
        %962 = vmatmul.mubr.f32.gmra.mrb[0].mxu0 %v796
        %v963 = vpop.f32.mrb[0].mxu0
        %v964 = vadd.f32 0.0, %v963
        %v965 = vpop.f32.mrb[0].mxu0
        %966 = vmatprep.mubr.f32.mxu0 0.0
        %967 = vmatmul.mubr.f32.gmra.mrb[0].mxu0 %v799
        %v968 = vpop.f32.mrb[0].mxu0
        %v969 = vadd.f32 0.0, %v968
        %v970 = vpop.f32.mrb[0].mxu0
        %971 = vmatprep.mubr.f32.mxu0 0.0
        %972 = vmatmul.mubr.f32.gmra.mrb[0].mxu0 %v802
        %v973 = vpop.f32.mrb[0].mxu0
        %v974 = vadd.f32 0.0, %v973
        %v975 = vpop.f32.mrb[0].mxu0
        %976 = vmatprep.mubr.f32.mxu0 0.0
        %977 = vmatmul.mubr.f32.gmra.mrb[0].mxu0 %v805
        %v978 = vpop.f32.mrb[0].mxu0
        %v979 = vadd.f32 0.0, %v978
        %v980 = vpop.f32.mrb[0].mxu0
        %981 = vmatprep.mubr.f32.mxu0 0.0
        %982 = vmatmul.mubr.f32.gmra.mrb[0].mxu0 %v808
        %v983 = vpop.f32.mrb[0].mxu0
        %v984 = vadd.f32 0.0, %v983
        %v985 = vpop.f32.mrb[0].mxu0
        %986 = vmatprep.mubr.f32.mxu0 0.0
        %987 = vmatmul.mubr.f32.gmra.mrb[0].mxu0 %v811
        %v988 = vpop.f32.mrb[0].mxu0
        %v989 = vadd.f32 0.0, %v988
        %v990 = vpop.f32.mrb[0].mxu0
        %991 = vmatprep.mubr.f32.mxu0 0.0
        %992 = vmatmul.mubr.f32.gmra.mrb[0].mxu0 %v814
        %v993 = vpop.f32.mrb[0].mxu0
        %v994 = vadd.f32 0.0, %v993
        %v995 = vpop.f32.mrb[0].mxu0
        %996 = vmatprep.mubr.f32.mxu0 0.0
        %997 = vmatmul.mubr.f32.gmra.mrb[0].mxu0 %v817
        %v998 = vpop.f32.mrb[0].mxu0
        %v999 = vadd.f32 0.0, %v998
        %v1000 = vpop.f32.mrb[0].mxu0
        %1001 = vmatprep.mubr.f32.mxu0 0.0
        %1002 = vmatmul.mubr.f32.gmra.mrb[0].mxu0 %v820
        %v1003 = vpop.f32.mrb[0].mxu0
        %v1004 = vadd.f32 0.0, %v1003
        %v1005 = vpop.f32.mrb[0].mxu0
        %1006 = vmatprep.mubr.f32.mxu0 0.0
        %1007 = vmatmul.mubr.f32.gmra.mrb[0].mxu0 %v823
        %v1008 = vpop.f32.mrb[0].mxu0
        %v1009 = vadd.f32 0.0, %v1008
        %v1010 = vpop.f32.mrb[0].mxu0
        %1011 = vmatprep.mubr.f32.mxu0 0.0
        %1012 = vmatmul.mubr.f32.gmra.mrb[0].mxu0 %v826
        %v1013 = vpop.f32.mrb[0].mxu0
        %v1014 = vadd.f32 0.0, %v1013
        %v1015 = vpop.f32.mrb[0].mxu0
        %1016 = vmatprep.mubr.f32.mxu0 0.0
        %1017 = vmatmul.mubr.f32.gmra.mrb[0].mxu0 %v829
        %v1018 = vpop.f32.mrb[0].mxu0
        %v1019 = vadd.f32 0.0, %v1018
        %v1020 = vpop.f32.mrb[0].mxu0
        %1021 = vmatprep.mubr.f32.mxu0 0.0
        %1022 = vmatmul.mubr.f32.gmra.mrb[0].mxu0 %v832
        %v1023 = vpop.f32.mrb[0].mxu0
        %v1024 = vadd.f32 0.0, %v1023
        %v1025 = vpop.f32.mrb[0].mxu0
        %1026 = vmatprep.mubr.f32.mxu0 0.0
        %1027 = vmatmul.mubr.f32.gmra.mrb[0].mxu0 %v835
        %v1028 = vpop.f32.mrb[0].mxu0
        %v1029 = vadd.f32 0.0, %v1028
        %v1030 = vpop.f32.mrb[0].mxu0
        %1031 = vmatprep.mubr.f32.mxu0 0.0
        %1032 = vmatmul.mubr.f32.gmra.mrb[0].mxu0 %v838
        %v1033 = vpop.f32.mrb[0].mxu0
        %v1034 = vadd.f32 0.0, %v1033
        %v1035 = vpop.f32.mrb[0].mxu0
        %1036 = vmatprep.mubr.f32.mxu0 0.0
        %1037 = vmatmul.mubr.f32.gmra.mrb[0].mxu0 %v841
        %v1038 = vpop.f32.mrb[0].mxu0
        %v1039 = vadd.f32 0.0, %v1038
        %v1040 = vpop.f32.mrb[0].mxu0
        %1041 = vmatprep.mubr.f32.mxu0 0.0
        %1042 = vmatmul.mubr.f32.gmra.mrb[0].mxu0 %v844
        %v1043 = vpop.f32.mrb[0].mxu0
        %v1044 = vadd.f32 0.0, %v1043
        %v1045 = vpop.f32.mrb[0].mxu0
        %1046 = vmatprep.mubr.f32.mxu0 0.0
        %1047 = vmatmul.mubr.f32.gmra.mrb[0].mxu0 %v847
        %v1048 = vpop.f32.mrb[0].mxu0
        %v1049 = vadd.f32 0.0, %v1048
        %v1050 = vpop.f32.mrb[0].mxu0
        %1051 = vmatprep.mubr.f32.mxu0 0.0
        %1052 = vmatmul.mubr.f32.gmra.mrb[0].mxu0 %v850
        %v1053 = vpop.f32.mrb[0].mxu0
        %v1054 = vadd.f32 0.0, %v1053
        %v1055 = vpop.f32.mrb[0].mxu0
        %1056 = vmatprep.mubr.f32.mxu0 0.0
        %1057 = vmatmul.mubr.f32.gmra.mrb[0].mxu0 %v853
        %v1058 = vpop.f32.mrb[0].mxu0
        %v1059 = vadd.f32 0.0, %v1058
        %v1060 = vpop.f32.mrb[0].mxu0
        %1061 = vmatprep.mubr.f32.mxu0 0.0
        %1062 = vmatmul.mubr.f32.gmra.mrb[0].mxu0 %v856
        %v1063 = vpop.f32.mrb[0].mxu0
        %v1064 = vadd.f32 0.0, %v1063
        %v1065 = vpop.f32.mrb[0].mxu0
        %1066 = vmatprep.mubr.f32.mxu0 0.0
        %1067 = vmatmul.mubr.f32.gmra.mrb[0].mxu0 %v859
        %v1068 = vpop.f32.mrb[0].mxu0
        %v1069 = vadd.f32 0.0, %v1068
        %v1070 = vpop.f32.mrb[0].mxu0
        %1071 = vmatprep.mubr.f32.mxu0 0.0
        %1072 = vmatmul.mubr.f32.gmra.mrb[0].mxu0 %v862
        %v1073 = vpop.f32.mrb[0].mxu0
        %v1074 = vadd.f32 0.0, %v1073
        %v1075 = vpop.f32.mrb[0].mxu0
        %1076 = vmatprep.mubr.f32.mxu0 0.0
        %1077 = vmatmul.mubr.f32.gmra.mrb[0].mxu0 %v865
        %v1078 = vpop.f32.mrb[0].mxu0
        %v1079 = vadd.f32 0.0, %v1078
        %v1080 = vpop.f32.mrb[0].mxu0
        %1081 = vmatprep.mubr.f32.mxu0 0.0
        %1082 = vmatmul.mubr.f32.gmra.mrb[0].mxu0 %v868
        %v1083 = vpop.f32.mrb[0].mxu0
        %v1084 = vadd.f32 0.0, %v1083
        %v1085 = vpop.f32.mrb[0].mxu0
        %1086 = vmatprep.mubr.f32.mxu0 0.0
        %1087 = vmatmul.mubr.f32.gmra.mrb[0].mxu0 %v871
        %v1088 = vpop.f32.mrb[0].mxu0
        %v1089 = vadd.f32 0.0, %v1088
        %v1090 = vpop.f32.mrb[0].mxu0
        %1091 = vmatprep.mubr.f32.mxu0 0.0
        %1092 = vmatmul.mubr.f32.gmra.mrb[0].mxu0 %v874
        %v1093 = vpop.f32.mrb[0].mxu0
        %v1094 = vadd.f32 0.0, %v1093
        %v1095 = vpop.f32.mrb[0].mxu0
        %1096 = vmatprep.mubr.f32.mxu0 0.0
        %1097 = vmatmul.mubr.f32.gmra.mrb[0].mxu0 %v877
        %v1098 = vpop.f32.mrb[0].mxu0
        %v1099 = vadd.f32 0.0, %v1098
        %v1100 = vpop.f32.mrb[0].mxu0
        %1101 = vmatprep.mubr.f32.mxu0 0.0
        %1102 = vmatmul.mubr.f32.gmra.mrb[0].mxu0 %v880
        %v1103 = vpop.f32.mrb[0].mxu0
        %v1104 = vadd.f32 0.0, %v1103
        %v1105 = vpop.f32.mrb[0].mxu0
        %1106 = vdwg.mxu0
        %v1108 = vsel %vm624, %v713, 0
        %v1111 = vsel %vm624, %v714, 0
        %v1114 = vsel %vm624, %v715, 0
        %v1117 = vsel %vm624, %v716, 0
        %v1120 = vsel %vm624, %v717, 0
        %v1123 = vsel %vm624, %v718, 0
        %v1126 = vsel %vm624, %v719, 0
        %v1129 = vsel %vm624, %v720, 0
        %v1132 = vsel %vm624, %v721, 0
        %v1135 = vsel %vm624, %v722, 0
        %v1138 = vsel %vm624, %v723, 0
        %v1141 = vsel %vm624, %v724, 0
        %v1144 = vsel %vm624, %v725, 0
        %v1147 = vsel %vm624, %v726, 0
        %v1150 = vsel %vm624, %v727, 0
        %v1153 = vsel %vm624, %v728, 0
        %v1156 = vsel %vm624, %v729, 0
        %v1159 = vsel %vm624, %v730, 0
        %v1162 = vsel %vm624, %v731, 0
        %v1165 = vsel %vm624, %v732, 0
        %v1168 = vsel %vm624, %v733, 0
        %v1171 = vsel %vm624, %v734, 0
        %v1174 = vsel %vm624, %v735, 0
        %v1177 = vsel %vm624, %v736, 0
        %v1180 = vsel %vm624, %v737, 0
        %v1183 = vsel %vm624, %v738, 0
        %v1186 = vsel %vm624, %v739, 0
        %v1189 = vsel %vm624, %v740, 0
        %v1192 = vsel %vm624, %v741, 0
        %v1195 = vsel %vm624, %v742, 0
        %v1198 = vsel %vm624, %v743, 0
        %v1201 = vsel %vm624, %v744, 0
        %1203 = vmatprep.subr.mxu0 0.0
        %1204 = vmatpush1.msra.mxu0 %v745
        %1205 = vmatprep.subr.mxu0 0.0
        %1206 = vmatpush1.msra.mxu0 %v746
        %1207 = vmatprep.subr.mxu0 0.0
        %1208 = vmatpush1.msra.mxu0 %v747
        %1209 = vmatprep.subr.mxu0 0.0
        %1210 = vmatpush1.msra.mxu0 %v748
        %1211 = vmatprep.subr.mxu0 0.0
        %1212 = vmatpush1.msra.mxu0 0.0
        %1213 = vmatprep.subr.mxu0 0.0
        %1214 = vmatpush1.msra.mxu0 0.0
        %1215 = vmatprep.subr.mxu0 0.0
        %1216 = vmatpush1.msra.mxu0 0.0
        %1217 = vmatprep.subr.mxu0 0.0
        %1218 = vmatpush1.msra.mxu0 0.0
        %1219 = vmatprep.subr.mxu0 0.0
        %1220 = vmatpush1.msra.mxu0 0.0
        %1221 = vmatprep.subr.mxu0 0.0
        %1222 = vmatpush1.msra.mxu0 0.0
        %1223 = vmatprep.subr.mxu0 0.0
        %1224 = vmatpush1.msra.mxu0 0.0
        %1225 = vmatprep.subr.mxu0 0.0
        %1226 = vmatpush1.msra.mxu0 0.0
        %1227 = vmatprep.subr.mxu0 0.0
        %1228 = vmatpush1.msra.mxu0 0.0
        %1229 = vmatprep.subr.mxu0 0.0
        %1230 = vmatpush1.msra.mxu0 0.0
        %1231 = vmatprep.subr.mxu0 0.0
        %1232 = vmatpush1.msra.mxu0 0.0
        %1233 = vmatprep.subr.mxu0 0.0
        %1234 = vmatpush1.msra.mxu0 0.0
        %1235 = vmatprep.subr.mxu0 0.0
        %1236 = vmatpush1.msra.mxu0 0.0
        %1237 = vmatprep.subr.mxu0 0.0
        %1238 = vmatpush1.msra.mxu0 0.0
        %1239 = vmatprep.subr.mxu0 0.0
        %1240 = vmatpush1.msra.mxu0 0.0
        %1241 = vmatprep.subr.mxu0 0.0
        %1242 = vmatpush1.msra.mxu0 0.0
        %1243 = vmatprep.subr.mxu0 0.0
        %1244 = vmatpush1.msra.mxu0 0.0
        %1245 = vmatprep.subr.mxu0 0.0
        %1246 = vmatpush1.msra.mxu0 0.0
        %1247 = vmatprep.subr.mxu0 0.0
        %1248 = vmatpush1.msra.mxu0 0.0
        %1249 = vmatprep.subr.mxu0 0.0
        %1250 = vmatpush1.msra.mxu0 0.0
        %1251 = vmatprep.subr.mxu0 0.0
        %1252 = vmatpush1.msra.mxu0 0.0
        %1253 = vmatprep.subr.mxu0 0.0
        %1254 = vmatpush1.msra.mxu0 0.0
        %1255 = vmatprep.subr.mxu0 0.0
        %1256 = vmatpush1.msra.mxu0 0.0
        %1257 = vmatprep.subr.mxu0 0.0
        %1258 = vmatpush1.msra.mxu0 0.0
        %1259 = vmatprep.subr.mxu0 0.0
        %1260 = vmatpush1.msra.mxu0 0.0
        %1261 = vmatprep.subr.mxu0 0.0
        %1262 = vmatpush1.msra.mxu0 0.0
        %1263 = vmatprep.subr.mxu0 0.0
        %1264 = vmatpush1.msra.mxu0 0.0
        %1265 = vmatprep.subr.mxu0 0.0
        %1266 = vmatpush1.msra.mxu0 0.0
        %1267 = vmatprep.mubr.f32.mxu0 0.0
        %1268 = vmatmul.mubr.f32.gmra.mrb[0].mxu0 %v1108
        %v1269 = vpop.f32.mrb[0].mxu0
        %v1270 = vadd.f32 %v949, %v1269
        %v1271 = vpop.f32.mrb[0].mxu0
        %1272 = vmatprep.mubr.f32.mxu0 0.0
        %1273 = vmatmul.mubr.f32.gmra.mrb[0].mxu0 %v1111
        %v1274 = vpop.f32.mrb[0].mxu0
        %v1275 = vadd.f32 %v954, %v1274
        %v1276 = vpop.f32.mrb[0].mxu0
        %1277 = vmatprep.mubr.f32.mxu0 0.0
        %1278 = vmatmul.mubr.f32.gmra.mrb[0].mxu0 %v1114
        %v1279 = vpop.f32.mrb[0].mxu0
        %v1280 = vadd.f32 %v959, %v1279
        %v1281 = vpop.f32.mrb[0].mxu0
        %1282 = vmatprep.mubr.f32.mxu0 0.0
        %1283 = vmatmul.mubr.f32.gmra.mrb[0].mxu0 %v1117
        %v1284 = vpop.f32.mrb[0].mxu0
        %v1285 = vadd.f32 %v964, %v1284
        %v1286 = vpop.f32.mrb[0].mxu0
        %1287 = vmatprep.mubr.f32.mxu0 0.0
        %1288 = vmatmul.mubr.f32.gmra.mrb[0].mxu0 %v1120
        %v1289 = vpop.f32.mrb[0].mxu0
        %v1290 = vadd.f32 %v969, %v1289
        %v1291 = vpop.f32.mrb[0].mxu0
        %1292 = vmatprep.mubr.f32.mxu0 0.0
        %1293 = vmatmul.mubr.f32.gmra.mrb[0].mxu0 %v1123
        %v1294 = vpop.f32.mrb[0].mxu0
        %v1295 = vadd.f32 %v974, %v1294
        %v1296 = vpop.f32.mrb[0].mxu0
        %1297 = vmatprep.mubr.f32.mxu0 0.0
        %1298 = vmatmul.mubr.f32.gmra.mrb[0].mxu0 %v1126
        %v1299 = vpop.f32.mrb[0].mxu0
        %v1300 = vadd.f32 %v979, %v1299
        %v1301 = vpop.f32.mrb[0].mxu0
        %1302 = vmatprep.mubr.f32.mxu0 0.0
        %1303 = vmatmul.mubr.f32.gmra.mrb[0].mxu0 %v1129
        %v1304 = vpop.f32.mrb[0].mxu0
        %v1305 = vadd.f32 %v984, %v1304
        %v1306 = vpop.f32.mrb[0].mxu0
        %1307 = vmatprep.mubr.f32.mxu0 0.0
        %1308 = vmatmul.mubr.f32.gmra.mrb[0].mxu0 %v1132
        %v1309 = vpop.f32.mrb[0].mxu0
        %v1310 = vadd.f32 %v989, %v1309
        %v1311 = vpop.f32.mrb[0].mxu0
        %1312 = vmatprep.mubr.f32.mxu0 0.0
        %1313 = vmatmul.mubr.f32.gmra.mrb[0].mxu0 %v1135
        %v1314 = vpop.f32.mrb[0].mxu0
        %v1315 = vadd.f32 %v994, %v1314
        %v1316 = vpop.f32.mrb[0].mxu0
        %1317 = vmatprep.mubr.f32.mxu0 0.0
        %1318 = vmatmul.mubr.f32.gmra.mrb[0].mxu0 %v1138
        %v1319 = vpop.f32.mrb[0].mxu0
        %v1320 = vadd.f32 %v999, %v1319
        %v1321 = vpop.f32.mrb[0].mxu0
        %1322 = vmatprep.mubr.f32.mxu0 0.0
        %1323 = vmatmul.mubr.f32.gmra.mrb[0].mxu0 %v1141
        %v1324 = vpop.f32.mrb[0].mxu0
        %v1325 = vadd.f32 %v1004, %v1324
        %v1326 = vpop.f32.mrb[0].mxu0
        %1327 = vmatprep.mubr.f32.mxu0 0.0
        %1328 = vmatmul.mubr.f32.gmra.mrb[0].mxu0 %v1144
        %v1329 = vpop.f32.mrb[0].mxu0
        %v1330 = vadd.f32 %v1009, %v1329
        %v1331 = vpop.f32.mrb[0].mxu0
        %1332 = vmatprep.mubr.f32.mxu0 0.0
        %1333 = vmatmul.mubr.f32.gmra.mrb[0].mxu0 %v1147
        %v1334 = vpop.f32.mrb[0].mxu0
        %v1335 = vadd.f32 %v1014, %v1334
        %v1336 = vpop.f32.mrb[0].mxu0
        %1337 = vmatprep.mubr.f32.mxu0 0.0
        %1338 = vmatmul.mubr.f32.gmra.mrb[0].mxu0 %v1150
        %v1339 = vpop.f32.mrb[0].mxu0
        %v1340 = vadd.f32 %v1019, %v1339
        %v1341 = vpop.f32.mrb[0].mxu0
        %1342 = vmatprep.mubr.f32.mxu0 0.0
        %1343 = vmatmul.mubr.f32.gmra.mrb[0].mxu0 %v1153
        %v1344 = vpop.f32.mrb[0].mxu0
        %v1345 = vadd.f32 %v1024, %v1344
        %v1346 = vpop.f32.mrb[0].mxu0
        %1347 = vmatprep.mubr.f32.mxu0 0.0
        %1348 = vmatmul.mubr.f32.gmra.mrb[0].mxu0 %v1156
        %v1349 = vpop.f32.mrb[0].mxu0
        %v1350 = vadd.f32 %v1029, %v1349
        %v1351 = vpop.f32.mrb[0].mxu0
        %1352 = vmatprep.mubr.f32.mxu0 0.0
        %1353 = vmatmul.mubr.f32.gmra.mrb[0].mxu0 %v1159
        %v1354 = vpop.f32.mrb[0].mxu0
        %v1355 = vadd.f32 %v1034, %v1354
        %v1356 = vpop.f32.mrb[0].mxu0
        %1357 = vmatprep.mubr.f32.mxu0 0.0
        %1358 = vmatmul.mubr.f32.gmra.mrb[0].mxu0 %v1162
        %v1359 = vpop.f32.mrb[0].mxu0
        %v1360 = vadd.f32 %v1039, %v1359
        %v1361 = vpop.f32.mrb[0].mxu0
        %1362 = vmatprep.mubr.f32.mxu0 0.0
        %1363 = vmatmul.mubr.f32.gmra.mrb[0].mxu0 %v1165
        %v1364 = vpop.f32.mrb[0].mxu0
        %v1365 = vadd.f32 %v1044, %v1364
        %v1366 = vpop.f32.mrb[0].mxu0
        %1367 = vmatprep.mubr.f32.mxu0 0.0
        %1368 = vmatmul.mubr.f32.gmra.mrb[0].mxu0 %v1168
        %v1369 = vpop.f32.mrb[0].mxu0
        %v1370 = vadd.f32 %v1049, %v1369
        %v1371 = vpop.f32.mrb[0].mxu0
        %1372 = vmatprep.mubr.f32.mxu0 0.0
        %1373 = vmatmul.mubr.f32.gmra.mrb[0].mxu0 %v1171
        %v1374 = vpop.f32.mrb[0].mxu0
        %v1375 = vadd.f32 %v1054, %v1374
        %v1376 = vpop.f32.mrb[0].mxu0
        %1377 = vmatprep.mubr.f32.mxu0 0.0
        %1378 = vmatmul.mubr.f32.gmra.mrb[0].mxu0 %v1174
        %v1379 = vpop.f32.mrb[0].mxu0
        %v1380 = vadd.f32 %v1059, %v1379
        %v1381 = vpop.f32.mrb[0].mxu0
        %1382 = vmatprep.mubr.f32.mxu0 0.0
        %1383 = vmatmul.mubr.f32.gmra.mrb[0].mxu0 %v1177
        %v1384 = vpop.f32.mrb[0].mxu0
        %v1385 = vadd.f32 %v1064, %v1384
        %v1386 = vpop.f32.mrb[0].mxu0
        %1387 = vmatprep.mubr.f32.mxu0 0.0
        %1388 = vmatmul.mubr.f32.gmra.mrb[0].mxu0 %v1180
        %v1389 = vpop.f32.mrb[0].mxu0
        %v1390 = vadd.f32 %v1069, %v1389
        %v1391 = vpop.f32.mrb[0].mxu0
        %1392 = vmatprep.mubr.f32.mxu0 0.0
        %1393 = vmatmul.mubr.f32.gmra.mrb[0].mxu0 %v1183
        %v1394 = vpop.f32.mrb[0].mxu0
        %v1395 = vadd.f32 %v1074, %v1394
        %v1396 = vpop.f32.mrb[0].mxu0
        %1397 = vmatprep.mubr.f32.mxu0 0.0
        %1398 = vmatmul.mubr.f32.gmra.mrb[0].mxu0 %v1186
        %v1399 = vpop.f32.mrb[0].mxu0
        %v1400 = vadd.f32 %v1079, %v1399
        %v1401 = vpop.f32.mrb[0].mxu0
        %1402 = vmatprep.mubr.f32.mxu0 0.0
        %1403 = vmatmul.mubr.f32.gmra.mrb[0].mxu0 %v1189
        %v1404 = vpop.f32.mrb[0].mxu0
        %v1405 = vadd.f32 %v1084, %v1404
        %v1406 = vpop.f32.mrb[0].mxu0
        %1407 = vmatprep.mubr.f32.mxu0 0.0
        %1408 = vmatmul.mubr.f32.gmra.mrb[0].mxu0 %v1192
        %v1409 = vpop.f32.mrb[0].mxu0
        %v1410 = vadd.f32 %v1089, %v1409
        %v1411 = vpop.f32.mrb[0].mxu0
        %1412 = vmatprep.mubr.f32.mxu0 0.0
        %1413 = vmatmul.mubr.f32.gmra.mrb[0].mxu0 %v1195
        %v1414 = vpop.f32.mrb[0].mxu0
        %v1415 = vadd.f32 %v1094, %v1414
        %v1416 = vpop.f32.mrb[0].mxu0
        %1417 = vmatprep.mubr.f32.mxu0 0.0
        %1418 = vmatmul.mubr.f32.gmra.mrb[0].mxu0 %v1198
        %v1419 = vpop.f32.mrb[0].mxu0
        %v1420 = vadd.f32 %v1099, %v1419
        %v1421 = vpop.f32.mrb[0].mxu0
        %1422 = vmatprep.mubr.f32.mxu0 0.0
        %1423 = vmatmul.mubr.f32.gmra.mrb[0].mxu0 %v1201
        %v1424 = vpop.f32.mrb[0].mxu0
        %v1425 = vadd.f32 %v1104, %v1424
        %v1426 = vpop.f32.mrb[0].mxu0
        %1427 = vdwg.mxu0
        %v1428 = vld [vmem:[#allocation2 + $0x2] sm:$0xff]
        %v1429 = vld [vmem:[#allocation2 + $0xa] sm:$0xff]
        %v1430 = vld [vmem:[#allocation2 + $0x1a] sm:$0xff]
        %v1431 = vld [vmem:[#allocation2 + $0x22] sm:$0xff]
        %v1432 = vld [vmem:[#allocation2 + $0x32] sm:$0xff]
        %v1433 = vld [vmem:[#allocation2 + $0x3a] sm:$0xff]
        %v1434 = vld [vmem:[#allocation2 + $0x4a] sm:$0xff]
        %v1435 = vld [vmem:[#allocation2 + $0x52] sm:$0xff]
        %v1436 = vld [vmem:[#allocation2 + $0x62] sm:$0xff]
        %v1437 = vld [vmem:[#allocation2 + $0x6a] sm:$0xff]
        %v1438 = vld [vmem:[#allocation2 + $0x7a] sm:$0xff]
        %v1439 = vld [vmem:[#allocation2 + $0x82] sm:$0xff]
        %v1440 = vld [vmem:[#allocation2 + $0x92] sm:$0xff]
        %v1441 = vld [vmem:[#allocation2 + $0x9a] sm:$0xff]
        %v1442 = vld [vmem:[#allocation2 + $0xaa] sm:$0xff]
        %v1443 = vld [vmem:[#allocation2 + $0xb2] sm:$0xff]
        %v1444 = vld [vmem:[#allocation2 + $0xc2] sm:$0xff]
        %v1445 = vld [vmem:[#allocation2 + $0xca] sm:$0xff]
        %v1446 = vld [vmem:[#allocation2 + $0xda] sm:$0xff]
        %v1447 = vld [vmem:[#allocation2 + $0xe2] sm:$0xff]
        %v1448 = vld [vmem:[#allocation2 + $0xf2] sm:$0xff]
        %v1449 = vld [vmem:[#allocation2 + $0xfa] sm:$0xff]
        %v1450 = vld [vmem:[#allocation2 + $0x10a] sm:$0xff]
        %v1451 = vld [vmem:[#allocation2 + $0x112] sm:$0xff]
        %v1452 = vld [vmem:[#allocation2 + $0x122] sm:$0xff]
        %v1453 = vld [vmem:[#allocation2 + $0x12a] sm:$0xff]
        %v1454 = vld [vmem:[#allocation2 + $0x13a] sm:$0xff]
        %v1455 = vld [vmem:[#allocation2 + $0x142] sm:$0xff]
        %v1456 = vld [vmem:[#allocation2 + $0x152] sm:$0xff]
        %v1457 = vld [vmem:[#allocation2 + $0x15a] sm:$0xff]
        %v1458 = vld [vmem:[#allocation2 + $0x16a] sm:$0xff]
        %v1459 = vld [vmem:[#allocation2 + $0x172] sm:$0xff]
        %s1460 = scalar_lea.vmem [#allocation6], 64
        %v1461 = vld [vmem:[%s1460] sm:$0xff]
        %v1462 = vld [vmem:[%s1460 + $0x8] sm:$0xff]
        %v1463 = vld [vmem:[%s1460 + $0x10] sm:$0xff]
        %v1464 = vld [vmem:[%s1460 + $0x18] sm:$0xff]
        %v1466 = vsel %vm624, %v1428, 0
        %v1469 = vsel %vm624, %v1429, 0
        %v1472 = vsel %vm624, %v1430, 0
        %v1475 = vsel %vm624, %v1431, 0
        %v1478 = vsel %vm624, %v1432, 0
        %v1481 = vsel %vm624, %v1433, 0
        %v1484 = vsel %vm624, %v1434, 0
        %v1487 = vsel %vm624, %v1435, 0
        %v1490 = vsel %vm624, %v1436, 0
        %v1493 = vsel %vm624, %v1437, 0
        %v1496 = vsel %vm624, %v1438, 0
        %v1499 = vsel %vm624, %v1439, 0
        %v1502 = vsel %vm624, %v1440, 0
        %v1505 = vsel %vm624, %v1441, 0
        %v1508 = vsel %vm624, %v1442, 0
        %v1511 = vsel %vm624, %v1443, 0
        %v1514 = vsel %vm624, %v1444, 0
        %v1517 = vsel %vm624, %v1445, 0
        %v1520 = vsel %vm624, %v1446, 0
        %v1523 = vsel %vm624, %v1447, 0
        %v1526 = vsel %vm624, %v1448, 0
        %v1529 = vsel %vm624, %v1449, 0
        %v1532 = vsel %vm624, %v1450, 0
        %v1535 = vsel %vm624, %v1451, 0
        %v1538 = vsel %vm624, %v1452, 0
        %v1541 = vsel %vm624, %v1453, 0
        %v1544 = vsel %vm624, %v1454, 0
        %v1547 = vsel %vm624, %v1455, 0
        %v1550 = vsel %vm624, %v1456, 0
        %v1553 = vsel %vm624, %v1457, 0
        %v1556 = vsel %vm624, %v1458, 0
        %v1559 = vsel %vm624, %v1459, 0
        %1561 = vmatprep.subr.mxu0 0.0
        %1562 = vmatpush1.msra.mxu0 %v1461
        %1563 = vmatprep.subr.mxu0 0.0
        %1564 = vmatpush1.msra.mxu0 %v1462
        %1565 = vmatprep.subr.mxu0 0.0
        %1566 = vmatpush1.msra.mxu0 %v1463
        %1567 = vmatprep.subr.mxu0 0.0
        %1568 = vmatpush1.msra.mxu0 %v1464
        %1569 = vmatprep.subr.mxu0 0.0
        %1570 = vmatpush1.msra.mxu0 0.0
        %1571 = vmatprep.subr.mxu0 0.0
        %1572 = vmatpush1.msra.mxu0 0.0
        %1573 = vmatprep.subr.mxu0 0.0
        %1574 = vmatpush1.msra.mxu0 0.0
        %1575 = vmatprep.subr.mxu0 0.0
        %1576 = vmatpush1.msra.mxu0 0.0
        %1577 = vmatprep.subr.mxu0 0.0
        %1578 = vmatpush1.msra.mxu0 0.0
        %1579 = vmatprep.subr.mxu0 0.0
        %1580 = vmatpush1.msra.mxu0 0.0
        %1581 = vmatprep.subr.mxu0 0.0
        %1582 = vmatpush1.msra.mxu0 0.0
        %1583 = vmatprep.subr.mxu0 0.0
        %1584 = vmatpush1.msra.mxu0 0.0
        %1585 = vmatprep.subr.mxu0 0.0
        %1586 = vmatpush1.msra.mxu0 0.0
        %1587 = vmatprep.subr.mxu0 0.0
        %1588 = vmatpush1.msra.mxu0 0.0
        %1589 = vmatprep.subr.mxu0 0.0
        %1590 = vmatpush1.msra.mxu0 0.0
        %1591 = vmatprep.subr.mxu0 0.0
        %1592 = vmatpush1.msra.mxu0 0.0
        %1593 = vmatprep.subr.mxu0 0.0
        %1594 = vmatpush1.msra.mxu0 0.0
        %1595 = vmatprep.subr.mxu0 0.0
        %1596 = vmatpush1.msra.mxu0 0.0
        %1597 = vmatprep.subr.mxu0 0.0
        %1598 = vmatpush1.msra.mxu0 0.0
        %1599 = vmatprep.subr.mxu0 0.0
        %1600 = vmatpush1.msra.mxu0 0.0
        %1601 = vmatprep.subr.mxu0 0.0
        %1602 = vmatpush1.msra.mxu0 0.0
        %1603 = vmatprep.subr.mxu0 0.0
        %1604 = vmatpush1.msra.mxu0 0.0
        %1605 = vmatprep.subr.mxu0 0.0
        %1606 = vmatpush1.msra.mxu0 0.0
        %1607 = vmatprep.subr.mxu0 0.0
        %1608 = vmatpush1.msra.mxu0 0.0
        %1609 = vmatprep.subr.mxu0 0.0
        %1610 = vmatpush1.msra.mxu0 0.0
        %1611 = vmatprep.subr.mxu0 0.0
        %1612 = vmatpush1.msra.mxu0 0.0
        %1613 = vmatprep.subr.mxu0 0.0
        %1614 = vmatpush1.msra.mxu0 0.0
        %1615 = vmatprep.subr.mxu0 0.0
        %1616 = vmatpush1.msra.mxu0 0.0
        %1617 = vmatprep.subr.mxu0 0.0
        %1618 = vmatpush1.msra.mxu0 0.0
        %1619 = vmatprep.subr.mxu0 0.0
        %1620 = vmatpush1.msra.mxu0 0.0
        %1621 = vmatprep.subr.mxu0 0.0
        %1622 = vmatpush1.msra.mxu0 0.0
        %1623 = vmatprep.subr.mxu0 0.0
        %1624 = vmatpush1.msra.mxu0 0.0
        %1625 = vmatprep.mubr.f32.mxu0 0.0
        %1626 = vmatmul.mubr.f32.gmra.mrb[0].mxu0 %v1466
        %v1627 = vpop.f32.mrb[0].mxu0
        %v1628 = vadd.f32 0.0, %v1627
        %v1629 = vpop.f32.mrb[0].mxu0
        %1630 = vmatprep.mubr.f32.mxu0 0.0
        %1631 = vmatmul.mubr.f32.gmra.mrb[0].mxu0 %v1469
        %v1632 = vpop.f32.mrb[0].mxu0
        %v1633 = vadd.f32 0.0, %v1632
        %v1634 = vpop.f32.mrb[0].mxu0
        %1635 = vmatprep.mubr.f32.mxu0 0.0
        %1636 = vmatmul.mubr.f32.gmra.mrb[0].mxu0 %v1472
        %v1637 = vpop.f32.mrb[0].mxu0
        %v1638 = vadd.f32 0.0, %v1637
        %v1639 = vpop.f32.mrb[0].mxu0
        %1640 = vmatprep.mubr.f32.mxu0 0.0
        %1641 = vmatmul.mubr.f32.gmra.mrb[0].mxu0 %v1475
        %v1642 = vpop.f32.mrb[0].mxu0
        %v1643 = vadd.f32 0.0, %v1642
        %v1644 = vpop.f32.mrb[0].mxu0
        %1645 = vmatprep.mubr.f32.mxu0 0.0
        %1646 = vmatmul.mubr.f32.gmra.mrb[0].mxu0 %v1478
        %v1647 = vpop.f32.mrb[0].mxu0
        %v1648 = vadd.f32 0.0, %v1647
        %v1649 = vpop.f32.mrb[0].mxu0
        %1650 = vmatprep.mubr.f32.mxu0 0.0
        %1651 = vmatmul.mubr.f32.gmra.mrb[0].mxu0 %v1481
        %v1652 = vpop.f32.mrb[0].mxu0
        %v1653 = vadd.f32 0.0, %v1652
        %v1654 = vpop.f32.mrb[0].mxu0
        %1655 = vmatprep.mubr.f32.mxu0 0.0
        %1656 = vmatmul.mubr.f32.gmra.mrb[0].mxu0 %v1484
        %v1657 = vpop.f32.mrb[0].mxu0
        %v1658 = vadd.f32 0.0, %v1657
        %v1659 = vpop.f32.mrb[0].mxu0
        %1660 = vmatprep.mubr.f32.mxu0 0.0
        %1661 = vmatmul.mubr.f32.gmra.mrb[0].mxu0 %v1487
        %v1662 = vpop.f32.mrb[0].mxu0
        %v1663 = vadd.f32 0.0, %v1662
        %v1664 = vpop.f32.mrb[0].mxu0
        %1665 = vmatprep.mubr.f32.mxu0 0.0
        %1666 = vmatmul.mubr.f32.gmra.mrb[0].mxu0 %v1490
        %v1667 = vpop.f32.mrb[0].mxu0
        %v1668 = vadd.f32 0.0, %v1667
        %v1669 = vpop.f32.mrb[0].mxu0
        %1670 = vmatprep.mubr.f32.mxu0 0.0
        %1671 = vmatmul.mubr.f32.gmra.mrb[0].mxu0 %v1493
        %v1672 = vpop.f32.mrb[0].mxu0
        %v1673 = vadd.f32 0.0, %v1672
        %v1674 = vpop.f32.mrb[0].mxu0
        %1675 = vmatprep.mubr.f32.mxu0 0.0
        %1676 = vmatmul.mubr.f32.gmra.mrb[0].mxu0 %v1496
        %v1677 = vpop.f32.mrb[0].mxu0
        %v1678 = vadd.f32 0.0, %v1677
        %v1679 = vpop.f32.mrb[0].mxu0
        %1680 = vmatprep.mubr.f32.mxu0 0.0
        %1681 = vmatmul.mubr.f32.gmra.mrb[0].mxu0 %v1499
        %v1682 = vpop.f32.mrb[0].mxu0
        %v1683 = vadd.f32 0.0, %v1682
        %v1684 = vpop.f32.mrb[0].mxu0
        %1685 = vmatprep.mubr.f32.mxu0 0.0
        %1686 = vmatmul.mubr.f32.gmra.mrb[0].mxu0 %v1502
        %v1687 = vpop.f32.mrb[0].mxu0
        %v1688 = vadd.f32 0.0, %v1687
        %v1689 = vpop.f32.mrb[0].mxu0
        %1690 = vmatprep.mubr.f32.mxu0 0.0
        %1691 = vmatmul.mubr.f32.gmra.mrb[0].mxu0 %v1505
        %v1692 = vpop.f32.mrb[0].mxu0
        %v1693 = vadd.f32 0.0, %v1692
        %v1694 = vpop.f32.mrb[0].mxu0
        %1695 = vmatprep.mubr.f32.mxu0 0.0
        %1696 = vmatmul.mubr.f32.gmra.mrb[0].mxu0 %v1508
        %v1697 = vpop.f32.mrb[0].mxu0
        %v1698 = vadd.f32 0.0, %v1697
        %v1699 = vpop.f32.mrb[0].mxu0
        %1700 = vmatprep.mubr.f32.mxu0 0.0
        %1701 = vmatmul.mubr.f32.gmra.mrb[0].mxu0 %v1511
        %v1702 = vpop.f32.mrb[0].mxu0
        %v1703 = vadd.f32 0.0, %v1702
        %v1704 = vpop.f32.mrb[0].mxu0
        %1705 = vmatprep.mubr.f32.mxu0 0.0
        %1706 = vmatmul.mubr.f32.gmra.mrb[0].mxu0 %v1514
        %v1707 = vpop.f32.mrb[0].mxu0
        %v1708 = vadd.f32 0.0, %v1707
        %v1709 = vpop.f32.mrb[0].mxu0
        %1710 = vmatprep.mubr.f32.mxu0 0.0
        %1711 = vmatmul.mubr.f32.gmra.mrb[0].mxu0 %v1517
        %v1712 = vpop.f32.mrb[0].mxu0
        %v1713 = vadd.f32 0.0, %v1712
        %v1714 = vpop.f32.mrb[0].mxu0
        %1715 = vmatprep.mubr.f32.mxu0 0.0
        %1716 = vmatmul.mubr.f32.gmra.mrb[0].mxu0 %v1520
        %v1717 = vpop.f32.mrb[0].mxu0
        %v1718 = vadd.f32 0.0, %v1717
        %v1719 = vpop.f32.mrb[0].mxu0
        %1720 = vmatprep.mubr.f32.mxu0 0.0
        %1721 = vmatmul.mubr.f32.gmra.mrb[0].mxu0 %v1523
        %v1722 = vpop.f32.mrb[0].mxu0
        %v1723 = vadd.f32 0.0, %v1722
        %v1724 = vpop.f32.mrb[0].mxu0
        %1725 = vmatprep.mubr.f32.mxu0 0.0
        %1726 = vmatmul.mubr.f32.gmra.mrb[0].mxu0 %v1526
        %v1727 = vpop.f32.mrb[0].mxu0
        %v1728 = vadd.f32 0.0, %v1727
        %v1729 = vpop.f32.mrb[0].mxu0
        %1730 = vmatprep.mubr.f32.mxu0 0.0
        %1731 = vmatmul.mubr.f32.gmra.mrb[0].mxu0 %v1529
        %v1732 = vpop.f32.mrb[0].mxu0
        %v1733 = vadd.f32 0.0, %v1732
        %v1734 = vpop.f32.mrb[0].mxu0
        %1735 = vmatprep.mubr.f32.mxu0 0.0
        %1736 = vmatmul.mubr.f32.gmra.mrb[0].mxu0 %v1532
        %v1737 = vpop.f32.mrb[0].mxu0
        %v1738 = vadd.f32 0.0, %v1737
        %v1739 = vpop.f32.mrb[0].mxu0
        %1740 = vmatprep.mubr.f32.mxu0 0.0
        %1741 = vmatmul.mubr.f32.gmra.mrb[0].mxu0 %v1535
        %v1742 = vpop.f32.mrb[0].mxu0
        %v1743 = vadd.f32 0.0, %v1742
        %v1744 = vpop.f32.mrb[0].mxu0
        %1745 = vmatprep.mubr.f32.mxu0 0.0
        %1746 = vmatmul.mubr.f32.gmra.mrb[0].mxu0 %v1538
        %v1747 = vpop.f32.mrb[0].mxu0
        %v1748 = vadd.f32 0.0, %v1747
        %v1749 = vpop.f32.mrb[0].mxu0
        %1750 = vmatprep.mubr.f32.mxu0 0.0
        %1751 = vmatmul.mubr.f32.gmra.mrb[0].mxu0 %v1541
        %v1752 = vpop.f32.mrb[0].mxu0
        %v1753 = vadd.f32 0.0, %v1752
        %v1754 = vpop.f32.mrb[0].mxu0
        %1755 = vmatprep.mubr.f32.mxu0 0.0
        %1756 = vmatmul.mubr.f32.gmra.mrb[0].mxu0 %v1544
        %v1757 = vpop.f32.mrb[0].mxu0
        %v1758 = vadd.f32 0.0, %v1757
        %v1759 = vpop.f32.mrb[0].mxu0
        %1760 = vmatprep.mubr.f32.mxu0 0.0
        %1761 = vmatmul.mubr.f32.gmra.mrb[0].mxu0 %v1547
        %v1762 = vpop.f32.mrb[0].mxu0
        %v1763 = vadd.f32 0.0, %v1762
        %v1764 = vpop.f32.mrb[0].mxu0
        %1765 = vmatprep.mubr.f32.mxu0 0.0
        %1766 = vmatmul.mubr.f32.gmra.mrb[0].mxu0 %v1550
        %v1767 = vpop.f32.mrb[0].mxu0
        %v1768 = vadd.f32 0.0, %v1767
        %v1769 = vpop.f32.mrb[0].mxu0
        %1770 = vmatprep.mubr.f32.mxu0 0.0
        %1771 = vmatmul.mubr.f32.gmra.mrb[0].mxu0 %v1553
        %v1772 = vpop.f32.mrb[0].mxu0
        %v1773 = vadd.f32 0.0, %v1772
        %v1774 = vpop.f32.mrb[0].mxu0
        %1775 = vmatprep.mubr.f32.mxu0 0.0
        %1776 = vmatmul.mubr.f32.gmra.mrb[0].mxu0 %v1556
        %v1777 = vpop.f32.mrb[0].mxu0
        %v1778 = vadd.f32 0.0, %v1777
        %v1779 = vpop.f32.mrb[0].mxu0
        %1780 = vmatprep.mubr.f32.mxu0 0.0
        %1781 = vmatmul.mubr.f32.gmra.mrb[0].mxu0 %v1559
        %v1782 = vpop.f32.mrb[0].mxu0
        %v1783 = vadd.f32 0.0, %v1782
        %v1784 = vpop.f32.mrb[0].mxu0
        %1785 = vdwg.mxu0
        %v1786 = vadd.f32 %v1270, %v1628
        %v1787 = vadd.f32 %v1275, %v1633
        %v1788 = vadd.f32 %v1280, %v1638
        %v1789 = vadd.f32 %v1285, %v1643
        %v1790 = vadd.f32 %v1290, %v1648
        %v1791 = vadd.f32 %v1295, %v1653
        %v1792 = vadd.f32 %v1300, %v1658
        %v1793 = vadd.f32 %v1305, %v1663
        %v1794 = vadd.f32 %v1310, %v1668
        %v1795 = vadd.f32 %v1315, %v1673
        %v1796 = vadd.f32 %v1320, %v1678
        %v1797 = vadd.f32 %v1325, %v1683
        %v1798 = vadd.f32 %v1330, %v1688
        %v1799 = vadd.f32 %v1335, %v1693
        %v1800 = vadd.f32 %v1340, %v1698
        %v1801 = vadd.f32 %v1345, %v1703
        %v1802 = vadd.f32 %v1350, %v1708
        %v1803 = vadd.f32 %v1355, %v1713
        %v1804 = vadd.f32 %v1360, %v1718
        %v1805 = vadd.f32 %v1365, %v1723
        %v1806 = vadd.f32 %v1370, %v1728
        %v1807 = vadd.f32 %v1375, %v1733
        %v1808 = vadd.f32 %v1380, %v1738
        %v1809 = vadd.f32 %v1385, %v1743
        %v1810 = vadd.f32 %v1390, %v1748
        %v1811 = vadd.f32 %v1395, %v1753
        %v1812 = vadd.f32 %v1400, %v1758
        %v1813 = vadd.f32 %v1405, %v1763
        %v1814 = vadd.f32 %v1410, %v1768
        %v1815 = vadd.f32 %v1415, %v1773
        %v1816 = vadd.f32 %v1420, %v1778
        %v1817 = vadd.f32 %v1425, %v1783
        %v1818 = vld [vmem:[%s680] sm:$0xff]
        %v1819 = vld [vmem:[%s680 + $0x8] sm:$0xff]
        %v1820 = vld [vmem:[%s680 + $0x18] sm:$0xff]
        %v1821 = vld [vmem:[%s680 + $0x20] sm:$0xff]
        %v1822 = vld [vmem:[%s680 + $0x30] sm:$0xff]
        %v1823 = vld [vmem:[%s680 + $0x38] sm:$0xff]
        %v1824 = vld [vmem:[%s680 + $0x48] sm:$0xff]
        %v1825 = vld [vmem:[%s680 + $0x50] sm:$0xff]
        %v1826 = vld [vmem:[%s680 + $0x60] sm:$0xff]
        %v1827 = vld [vmem:[%s680 + $0x68] sm:$0xff]
        %v1828 = vld [vmem:[%s680 + $0x78] sm:$0xff]
        %v1829 = vld [vmem:[%s680 + $0x80] sm:$0xff]
        %v1830 = vld [vmem:[%s680 + $0x90] sm:$0xff]
        %v1831 = vld [vmem:[%s680 + $0x98] sm:$0xff]
        %v1832 = vld [vmem:[%s680 + $0xa8] sm:$0xff]
        %v1833 = vld [vmem:[%s680 + $0xb0] sm:$0xff]
        %v1834 = vld [vmem:[%s680 + $0xc0] sm:$0xff]
        %v1835 = vld [vmem:[%s680 + $0xc8] sm:$0xff]
        %v1836 = vld [vmem:[%s680 + $0xd8] sm:$0xff]
        %v1837 = vld [vmem:[%s680 + $0xe0] sm:$0xff]
        %v1838 = vld [vmem:[%s680 + $0xf0] sm:$0xff]
        %v1839 = vld [vmem:[%s680 + $0xf8] sm:$0xff]
        %v1840 = vld [vmem:[%s680 + $0x108] sm:$0xff]
        %v1841 = vld [vmem:[%s680 + $0x110] sm:$0xff]
        %v1842 = vld [vmem:[%s680 + $0x120] sm:$0xff]
        %v1843 = vld [vmem:[%s680 + $0x128] sm:$0xff]
        %v1844 = vld [vmem:[%s680 + $0x138] sm:$0xff]
        %v1845 = vld [vmem:[%s680 + $0x140] sm:$0xff]
        %v1846 = vld [vmem:[%s680 + $0x150] sm:$0xff]
        %v1847 = vld [vmem:[%s680 + $0x158] sm:$0xff]
        %v1848 = vld [vmem:[%s680 + $0x168] sm:$0xff]
        %v1849 = vld [vmem:[%s680 + $0x170] sm:$0xff]
        %s1850 = scalar_lea.vmem [#allocation6], 96
        %v1851 = vld [vmem:[%s1850] sm:$0xff]
        %v1852 = vld [vmem:[%s1850 + $0x8] sm:$0xff]
        %v1853 = vld [vmem:[%s1850 + $0x10] sm:$0xff]
        %v1854 = vld [vmem:[%s1850 + $0x18] sm:$0xff]
        %v1856 = vsel %vm624, %v1818, 0
        %v1859 = vsel %vm624, %v1819, 0
        %v1862 = vsel %vm624, %v1820, 0
        %v1865 = vsel %vm624, %v1821, 0
        %v1868 = vsel %vm624, %v1822, 0
        %v1871 = vsel %vm624, %v1823, 0
        %v1874 = vsel %vm624, %v1824, 0
        %v1877 = vsel %vm624, %v1825, 0
        %v1880 = vsel %vm624, %v1826, 0
        %v1883 = vsel %vm624, %v1827, 0
        %v1886 = vsel %vm624, %v1828, 0
        %v1889 = vsel %vm624, %v1829, 0
        %v1892 = vsel %vm624, %v1830, 0
        %v1895 = vsel %vm624, %v1831, 0
        %v1898 = vsel %vm624, %v1832, 0
        %v1901 = vsel %vm624, %v1833, 0
        %v1904 = vsel %vm624, %v1834, 0
        %v1907 = vsel %vm624, %v1835, 0
        %v1910 = vsel %vm624, %v1836, 0
        %v1913 = vsel %vm624, %v1837, 0
        %v1916 = vsel %vm624, %v1838, 0
        %v1919 = vsel %vm624, %v1839, 0
        %v1922 = vsel %vm624, %v1840, 0
        %v1925 = vsel %vm624, %v1841, 0
        %v1928 = vsel %vm624, %v1842, 0
        %v1931 = vsel %vm624, %v1843, 0
        %v1934 = vsel %vm624, %v1844, 0
        %v1937 = vsel %vm624, %v1845, 0
        %v1940 = vsel %vm624, %v1846, 0
        %v1943 = vsel %vm624, %v1847, 0
        %v1946 = vsel %vm624, %v1848, 0
        %v1949 = vsel %vm624, %v1849, 0
        %1951 = vmatprep.subr.mxu0 0.0
        %1952 = vmatpush1.msra.mxu0 %v1851
        %1953 = vmatprep.subr.mxu0 0.0
        %1954 = vmatpush1.msra.mxu0 %v1852
        %1955 = vmatprep.subr.mxu0 0.0
        %1956 = vmatpush1.msra.mxu0 %v1853
        %1957 = vmatprep.subr.mxu0 0.0
        %1958 = vmatpush1.msra.mxu0 %v1854
        %1959 = vmatprep.subr.mxu0 0.0
        %1960 = vmatpush1.msra.mxu0 0.0
        %1961 = vmatprep.subr.mxu0 0.0
        %1962 = vmatpush1.msra.mxu0 0.0
        %1963 = vmatprep.subr.mxu0 0.0
        %1964 = vmatpush1.msra.mxu0 0.0
        %1965 = vmatprep.subr.mxu0 0.0
        %1966 = vmatpush1.msra.mxu0 0.0
        %1967 = vmatprep.subr.mxu0 0.0
        %1968 = vmatpush1.msra.mxu0 0.0
        %1969 = vmatprep.subr.mxu0 0.0
        %1970 = vmatpush1.msra.mxu0 0.0
        %1971 = vmatprep.subr.mxu0 0.0
        %1972 = vmatpush1.msra.mxu0 0.0
        %1973 = vmatprep.subr.mxu0 0.0
        %1974 = vmatpush1.msra.mxu0 0.0
        %1975 = vmatprep.subr.mxu0 0.0
        %1976 = vmatpush1.msra.mxu0 0.0
        %1977 = vmatprep.subr.mxu0 0.0
        %1978 = vmatpush1.msra.mxu0 0.0
        %1979 = vmatprep.subr.mxu0 0.0
        %1980 = vmatpush1.msra.mxu0 0.0
        %1981 = vmatprep.subr.mxu0 0.0
        %1982 = vmatpush1.msra.mxu0 0.0
        %1983 = vmatprep.subr.mxu0 0.0
        %1984 = vmatpush1.msra.mxu0 0.0
        %1985 = vmatprep.subr.mxu0 0.0
        %1986 = vmatpush1.msra.mxu0 0.0
        %1987 = vmatprep.subr.mxu0 0.0
        %1988 = vmatpush1.msra.mxu0 0.0
        %1989 = vmatprep.subr.mxu0 0.0
        %1990 = vmatpush1.msra.mxu0 0.0
        %1991 = vmatprep.subr.mxu0 0.0
        %1992 = vmatpush1.msra.mxu0 0.0
        %1993 = vmatprep.subr.mxu0 0.0
        %1994 = vmatpush1.msra.mxu0 0.0
        %1995 = vmatprep.subr.mxu0 0.0
        %1996 = vmatpush1.msra.mxu0 0.0
        %1997 = vmatprep.subr.mxu0 0.0
        %1998 = vmatpush1.msra.mxu0 0.0
        %1999 = vmatprep.subr.mxu0 0.0
        %2000 = vmatpush1.msra.mxu0 0.0
        %2001 = vmatprep.subr.mxu0 0.0
        %2002 = vmatpush1.msra.mxu0 0.0
        %2003 = vmatprep.subr.mxu0 0.0
        %2004 = vmatpush1.msra.mxu0 0.0
        %2005 = vmatprep.subr.mxu0 0.0
        %2006 = vmatpush1.msra.mxu0 0.0
        %2007 = vmatprep.subr.mxu0 0.0
        %2008 = vmatpush1.msra.mxu0 0.0
        %2009 = vmatprep.subr.mxu0 0.0
        %2010 = vmatpush1.msra.mxu0 0.0
        %2011 = vmatprep.subr.mxu0 0.0
        %2012 = vmatpush1.msra.mxu0 0.0
        %2013 = vmatprep.subr.mxu0 0.0
        %2014 = vmatpush1.msra.mxu0 0.0
        %2015 = vmatprep.mubr.f32.mxu0 0.0
        %2016 = vmatmul.mubr.f32.gmra.mrb[0].mxu0 %v1856
        %v2017 = vpop.f32.mrb[0].mxu0
        %v2018 = vadd.f32 0.0, %v2017
        %v2019 = vpop.f32.mrb[0].mxu0
        %2020 = vmatprep.mubr.f32.mxu0 0.0
        %2021 = vmatmul.mubr.f32.gmra.mrb[0].mxu0 %v1859
        %v2022 = vpop.f32.mrb[0].mxu0
        %v2023 = vadd.f32 0.0, %v2022
        %v2024 = vpop.f32.mrb[0].mxu0
        %2025 = vmatprep.mubr.f32.mxu0 0.0
        %2026 = vmatmul.mubr.f32.gmra.mrb[0].mxu0 %v1862
        %v2027 = vpop.f32.mrb[0].mxu0
        %v2028 = vadd.f32 0.0, %v2027
        %v2029 = vpop.f32.mrb[0].mxu0
        %2030 = vmatprep.mubr.f32.mxu0 0.0
        %2031 = vmatmul.mubr.f32.gmra.mrb[0].mxu0 %v1865
        %v2032 = vpop.f32.mrb[0].mxu0
        %v2033 = vadd.f32 0.0, %v2032
        %v2034 = vpop.f32.mrb[0].mxu0
        %2035 = vmatprep.mubr.f32.mxu0 0.0
        %2036 = vmatmul.mubr.f32.gmra.mrb[0].mxu0 %v1868
        %v2037 = vpop.f32.mrb[0].mxu0
        %v2038 = vadd.f32 0.0, %v2037
        %v2039 = vpop.f32.mrb[0].mxu0
        %2040 = vmatprep.mubr.f32.mxu0 0.0
        %2041 = vmatmul.mubr.f32.gmra.mrb[0].mxu0 %v1871
        %v2042 = vpop.f32.mrb[0].mxu0
        %v2043 = vadd.f32 0.0, %v2042
        %v2044 = vpop.f32.mrb[0].mxu0
        %2045 = vmatprep.mubr.f32.mxu0 0.0
        %2046 = vmatmul.mubr.f32.gmra.mrb[0].mxu0 %v1874
        %v2047 = vpop.f32.mrb[0].mxu0
        %v2048 = vadd.f32 0.0, %v2047
        %v2049 = vpop.f32.mrb[0].mxu0
        %2050 = vmatprep.mubr.f32.mxu0 0.0
        %2051 = vmatmul.mubr.f32.gmra.mrb[0].mxu0 %v1877
        %v2052 = vpop.f32.mrb[0].mxu0
        %v2053 = vadd.f32 0.0, %v2052
        %v2054 = vpop.f32.mrb[0].mxu0
        %2055 = vmatprep.mubr.f32.mxu0 0.0
        %2056 = vmatmul.mubr.f32.gmra.mrb[0].mxu0 %v1880
        %v2057 = vpop.f32.mrb[0].mxu0
        %v2058 = vadd.f32 0.0, %v2057
        %v2059 = vpop.f32.mrb[0].mxu0
        %2060 = vmatprep.mubr.f32.mxu0 0.0
        %2061 = vmatmul.mubr.f32.gmra.mrb[0].mxu0 %v1883
        %v2062 = vpop.f32.mrb[0].mxu0
        %v2063 = vadd.f32 0.0, %v2062
        %v2064 = vpop.f32.mrb[0].mxu0
        %2065 = vmatprep.mubr.f32.mxu0 0.0
        %2066 = vmatmul.mubr.f32.gmra.mrb[0].mxu0 %v1886
        %v2067 = vpop.f32.mrb[0].mxu0
        %v2068 = vadd.f32 0.0, %v2067
        %v2069 = vpop.f32.mrb[0].mxu0
        %2070 = vmatprep.mubr.f32.mxu0 0.0
        %2071 = vmatmul.mubr.f32.gmra.mrb[0].mxu0 %v1889
        %v2072 = vpop.f32.mrb[0].mxu0
        %v2073 = vadd.f32 0.0, %v2072
        %v2074 = vpop.f32.mrb[0].mxu0
        %2075 = vmatprep.mubr.f32.mxu0 0.0
        %2076 = vmatmul.mubr.f32.gmra.mrb[0].mxu0 %v1892
        %v2077 = vpop.f32.mrb[0].mxu0
        %v2078 = vadd.f32 0.0, %v2077
        %v2079 = vpop.f32.mrb[0].mxu0
        %2080 = vmatprep.mubr.f32.mxu0 0.0
        %2081 = vmatmul.mubr.f32.gmra.mrb[0].mxu0 %v1895
        %v2082 = vpop.f32.mrb[0].mxu0
        %v2083 = vadd.f32 0.0, %v2082
        %v2084 = vpop.f32.mrb[0].mxu0
        %2085 = vmatprep.mubr.f32.mxu0 0.0
        %2086 = vmatmul.mubr.f32.gmra.mrb[0].mxu0 %v1898
        %v2087 = vpop.f32.mrb[0].mxu0
        %v2088 = vadd.f32 0.0, %v2087
        %v2089 = vpop.f32.mrb[0].mxu0
        %2090 = vmatprep.mubr.f32.mxu0 0.0
        %2091 = vmatmul.mubr.f32.gmra.mrb[0].mxu0 %v1901
        %v2092 = vpop.f32.mrb[0].mxu0
        %v2093 = vadd.f32 0.0, %v2092
        %v2094 = vpop.f32.mrb[0].mxu0
        %2095 = vmatprep.mubr.f32.mxu0 0.0
        %2096 = vmatmul.mubr.f32.gmra.mrb[0].mxu0 %v1904
        %v2097 = vpop.f32.mrb[0].mxu0
        %v2098 = vadd.f32 0.0, %v2097
        %v2099 = vpop.f32.mrb[0].mxu0
        %2100 = vmatprep.mubr.f32.mxu0 0.0
        %2101 = vmatmul.mubr.f32.gmra.mrb[0].mxu0 %v1907
        %v2102 = vpop.f32.mrb[0].mxu0
        %v2103 = vadd.f32 0.0, %v2102
        %v2104 = vpop.f32.mrb[0].mxu0
        %2105 = vmatprep.mubr.f32.mxu0 0.0
        %2106 = vmatmul.mubr.f32.gmra.mrb[0].mxu0 %v1910
        %v2107 = vpop.f32.mrb[0].mxu0
        %v2108 = vadd.f32 0.0, %v2107
        %v2109 = vpop.f32.mrb[0].mxu0
        %2110 = vmatprep.mubr.f32.mxu0 0.0
        %2111 = vmatmul.mubr.f32.gmra.mrb[0].mxu0 %v1913
        %v2112 = vpop.f32.mrb[0].mxu0
        %v2113 = vadd.f32 0.0, %v2112
        %v2114 = vpop.f32.mrb[0].mxu0
        %2115 = vmatprep.mubr.f32.mxu0 0.0
        %2116 = vmatmul.mubr.f32.gmra.mrb[0].mxu0 %v1916
        %v2117 = vpop.f32.mrb[0].mxu0
        %v2118 = vadd.f32 0.0, %v2117
        %v2119 = vpop.f32.mrb[0].mxu0
        %2120 = vmatprep.mubr.f32.mxu0 0.0
        %2121 = vmatmul.mubr.f32.gmra.mrb[0].mxu0 %v1919
        %v2122 = vpop.f32.mrb[0].mxu0
        %v2123 = vadd.f32 0.0, %v2122
        %v2124 = vpop.f32.mrb[0].mxu0
        %2125 = vmatprep.mubr.f32.mxu0 0.0
        %2126 = vmatmul.mubr.f32.gmra.mrb[0].mxu0 %v1922
        %v2127 = vpop.f32.mrb[0].mxu0
        %v2128 = vadd.f32 0.0, %v2127
        %v2129 = vpop.f32.mrb[0].mxu0
        %2130 = vmatprep.mubr.f32.mxu0 0.0
        %2131 = vmatmul.mubr.f32.gmra.mrb[0].mxu0 %v1925
        %v2132 = vpop.f32.mrb[0].mxu0
        %v2133 = vadd.f32 0.0, %v2132
        %v2134 = vpop.f32.mrb[0].mxu0
        %2135 = vmatprep.mubr.f32.mxu0 0.0
        %2136 = vmatmul.mubr.f32.gmra.mrb[0].mxu0 %v1928
        %v2137 = vpop.f32.mrb[0].mxu0
        %v2138 = vadd.f32 0.0, %v2137
        %v2139 = vpop.f32.mrb[0].mxu0
        %2140 = vmatprep.mubr.f32.mxu0 0.0
        %2141 = vmatmul.mubr.f32.gmra.mrb[0].mxu0 %v1931
        %v2142 = vpop.f32.mrb[0].mxu0
        %v2143 = vadd.f32 0.0, %v2142
        %v2144 = vpop.f32.mrb[0].mxu0
        %2145 = vmatprep.mubr.f32.mxu0 0.0
        %2146 = vmatmul.mubr.f32.gmra.mrb[0].mxu0 %v1934
        %v2147 = vpop.f32.mrb[0].mxu0
        %v2148 = vadd.f32 0.0, %v2147
        %v2149 = vpop.f32.mrb[0].mxu0
        %2150 = vmatprep.mubr.f32.mxu0 0.0
        %2151 = vmatmul.mubr.f32.gmra.mrb[0].mxu0 %v1937
        %v2152 = vpop.f32.mrb[0].mxu0
        %v2153 = vadd.f32 0.0, %v2152
        %v2154 = vpop.f32.mrb[0].mxu0
        %2155 = vmatprep.mubr.f32.mxu0 0.0
        %2156 = vmatmul.mubr.f32.gmra.mrb[0].mxu0 %v1940
        %v2157 = vpop.f32.mrb[0].mxu0
        %v2158 = vadd.f32 0.0, %v2157
        %v2159 = vpop.f32.mrb[0].mxu0
        %2160 = vmatprep.mubr.f32.mxu0 0.0
        %2161 = vmatmul.mubr.f32.gmra.mrb[0].mxu0 %v1943
        %v2162 = vpop.f32.mrb[0].mxu0
        %v2163 = vadd.f32 0.0, %v2162
        %v2164 = vpop.f32.mrb[0].mxu0
        %2165 = vmatprep.mubr.f32.mxu0 0.0
        %2166 = vmatmul.mubr.f32.gmra.mrb[0].mxu0 %v1946
        %v2167 = vpop.f32.mrb[0].mxu0
        %v2168 = vadd.f32 0.0, %v2167
        %v2169 = vpop.f32.mrb[0].mxu0
        %2170 = vmatprep.mubr.f32.mxu0 0.0
        %2171 = vmatmul.mubr.f32.gmra.mrb[0].mxu0 %v1949
        %v2172 = vpop.f32.mrb[0].mxu0
        %v2173 = vadd.f32 0.0, %v2172
        %v2174 = vpop.f32.mrb[0].mxu0
        %2175 = vdwg.mxu0
        %v2176 = vadd.f32 %v1786, %v2018
        %v2177 = vadd.f32 %v1787, %v2023
        %v2178 = vadd.f32 %v1788, %v2028
        %v2179 = vadd.f32 %v1789, %v2033
        %v2180 = vadd.f32 %v1790, %v2038
        %v2181 = vadd.f32 %v1791, %v2043
        %v2182 = vadd.f32 %v1792, %v2048
        %v2183 = vadd.f32 %v1793, %v2053
        %v2184 = vadd.f32 %v1794, %v2058
        %v2185 = vadd.f32 %v1795, %v2063
        %v2186 = vadd.f32 %v1796, %v2068
        %v2187 = vadd.f32 %v1797, %v2073
        %v2188 = vadd.f32 %v1798, %v2078
        %v2189 = vadd.f32 %v1799, %v2083
        %v2190 = vadd.f32 %v1800, %v2088
        %v2191 = vadd.f32 %v1801, %v2093
        %v2192 = vadd.f32 %v1802, %v2098
        %v2193 = vadd.f32 %v1803, %v2103
        %v2194 = vadd.f32 %v1804, %v2108
        %v2195 = vadd.f32 %v1805, %v2113
        %v2196 = vadd.f32 %v1806, %v2118
        %v2197 = vadd.f32 %v1807, %v2123
        %v2198 = vadd.f32 %v1808, %v2128
        %v2199 = vadd.f32 %v1809, %v2133
        %v2200 = vadd.f32 %v1810, %v2138
        %v2201 = vadd.f32 %v1811, %v2143
        %v2202 = vadd.f32 %v1812, %v2148
        %v2203 = vadd.f32 %v1813, %v2153
        %v2204 = vadd.f32 %v1814, %v2158
        %v2205 = vadd.f32 %v1815, %v2163
        %v2206 = vadd.f32 %v1816, %v2168
        %v2207 = vadd.f32 %v1817, %v2173
        %v2208 = vld [vmem:[%s680 + $0x1] sm:$0xff]
        %v2209 = vld [vmem:[%s680 + $0x9] sm:$0xff]
        %v2210 = vld [vmem:[%s680 + $0x19] sm:$0xff]
        %v2211 = vld [vmem:[%s680 + $0x21] sm:$0xff]
        %v2212 = vld [vmem:[%s680 + $0x31] sm:$0xff]
        %v2213 = vld [vmem:[%s680 + $0x39] sm:$0xff]
        %v2214 = vld [vmem:[%s680 + $0x49] sm:$0xff]
        %v2215 = vld [vmem:[%s680 + $0x51] sm:$0xff]
        %v2216 = vld [vmem:[%s680 + $0x61] sm:$0xff]
        %v2217 = vld [vmem:[%s680 + $0x69] sm:$0xff]
        %v2218 = vld [vmem:[%s680 + $0x79] sm:$0xff]
        %v2219 = vld [vmem:[%s680 + $0x81] sm:$0xff]
        %v2220 = vld [vmem:[%s680 + $0x91] sm:$0xff]
        %v2221 = vld [vmem:[%s680 + $0x99] sm:$0xff]
        %v2222 = vld [vmem:[%s680 + $0xa9] sm:$0xff]
        %v2223 = vld [vmem:[%s680 + $0xb1] sm:$0xff]
        %v2224 = vld [vmem:[%s680 + $0xc1] sm:$0xff]
        %v2225 = vld [vmem:[%s680 + $0xc9] sm:$0xff]
        %v2226 = vld [vmem:[%s680 + $0xd9] sm:$0xff]
        %v2227 = vld [vmem:[%s680 + $0xe1] sm:$0xff]
        %v2228 = vld [vmem:[%s680 + $0xf1] sm:$0xff]
        %v2229 = vld [vmem:[%s680 + $0xf9] sm:$0xff]
        %v2230 = vld [vmem:[%s680 + $0x109] sm:$0xff]
        %v2231 = vld [vmem:[%s680 + $0x111] sm:$0xff]
        %v2232 = vld [vmem:[%s680 + $0x121] sm:$0xff]
        %v2233 = vld [vmem:[%s680 + $0x129] sm:$0xff]
        %v2234 = vld [vmem:[%s680 + $0x139] sm:$0xff]
        %v2235 = vld [vmem:[%s680 + $0x141] sm:$0xff]
        %v2236 = vld [vmem:[%s680 + $0x151] sm:$0xff]
        %v2237 = vld [vmem:[%s680 + $0x159] sm:$0xff]
        %v2238 = vld [vmem:[%s680 + $0x169] sm:$0xff]
        %v2239 = vld [vmem:[%s680 + $0x171] sm:$0xff]
        %s2240 = scalar_lea.vmem [#allocation6], 128
        %v2241 = vld [vmem:[%s2240] sm:$0xff]
        %v2242 = vld [vmem:[%s2240 + $0x8] sm:$0xff]
        %v2243 = vld [vmem:[%s2240 + $0x10] sm:$0xff]
        %v2244 = vld [vmem:[%s2240 + $0x18] sm:$0xff]
        %v2246 = vsel %vm624, %v2208, 0
        %v2249 = vsel %vm624, %v2209, 0
        %v2252 = vsel %vm624, %v2210, 0
        %v2255 = vsel %vm624, %v2211, 0
        %v2258 = vsel %vm624, %v2212, 0
        %v2261 = vsel %vm624, %v2213, 0
        %v2264 = vsel %vm624, %v2214, 0
        %v2267 = vsel %vm624, %v2215, 0
        %v2270 = vsel %vm624, %v2216, 0
        %v2273 = vsel %vm624, %v2217, 0
        %v2276 = vsel %vm624, %v2218, 0
        %v2279 = vsel %vm624, %v2219, 0
        %v2282 = vsel %vm624, %v2220, 0
        %v2285 = vsel %vm624, %v2221, 0
        %v2288 = vsel %vm624, %v2222, 0
        %v2291 = vsel %vm624, %v2223, 0
        %v2294 = vsel %vm624, %v2224, 0
        %v2297 = vsel %vm624, %v2225, 0
        %v2300 = vsel %vm624, %v2226, 0
        %v2303 = vsel %vm624, %v2227, 0
        %v2306 = vsel %vm624, %v2228, 0
        %v2309 = vsel %vm624, %v2229, 0
        %v2312 = vsel %vm624, %v2230, 0
        %v2315 = vsel %vm624, %v2231, 0
        %v2318 = vsel %vm624, %v2232, 0
        %v2321 = vsel %vm624, %v2233, 0
        %v2324 = vsel %vm624, %v2234, 0
        %v2327 = vsel %vm624, %v2235, 0
        %v2330 = vsel %vm624, %v2236, 0
        %v2333 = vsel %vm624, %v2237, 0
        %v2336 = vsel %vm624, %v2238, 0
        %v2339 = vsel %vm624, %v2239, 0
        %2341 = vmatprep.subr.mxu0 0.0
        %2342 = vmatpush1.msra.mxu0 %v2241
        %2343 = vmatprep.subr.mxu0 0.0
        %2344 = vmatpush1.msra.mxu0 %v2242
        %2345 = vmatprep.subr.mxu0 0.0
        %2346 = vmatpush1.msra.mxu0 %v2243
        %2347 = vmatprep.subr.mxu0 0.0
        %2348 = vmatpush1.msra.mxu0 %v2244
        %2349 = vmatprep.subr.mxu0 0.0
        %2350 = vmatpush1.msra.mxu0 0.0
        %2351 = vmatprep.subr.mxu0 0.0
        %2352 = vmatpush1.msra.mxu0 0.0
        %2353 = vmatprep.subr.mxu0 0.0
        %2354 = vmatpush1.msra.mxu0 0.0
        %2355 = vmatprep.subr.mxu0 0.0
        %2356 = vmatpush1.msra.mxu0 0.0
        %2357 = vmatprep.subr.mxu0 0.0
        %2358 = vmatpush1.msra.mxu0 0.0
        %2359 = vmatprep.subr.mxu0 0.0
        %2360 = vmatpush1.msra.mxu0 0.0
        %2361 = vmatprep.subr.mxu0 0.0
        %2362 = vmatpush1.msra.mxu0 0.0
        %2363 = vmatprep.subr.mxu0 0.0
        %2364 = vmatpush1.msra.mxu0 0.0
        %2365 = vmatprep.subr.mxu0 0.0
        %2366 = vmatpush1.msra.mxu0 0.0
        %2367 = vmatprep.subr.mxu0 0.0
        %2368 = vmatpush1.msra.mxu0 0.0
        %2369 = vmatprep.subr.mxu0 0.0
        %2370 = vmatpush1.msra.mxu0 0.0
        %2371 = vmatprep.subr.mxu0 0.0
        %2372 = vmatpush1.msra.mxu0 0.0
        %2373 = vmatprep.subr.mxu0 0.0
        %2374 = vmatpush1.msra.mxu0 0.0
        %2375 = vmatprep.subr.mxu0 0.0
        %2376 = vmatpush1.msra.mxu0 0.0
        %2377 = vmatprep.subr.mxu0 0.0
        %2378 = vmatpush1.msra.mxu0 0.0
        %2379 = vmatprep.subr.mxu0 0.0
        %2380 = vmatpush1.msra.mxu0 0.0
        %2381 = vmatprep.subr.mxu0 0.0
        %2382 = vmatpush1.msra.mxu0 0.0
        %2383 = vmatprep.subr.mxu0 0.0
        %2384 = vmatpush1.msra.mxu0 0.0
        %2385 = vmatprep.subr.mxu0 0.0
        %2386 = vmatpush1.msra.mxu0 0.0
        %2387 = vmatprep.subr.mxu0 0.0
        %2388 = vmatpush1.msra.mxu0 0.0
        %2389 = vmatprep.subr.mxu0 0.0
        %2390 = vmatpush1.msra.mxu0 0.0
        %2391 = vmatprep.subr.mxu0 0.0
        %2392 = vmatpush1.msra.mxu0 0.0
        %2393 = vmatprep.subr.mxu0 0.0
        %2394 = vmatpush1.msra.mxu0 0.0
        %2395 = vmatprep.subr.mxu0 0.0
        %2396 = vmatpush1.msra.mxu0 0.0
        %2397 = vmatprep.subr.mxu0 0.0
        %2398 = vmatpush1.msra.mxu0 0.0
        %2399 = vmatprep.subr.mxu0 0.0
        %2400 = vmatpush1.msra.mxu0 0.0
        %2401 = vmatprep.subr.mxu0 0.0
        %2402 = vmatpush1.msra.mxu0 0.0
        %2403 = vmatprep.subr.mxu0 0.0
        %2404 = vmatpush1.msra.mxu0 0.0
        %2405 = vmatprep.mubr.f32.mxu0 0.0
        %2406 = vmatmul.mubr.f32.gmra.mrb[0].mxu0 %v2246
        %v2407 = vpop.f32.mrb[0].mxu0
        %v2408 = vadd.f32 0.0, %v2407
        %v2409 = vpop.f32.mrb[0].mxu0
        %2410 = vmatprep.mubr.f32.mxu0 0.0
        %2411 = vmatmul.mubr.f32.gmra.mrb[0].mxu0 %v2249
        %v2412 = vpop.f32.mrb[0].mxu0
        %v2413 = vadd.f32 0.0, %v2412
        %v2414 = vpop.f32.mrb[0].mxu0
        %2415 = vmatprep.mubr.f32.mxu0 0.0
        %2416 = vmatmul.mubr.f32.gmra.mrb[0].mxu0 %v2252
        %v2417 = vpop.f32.mrb[0].mxu0
        %v2418 = vadd.f32 0.0, %v2417
        %v2419 = vpop.f32.mrb[0].mxu0
        %2420 = vmatprep.mubr.f32.mxu0 0.0
        %2421 = vmatmul.mubr.f32.gmra.mrb[0].mxu0 %v2255
        %v2422 = vpop.f32.mrb[0].mxu0
        %v2423 = vadd.f32 0.0, %v2422
        %v2424 = vpop.f32.mrb[0].mxu0
        %2425 = vmatprep.mubr.f32.mxu0 0.0
        %2426 = vmatmul.mubr.f32.gmra.mrb[0].mxu0 %v2258
        %v2427 = vpop.f32.mrb[0].mxu0
        %v2428 = vadd.f32 0.0, %v2427
        %v2429 = vpop.f32.mrb[0].mxu0
        %2430 = vmatprep.mubr.f32.mxu0 0.0
        %2431 = vmatmul.mubr.f32.gmra.mrb[0].mxu0 %v2261
        %v2432 = vpop.f32.mrb[0].mxu0
        %v2433 = vadd.f32 0.0, %v2432
        %v2434 = vpop.f32.mrb[0].mxu0
        %2435 = vmatprep.mubr.f32.mxu0 0.0
        %2436 = vmatmul.mubr.f32.gmra.mrb[0].mxu0 %v2264
        %v2437 = vpop.f32.mrb[0].mxu0
        %v2438 = vadd.f32 0.0, %v2437
        %v2439 = vpop.f32.mrb[0].mxu0
        %2440 = vmatprep.mubr.f32.mxu0 0.0
        %2441 = vmatmul.mubr.f32.gmra.mrb[0].mxu0 %v2267
        %v2442 = vpop.f32.mrb[0].mxu0
        %v2443 = vadd.f32 0.0, %v2442
        %v2444 = vpop.f32.mrb[0].mxu0
        %2445 = vmatprep.mubr.f32.mxu0 0.0
        %2446 = vmatmul.mubr.f32.gmra.mrb[0].mxu0 %v2270
        %v2447 = vpop.f32.mrb[0].mxu0
        %v2448 = vadd.f32 0.0, %v2447
        %v2449 = vpop.f32.mrb[0].mxu0
        %2450 = vmatprep.mubr.f32.mxu0 0.0
        %2451 = vmatmul.mubr.f32.gmra.mrb[0].mxu0 %v2273
        %v2452 = vpop.f32.mrb[0].mxu0
        %v2453 = vadd.f32 0.0, %v2452
        %v2454 = vpop.f32.mrb[0].mxu0
        %2455 = vmatprep.mubr.f32.mxu0 0.0
        %2456 = vmatmul.mubr.f32.gmra.mrb[0].mxu0 %v2276
        %v2457 = vpop.f32.mrb[0].mxu0
        %v2458 = vadd.f32 0.0, %v2457
        %v2459 = vpop.f32.mrb[0].mxu0
        %2460 = vmatprep.mubr.f32.mxu0 0.0
        %2461 = vmatmul.mubr.f32.gmra.mrb[0].mxu0 %v2279
        %v2462 = vpop.f32.mrb[0].mxu0
        %v2463 = vadd.f32 0.0, %v2462
        %v2464 = vpop.f32.mrb[0].mxu0
        %2465 = vmatprep.mubr.f32.mxu0 0.0
        %2466 = vmatmul.mubr.f32.gmra.mrb[0].mxu0 %v2282
        %v2467 = vpop.f32.mrb[0].mxu0
        %v2468 = vadd.f32 0.0, %v2467
        %v2469 = vpop.f32.mrb[0].mxu0
        %2470 = vmatprep.mubr.f32.mxu0 0.0
        %2471 = vmatmul.mubr.f32.gmra.mrb[0].mxu0 %v2285
        %v2472 = vpop.f32.mrb[0].mxu0
        %v2473 = vadd.f32 0.0, %v2472
        %v2474 = vpop.f32.mrb[0].mxu0
        %2475 = vmatprep.mubr.f32.mxu0 0.0
        %2476 = vmatmul.mubr.f32.gmra.mrb[0].mxu0 %v2288
        %v2477 = vpop.f32.mrb[0].mxu0
        %v2478 = vadd.f32 0.0, %v2477
        %v2479 = vpop.f32.mrb[0].mxu0
        %2480 = vmatprep.mubr.f32.mxu0 0.0
        %2481 = vmatmul.mubr.f32.gmra.mrb[0].mxu0 %v2291
        %v2482 = vpop.f32.mrb[0].mxu0
        %v2483 = vadd.f32 0.0, %v2482
        %v2484 = vpop.f32.mrb[0].mxu0
        %2485 = vmatprep.mubr.f32.mxu0 0.0
        %2486 = vmatmul.mubr.f32.gmra.mrb[0].mxu0 %v2294
        %v2487 = vpop.f32.mrb[0].mxu0
        %v2488 = vadd.f32 0.0, %v2487
        %v2489 = vpop.f32.mrb[0].mxu0
        %2490 = vmatprep.mubr.f32.mxu0 0.0
        %2491 = vmatmul.mubr.f32.gmra.mrb[0].mxu0 %v2297
        %v2492 = vpop.f32.mrb[0].mxu0
        %v2493 = vadd.f32 0.0, %v2492
        %v2494 = vpop.f32.mrb[0].mxu0
        %2495 = vmatprep.mubr.f32.mxu0 0.0
        %2496 = vmatmul.mubr.f32.gmra.mrb[0].mxu0 %v2300
        %v2497 = vpop.f32.mrb[0].mxu0
        %v2498 = vadd.f32 0.0, %v2497
        %v2499 = vpop.f32.mrb[0].mxu0
        %2500 = vmatprep.mubr.f32.mxu0 0.0
        %2501 = vmatmul.mubr.f32.gmra.mrb[0].mxu0 %v2303
        %v2502 = vpop.f32.mrb[0].mxu0
        %v2503 = vadd.f32 0.0, %v2502
        %v2504 = vpop.f32.mrb[0].mxu0
        %2505 = vmatprep.mubr.f32.mxu0 0.0
        %2506 = vmatmul.mubr.f32.gmra.mrb[0].mxu0 %v2306
        %v2507 = vpop.f32.mrb[0].mxu0
        %v2508 = vadd.f32 0.0, %v2507
        %v2509 = vpop.f32.mrb[0].mxu0
        %2510 = vmatprep.mubr.f32.mxu0 0.0
        %2511 = vmatmul.mubr.f32.gmra.mrb[0].mxu0 %v2309
        %v2512 = vpop.f32.mrb[0].mxu0
        %v2513 = vadd.f32 0.0, %v2512
        %v2514 = vpop.f32.mrb[0].mxu0
        %2515 = vmatprep.mubr.f32.mxu0 0.0
        %2516 = vmatmul.mubr.f32.gmra.mrb[0].mxu0 %v2312
        %v2517 = vpop.f32.mrb[0].mxu0
        %v2518 = vadd.f32 0.0, %v2517
        %v2519 = vpop.f32.mrb[0].mxu0
        %2520 = vmatprep.mubr.f32.mxu0 0.0
        %2521 = vmatmul.mubr.f32.gmra.mrb[0].mxu0 %v2315
        %v2522 = vpop.f32.mrb[0].mxu0
        %v2523 = vadd.f32 0.0, %v2522
        %v2524 = vpop.f32.mrb[0].mxu0
        %2525 = vmatprep.mubr.f32.mxu0 0.0
        %2526 = vmatmul.mubr.f32.gmra.mrb[0].mxu0 %v2318
        %v2527 = vpop.f32.mrb[0].mxu0
        %v2528 = vadd.f32 0.0, %v2527
        %v2529 = vpop.f32.mrb[0].mxu0
        %2530 = vmatprep.mubr.f32.mxu0 0.0
        %2531 = vmatmul.mubr.f32.gmra.mrb[0].mxu0 %v2321
        %v2532 = vpop.f32.mrb[0].mxu0
        %v2533 = vadd.f32 0.0, %v2532
        %v2534 = vpop.f32.mrb[0].mxu0
        %2535 = vmatprep.mubr.f32.mxu0 0.0
        %2536 = vmatmul.mubr.f32.gmra.mrb[0].mxu0 %v2324
        %v2537 = vpop.f32.mrb[0].mxu0
        %v2538 = vadd.f32 0.0, %v2537
        %v2539 = vpop.f32.mrb[0].mxu0
        %2540 = vmatprep.mubr.f32.mxu0 0.0
        %2541 = vmatmul.mubr.f32.gmra.mrb[0].mxu0 %v2327
        %v2542 = vpop.f32.mrb[0].mxu0
        %v2543 = vadd.f32 0.0, %v2542
        %v2544 = vpop.f32.mrb[0].mxu0
        %2545 = vmatprep.mubr.f32.mxu0 0.0
        %2546 = vmatmul.mubr.f32.gmra.mrb[0].mxu0 %v2330
        %v2547 = vpop.f32.mrb[0].mxu0
        %v2548 = vadd.f32 0.0, %v2547
        %v2549 = vpop.f32.mrb[0].mxu0
        %2550 = vmatprep.mubr.f32.mxu0 0.0
        %2551 = vmatmul.mubr.f32.gmra.mrb[0].mxu0 %v2333
        %v2552 = vpop.f32.mrb[0].mxu0
        %v2553 = vadd.f32 0.0, %v2552
        %v2554 = vpop.f32.mrb[0].mxu0
        %2555 = vmatprep.mubr.f32.mxu0 0.0
        %2556 = vmatmul.mubr.f32.gmra.mrb[0].mxu0 %v2336
        %v2557 = vpop.f32.mrb[0].mxu0
        %v2558 = vadd.f32 0.0, %v2557
        %v2559 = vpop.f32.mrb[0].mxu0
        %2560 = vmatprep.mubr.f32.mxu0 0.0
        %2561 = vmatmul.mubr.f32.gmra.mrb[0].mxu0 %v2339
        %v2562 = vpop.f32.mrb[0].mxu0
        %v2563 = vadd.f32 0.0, %v2562
        %v2564 = vpop.f32.mrb[0].mxu0
        %2565 = vdwg.mxu0
        %v2566 = vadd.f32 %v2176, %v2408
        %v2567 = vadd.f32 %v2177, %v2413
        %v2568 = vadd.f32 %v2178, %v2418
        %v2569 = vadd.f32 %v2179, %v2423
        %v2570 = vadd.f32 %v2180, %v2428
        %v2571 = vadd.f32 %v2181, %v2433
        %v2572 = vadd.f32 %v2182, %v2438
        %v2573 = vadd.f32 %v2183, %v2443
        %v2574 = vadd.f32 %v2184, %v2448
        %v2575 = vadd.f32 %v2185, %v2453
        %v2576 = vadd.f32 %v2186, %v2458
        %v2577 = vadd.f32 %v2187, %v2463
        %v2578 = vadd.f32 %v2188, %v2468
        %v2579 = vadd.f32 %v2189, %v2473
        %v2580 = vadd.f32 %v2190, %v2478
        %v2581 = vadd.f32 %v2191, %v2483
        %v2582 = vadd.f32 %v2192, %v2488
        %v2583 = vadd.f32 %v2193, %v2493
        %v2584 = vadd.f32 %v2194, %v2498
        %v2585 = vadd.f32 %v2195, %v2503
        %v2586 = vadd.f32 %v2196, %v2508
        %v2587 = vadd.f32 %v2197, %v2513
        %v2588 = vadd.f32 %v2198, %v2518
        %v2589 = vadd.f32 %v2199, %v2523
        %v2590 = vadd.f32 %v2200, %v2528
        %v2591 = vadd.f32 %v2201, %v2533
        %v2592 = vadd.f32 %v2202, %v2538
        %v2593 = vadd.f32 %v2203, %v2543
        %v2594 = vadd.f32 %v2204, %v2548
        %v2595 = vadd.f32 %v2205, %v2553
        %v2596 = vadd.f32 %v2206, %v2558
        %v2597 = vadd.f32 %v2207, %v2563
        %v2598 = vld [vmem:[%s680 + $0x2] sm:$0xff]
        %v2599 = vld [vmem:[%s680 + $0xa] sm:$0xff]
        %v2600 = vld [vmem:[%s680 + $0x1a] sm:$0xff]
        %v2601 = vld [vmem:[%s680 + $0x22] sm:$0xff]
        %v2602 = vld [vmem:[%s680 + $0x32] sm:$0xff]
        %v2603 = vld [vmem:[%s680 + $0x3a] sm:$0xff]
        %v2604 = vld [vmem:[%s680 + $0x4a] sm:$0xff]
        %v2605 = vld [vmem:[%s680 + $0x52] sm:$0xff]
        %v2606 = vld [vmem:[%s680 + $0x62] sm:$0xff]
        %v2607 = vld [vmem:[%s680 + $0x6a] sm:$0xff]
        %v2608 = vld [vmem:[%s680 + $0x7a] sm:$0xff]
        %v2609 = vld [vmem:[%s680 + $0x82] sm:$0xff]
        %v2610 = vld [vmem:[%s680 + $0x92] sm:$0xff]
        %v2611 = vld [vmem:[%s680 + $0x9a] sm:$0xff]
        %v2612 = vld [vmem:[%s680 + $0xaa] sm:$0xff]
        %v2613 = vld [vmem:[%s680 + $0xb2] sm:$0xff]
        %v2614 = vld [vmem:[%s680 + $0xc2] sm:$0xff]
        %v2615 = vld [vmem:[%s680 + $0xca] sm:$0xff]
        %v2616 = vld [vmem:[%s680 + $0xda] sm:$0xff]
        %v2617 = vld [vmem:[%s680 + $0xe2] sm:$0xff]
        %v2618 = vld [vmem:[%s680 + $0xf2] sm:$0xff]
        %v2619 = vld [vmem:[%s680 + $0xfa] sm:$0xff]
        %v2620 = vld [vmem:[%s680 + $0x10a] sm:$0xff]
        %v2621 = vld [vmem:[%s680 + $0x112] sm:$0xff]
        %v2622 = vld [vmem:[%s680 + $0x122] sm:$0xff]
        %v2623 = vld [vmem:[%s680 + $0x12a] sm:$0xff]
        %v2624 = vld [vmem:[%s680 + $0x13a] sm:$0xff]
        %v2625 = vld [vmem:[%s680 + $0x142] sm:$0xff]
        %v2626 = vld [vmem:[%s680 + $0x152] sm:$0xff]
        %v2627 = vld [vmem:[%s680 + $0x15a] sm:$0xff]
        %v2628 = vld [vmem:[%s680 + $0x16a] sm:$0xff]
        %v2629 = vld [vmem:[%s680 + $0x172] sm:$0xff]
        %s2630 = scalar_lea.vmem [#allocation6], 160
        %v2631 = vld [vmem:[%s2630] sm:$0xff]
        %v2632 = vld [vmem:[%s2630 + $0x8] sm:$0xff]
        %v2633 = vld [vmem:[%s2630 + $0x10] sm:$0xff]
        %v2634 = vld [vmem:[%s2630 + $0x18] sm:$0xff]
        %v2636 = vsel %vm624, %v2598, 0
        %v2639 = vsel %vm624, %v2599, 0
        %v2642 = vsel %vm624, %v2600, 0
        %v2645 = vsel %vm624, %v2601, 0
        %v2648 = vsel %vm624, %v2602, 0
        %v2651 = vsel %vm624, %v2603, 0
        %v2654 = vsel %vm624, %v2604, 0
        %v2657 = vsel %vm624, %v2605, 0
        %v2660 = vsel %vm624, %v2606, 0
        %v2663 = vsel %vm624, %v2607, 0
        %v2666 = vsel %vm624, %v2608, 0
        %v2669 = vsel %vm624, %v2609, 0
        %v2672 = vsel %vm624, %v2610, 0
        %v2675 = vsel %vm624, %v2611, 0
        %v2678 = vsel %vm624, %v2612, 0
        %v2681 = vsel %vm624, %v2613, 0
        %v2684 = vsel %vm624, %v2614, 0
        %v2687 = vsel %vm624, %v2615, 0
        %v2690 = vsel %vm624, %v2616, 0
        %v2693 = vsel %vm624, %v2617, 0
        %v2696 = vsel %vm624, %v2618, 0
        %v2699 = vsel %vm624, %v2619, 0
        %v2702 = vsel %vm624, %v2620, 0
        %v2705 = vsel %vm624, %v2621, 0
        %v2708 = vsel %vm624, %v2622, 0
        %v2711 = vsel %vm624, %v2623, 0
        %v2714 = vsel %vm624, %v2624, 0
        %v2717 = vsel %vm624, %v2625, 0
        %v2720 = vsel %vm624, %v2626, 0
        %v2723 = vsel %vm624, %v2627, 0
        %v2726 = vsel %vm624, %v2628, 0
        %v2729 = vsel %vm624, %v2629, 0
        %2731 = vmatprep.subr.mxu0 0.0
        %2732 = vmatpush1.msra.mxu0 %v2631
        %2733 = vmatprep.subr.mxu0 0.0
        %2734 = vmatpush1.msra.mxu0 %v2632
        %2735 = vmatprep.subr.mxu0 0.0
        %2736 = vmatpush1.msra.mxu0 %v2633
        %2737 = vmatprep.subr.mxu0 0.0
        %2738 = vmatpush1.msra.mxu0 %v2634
        %2739 = vmatprep.subr.mxu0 0.0
        %2740 = vmatpush1.msra.mxu0 0.0
        %2741 = vmatprep.subr.mxu0 0.0
        %2742 = vmatpush1.msra.mxu0 0.0
        %2743 = vmatprep.subr.mxu0 0.0
        %2744 = vmatpush1.msra.mxu0 0.0
        %2745 = vmatprep.subr.mxu0 0.0
        %2746 = vmatpush1.msra.mxu0 0.0
        %2747 = vmatprep.subr.mxu0 0.0
        %2748 = vmatpush1.msra.mxu0 0.0
        %2749 = vmatprep.subr.mxu0 0.0
        %2750 = vmatpush1.msra.mxu0 0.0
        %2751 = vmatprep.subr.mxu0 0.0
        %2752 = vmatpush1.msra.mxu0 0.0
        %2753 = vmatprep.subr.mxu0 0.0
        %2754 = vmatpush1.msra.mxu0 0.0
        %2755 = vmatprep.subr.mxu0 0.0
        %2756 = vmatpush1.msra.mxu0 0.0
        %2757 = vmatprep.subr.mxu0 0.0
        %2758 = vmatpush1.msra.mxu0 0.0
        %2759 = vmatprep.subr.mxu0 0.0
        %2760 = vmatpush1.msra.mxu0 0.0
        %2761 = vmatprep.subr.mxu0 0.0
        %2762 = vmatpush1.msra.mxu0 0.0
        %2763 = vmatprep.subr.mxu0 0.0
        %2764 = vmatpush1.msra.mxu0 0.0
        %2765 = vmatprep.subr.mxu0 0.0
        %2766 = vmatpush1.msra.mxu0 0.0
        %2767 = vmatprep.subr.mxu0 0.0
        %2768 = vmatpush1.msra.mxu0 0.0
        %2769 = vmatprep.subr.mxu0 0.0
        %2770 = vmatpush1.msra.mxu0 0.0
        %2771 = vmatprep.subr.mxu0 0.0
        %2772 = vmatpush1.msra.mxu0 0.0
        %2773 = vmatprep.subr.mxu0 0.0
        %2774 = vmatpush1.msra.mxu0 0.0
        %2775 = vmatprep.subr.mxu0 0.0
        %2776 = vmatpush1.msra.mxu0 0.0
        %2777 = vmatprep.subr.mxu0 0.0
        %2778 = vmatpush1.msra.mxu0 0.0
        %2779 = vmatprep.subr.mxu0 0.0
        %2780 = vmatpush1.msra.mxu0 0.0
        %2781 = vmatprep.subr.mxu0 0.0
        %2782 = vmatpush1.msra.mxu0 0.0
        %2783 = vmatprep.subr.mxu0 0.0
        %2784 = vmatpush1.msra.mxu0 0.0
        %2785 = vmatprep.subr.mxu0 0.0
        %2786 = vmatpush1.msra.mxu0 0.0
        %2787 = vmatprep.subr.mxu0 0.0
        %2788 = vmatpush1.msra.mxu0 0.0
        %2789 = vmatprep.subr.mxu0 0.0
        %2790 = vmatpush1.msra.mxu0 0.0
        %2791 = vmatprep.subr.mxu0 0.0
        %2792 = vmatpush1.msra.mxu0 0.0
        %2793 = vmatprep.subr.mxu0 0.0
        %2794 = vmatpush1.msra.mxu0 0.0
        %2795 = vmatprep.mubr.f32.mxu0 0.0
        %2796 = vmatmul.mubr.f32.gmra.mrb[0].mxu0 %v2636
        %v2797 = vpop.f32.mrb[0].mxu0
        %v2798 = vadd.f32 0.0, %v2797
        %v2799 = vpop.f32.mrb[0].mxu0
        %2800 = vmatprep.mubr.f32.mxu0 0.0
        %2801 = vmatmul.mubr.f32.gmra.mrb[0].mxu0 %v2639
        %v2802 = vpop.f32.mrb[0].mxu0
        %v2803 = vadd.f32 0.0, %v2802
        %v2804 = vpop.f32.mrb[0].mxu0
        %2805 = vmatprep.mubr.f32.mxu0 0.0
        %2806 = vmatmul.mubr.f32.gmra.mrb[0].mxu0 %v2642
        %v2807 = vpop.f32.mrb[0].mxu0
        %v2808 = vadd.f32 0.0, %v2807
        %v2809 = vpop.f32.mrb[0].mxu0
        %2810 = vmatprep.mubr.f32.mxu0 0.0
        %2811 = vmatmul.mubr.f32.gmra.mrb[0].mxu0 %v2645
        %v2812 = vpop.f32.mrb[0].mxu0
        %v2813 = vadd.f32 0.0, %v2812
        %v2814 = vpop.f32.mrb[0].mxu0
        %2815 = vmatprep.mubr.f32.mxu0 0.0
        %2816 = vmatmul.mubr.f32.gmra.mrb[0].mxu0 %v2648
        %v2817 = vpop.f32.mrb[0].mxu0
        %v2818 = vadd.f32 0.0, %v2817
        %v2819 = vpop.f32.mrb[0].mxu0
        %2820 = vmatprep.mubr.f32.mxu0 0.0
        %2821 = vmatmul.mubr.f32.gmra.mrb[0].mxu0 %v2651
        %v2822 = vpop.f32.mrb[0].mxu0
        %v2823 = vadd.f32 0.0, %v2822
        %v2824 = vpop.f32.mrb[0].mxu0
        %2825 = vmatprep.mubr.f32.mxu0 0.0
        %2826 = vmatmul.mubr.f32.gmra.mrb[0].mxu0 %v2654
        %v2827 = vpop.f32.mrb[0].mxu0
        %v2828 = vadd.f32 0.0, %v2827
        %v2829 = vpop.f32.mrb[0].mxu0
        %2830 = vmatprep.mubr.f32.mxu0 0.0
        %2831 = vmatmul.mubr.f32.gmra.mrb[0].mxu0 %v2657
        %v2832 = vpop.f32.mrb[0].mxu0
        %v2833 = vadd.f32 0.0, %v2832
        %v2834 = vpop.f32.mrb[0].mxu0
        %2835 = vmatprep.mubr.f32.mxu0 0.0
        %2836 = vmatmul.mubr.f32.gmra.mrb[0].mxu0 %v2660
        %v2837 = vpop.f32.mrb[0].mxu0
        %v2838 = vadd.f32 0.0, %v2837
        %v2839 = vpop.f32.mrb[0].mxu0
        %2840 = vmatprep.mubr.f32.mxu0 0.0
        %2841 = vmatmul.mubr.f32.gmra.mrb[0].mxu0 %v2663
        %v2842 = vpop.f32.mrb[0].mxu0
        %v2843 = vadd.f32 0.0, %v2842
        %v2844 = vpop.f32.mrb[0].mxu0
        %2845 = vmatprep.mubr.f32.mxu0 0.0
        %2846 = vmatmul.mubr.f32.gmra.mrb[0].mxu0 %v2666
        %v2847 = vpop.f32.mrb[0].mxu0
        %v2848 = vadd.f32 0.0, %v2847
        %v2849 = vpop.f32.mrb[0].mxu0
        %2850 = vmatprep.mubr.f32.mxu0 0.0
        %2851 = vmatmul.mubr.f32.gmra.mrb[0].mxu0 %v2669
        %v2852 = vpop.f32.mrb[0].mxu0
        %v2853 = vadd.f32 0.0, %v2852
        %v2854 = vpop.f32.mrb[0].mxu0
        %2855 = vmatprep.mubr.f32.mxu0 0.0
        %2856 = vmatmul.mubr.f32.gmra.mrb[0].mxu0 %v2672
        %v2857 = vpop.f32.mrb[0].mxu0
        %v2858 = vadd.f32 0.0, %v2857
        %v2859 = vpop.f32.mrb[0].mxu0
        %2860 = vmatprep.mubr.f32.mxu0 0.0
        %2861 = vmatmul.mubr.f32.gmra.mrb[0].mxu0 %v2675
        %v2862 = vpop.f32.mrb[0].mxu0
        %v2863 = vadd.f32 0.0, %v2862
        %v2864 = vpop.f32.mrb[0].mxu0
        %2865 = vmatprep.mubr.f32.mxu0 0.0
        %2866 = vmatmul.mubr.f32.gmra.mrb[0].mxu0 %v2678
        %v2867 = vpop.f32.mrb[0].mxu0
        %v2868 = vadd.f32 0.0, %v2867
        %v2869 = vpop.f32.mrb[0].mxu0
        %2870 = vmatprep.mubr.f32.mxu0 0.0
        %2871 = vmatmul.mubr.f32.gmra.mrb[0].mxu0 %v2681
        %v2872 = vpop.f32.mrb[0].mxu0
        %v2873 = vadd.f32 0.0, %v2872
        %v2874 = vpop.f32.mrb[0].mxu0
        %2875 = vmatprep.mubr.f32.mxu0 0.0
        %2876 = vmatmul.mubr.f32.gmra.mrb[0].mxu0 %v2684
        %v2877 = vpop.f32.mrb[0].mxu0
        %v2878 = vadd.f32 0.0, %v2877
        %v2879 = vpop.f32.mrb[0].mxu0
        %2880 = vmatprep.mubr.f32.mxu0 0.0
        %2881 = vmatmul.mubr.f32.gmra.mrb[0].mxu0 %v2687
        %v2882 = vpop.f32.mrb[0].mxu0
        %v2883 = vadd.f32 0.0, %v2882
        %v2884 = vpop.f32.mrb[0].mxu0
        %2885 = vmatprep.mubr.f32.mxu0 0.0
        %2886 = vmatmul.mubr.f32.gmra.mrb[0].mxu0 %v2690
        %v2887 = vpop.f32.mrb[0].mxu0
        %v2888 = vadd.f32 0.0, %v2887
        %v2889 = vpop.f32.mrb[0].mxu0
        %2890 = vmatprep.mubr.f32.mxu0 0.0
        %2891 = vmatmul.mubr.f32.gmra.mrb[0].mxu0 %v2693
        %v2892 = vpop.f32.mrb[0].mxu0
        %v2893 = vadd.f32 0.0, %v2892
        %v2894 = vpop.f32.mrb[0].mxu0
        %2895 = vmatprep.mubr.f32.mxu0 0.0
        %2896 = vmatmul.mubr.f32.gmra.mrb[0].mxu0 %v2696
        %v2897 = vpop.f32.mrb[0].mxu0
        %v2898 = vadd.f32 0.0, %v2897
        %v2899 = vpop.f32.mrb[0].mxu0
        %2900 = vmatprep.mubr.f32.mxu0 0.0
        %2901 = vmatmul.mubr.f32.gmra.mrb[0].mxu0 %v2699
        %v2902 = vpop.f32.mrb[0].mxu0
        %v2903 = vadd.f32 0.0, %v2902
        %v2904 = vpop.f32.mrb[0].mxu0
        %2905 = vmatprep.mubr.f32.mxu0 0.0
        %2906 = vmatmul.mubr.f32.gmra.mrb[0].mxu0 %v2702
        %v2907 = vpop.f32.mrb[0].mxu0
        %v2908 = vadd.f32 0.0, %v2907
        %v2909 = vpop.f32.mrb[0].mxu0
        %2910 = vmatprep.mubr.f32.mxu0 0.0
        %2911 = vmatmul.mubr.f32.gmra.mrb[0].mxu0 %v2705
        %v2912 = vpop.f32.mrb[0].mxu0
        %v2913 = vadd.f32 0.0, %v2912
        %v2914 = vpop.f32.mrb[0].mxu0
        %2915 = vmatprep.mubr.f32.mxu0 0.0
        %2916 = vmatmul.mubr.f32.gmra.mrb[0].mxu0 %v2708
        %v2917 = vpop.f32.mrb[0].mxu0
        %v2918 = vadd.f32 0.0, %v2917
        %v2919 = vpop.f32.mrb[0].mxu0
        %2920 = vmatprep.mubr.f32.mxu0 0.0
        %2921 = vmatmul.mubr.f32.gmra.mrb[0].mxu0 %v2711
        %v2922 = vpop.f32.mrb[0].mxu0
        %v2923 = vadd.f32 0.0, %v2922
        %v2924 = vpop.f32.mrb[0].mxu0
        %2925 = vmatprep.mubr.f32.mxu0 0.0
        %2926 = vmatmul.mubr.f32.gmra.mrb[0].mxu0 %v2714
        %v2927 = vpop.f32.mrb[0].mxu0
        %v2928 = vadd.f32 0.0, %v2927
        %v2929 = vpop.f32.mrb[0].mxu0
        %2930 = vmatprep.mubr.f32.mxu0 0.0
        %2931 = vmatmul.mubr.f32.gmra.mrb[0].mxu0 %v2717
        %v2932 = vpop.f32.mrb[0].mxu0
        %v2933 = vadd.f32 0.0, %v2932
        %v2934 = vpop.f32.mrb[0].mxu0
        %2935 = vmatprep.mubr.f32.mxu0 0.0
        %2936 = vmatmul.mubr.f32.gmra.mrb[0].mxu0 %v2720
        %v2937 = vpop.f32.mrb[0].mxu0
        %v2938 = vadd.f32 0.0, %v2937
        %v2939 = vpop.f32.mrb[0].mxu0
        %2940 = vmatprep.mubr.f32.mxu0 0.0
        %2941 = vmatmul.mubr.f32.gmra.mrb[0].mxu0 %v2723
        %v2942 = vpop.f32.mrb[0].mxu0
        %v2943 = vadd.f32 0.0, %v2942
        %v2944 = vpop.f32.mrb[0].mxu0
        %2945 = vmatprep.mubr.f32.mxu0 0.0
        %2946 = vmatmul.mubr.f32.gmra.mrb[0].mxu0 %v2726
        %v2947 = vpop.f32.mrb[0].mxu0
        %v2948 = vadd.f32 0.0, %v2947
        %v2949 = vpop.f32.mrb[0].mxu0
        %2950 = vmatprep.mubr.f32.mxu0 0.0
        %2951 = vmatmul.mubr.f32.gmra.mrb[0].mxu0 %v2729
        %v2952 = vpop.f32.mrb[0].mxu0
        %v2953 = vadd.f32 0.0, %v2952
        %v2954 = vpop.f32.mrb[0].mxu0
        %2955 = vdwg.mxu0
        %v2956 = vadd.f32 %v2566, %v2798
        %v2957 = vadd.f32 %v2567, %v2803
        %v2958 = vadd.f32 %v2568, %v2808
        %v2959 = vadd.f32 %v2569, %v2813
        %v2960 = vadd.f32 %v2570, %v2818
        %v2961 = vadd.f32 %v2571, %v2823
        %v2962 = vadd.f32 %v2572, %v2828
        %v2963 = vadd.f32 %v2573, %v2833
        %v2964 = vadd.f32 %v2574, %v2838
        %v2965 = vadd.f32 %v2575, %v2843
        %v2966 = vadd.f32 %v2576, %v2848
        %v2967 = vadd.f32 %v2577, %v2853
        %v2968 = vadd.f32 %v2578, %v2858
        %v2969 = vadd.f32 %v2579, %v2863
        %v2970 = vadd.f32 %v2580, %v2868
        %v2971 = vadd.f32 %v2581, %v2873
        %v2972 = vadd.f32 %v2582, %v2878
        %v2973 = vadd.f32 %v2583, %v2883
        %v2974 = vadd.f32 %v2584, %v2888
        %v2975 = vadd.f32 %v2585, %v2893
        %v2976 = vadd.f32 %v2586, %v2898
        %v2977 = vadd.f32 %v2587, %v2903
        %v2978 = vadd.f32 %v2588, %v2908
        %v2979 = vadd.f32 %v2589, %v2913
        %v2980 = vadd.f32 %v2590, %v2918
        %v2981 = vadd.f32 %v2591, %v2923
        %v2982 = vadd.f32 %v2592, %v2928
        %v2983 = vadd.f32 %v2593, %v2933
        %v2984 = vadd.f32 %v2594, %v2938
        %v2985 = vadd.f32 %v2595, %v2943
        %v2986 = vadd.f32 %v2596, %v2948
        %v2987 = vadd.f32 %v2597, %v2953
        %s2988 = scalar_lea.vmem [#allocation2], 48
        %v2989 = vld [vmem:[%s2988] sm:$0xff]
        %v2990 = vld [vmem:[%s2988 + $0x8] sm:$0xff]
        %v2991 = vld [vmem:[%s2988 + $0x18] sm:$0xff]
        %v2992 = vld [vmem:[%s2988 + $0x20] sm:$0xff]
        %v2993 = vld [vmem:[%s2988 + $0x30] sm:$0xff]
        %v2994 = vld [vmem:[%s2988 + $0x38] sm:$0xff]
        %v2995 = vld [vmem:[%s2988 + $0x48] sm:$0xff]
        %v2996 = vld [vmem:[%s2988 + $0x50] sm:$0xff]
        %v2997 = vld [vmem:[%s2988 + $0x60] sm:$0xff]
        %v2998 = vld [vmem:[%s2988 + $0x68] sm:$0xff]
        %v2999 = vld [vmem:[%s2988 + $0x78] sm:$0xff]
        %v3000 = vld [vmem:[%s2988 + $0x80] sm:$0xff]
        %v3001 = vld [vmem:[%s2988 + $0x90] sm:$0xff]
        %v3002 = vld [vmem:[%s2988 + $0x98] sm:$0xff]
        %v3003 = vld [vmem:[%s2988 + $0xa8] sm:$0xff]
        %v3004 = vld [vmem:[%s2988 + $0xb0] sm:$0xff]
        %v3005 = vld [vmem:[%s2988 + $0xc0] sm:$0xff]
        %v3006 = vld [vmem:[%s2988 + $0xc8] sm:$0xff]
        %v3007 = vld [vmem:[%s2988 + $0xd8] sm:$0xff]
        %v3008 = vld [vmem:[%s2988 + $0xe0] sm:$0xff]
        %v3009 = vld [vmem:[%s2988 + $0xf0] sm:$0xff]
        %v3010 = vld [vmem:[%s2988 + $0xf8] sm:$0xff]
        %v3011 = vld [vmem:[%s2988 + $0x108] sm:$0xff]
        %v3012 = vld [vmem:[%s2988 + $0x110] sm:$0xff]
        %v3013 = vld [vmem:[%s2988 + $0x120] sm:$0xff]
        %v3014 = vld [vmem:[%s2988 + $0x128] sm:$0xff]
        %v3015 = vld [vmem:[%s2988 + $0x138] sm:$0xff]
        %v3016 = vld [vmem:[%s2988 + $0x140] sm:$0xff]
        %v3017 = vld [vmem:[%s2988 + $0x150] sm:$0xff]
        %v3018 = vld [vmem:[%s2988 + $0x158] sm:$0xff]
        %v3019 = vld [vmem:[%s2988 + $0x168] sm:$0xff]
        %v3020 = vld [vmem:[%s2988 + $0x170] sm:$0xff]
        %s3021 = scalar_lea.vmem [#allocation6], 192
        %v3022 = vld [vmem:[%s3021] sm:$0xff]
        %v3023 = vld [vmem:[%s3021 + $0x8] sm:$0xff]
        %v3024 = vld [vmem:[%s3021 + $0x10] sm:$0xff]
        %v3025 = vld [vmem:[%s3021 + $0x18] sm:$0xff]
        %v3027 = vsel %vm624, %v2989, 0
        %v3030 = vsel %vm624, %v2990, 0
        %v3033 = vsel %vm624, %v2991, 0
        %v3036 = vsel %vm624, %v2992, 0
        %v3039 = vsel %vm624, %v2993, 0
        %v3042 = vsel %vm624, %v2994, 0
        %v3045 = vsel %vm624, %v2995, 0
        %v3048 = vsel %vm624, %v2996, 0
        %v3051 = vsel %vm624, %v2997, 0
        %v3054 = vsel %vm624, %v2998, 0
        %v3057 = vsel %vm624, %v2999, 0
        %v3060 = vsel %vm624, %v3000, 0
        %v3063 = vsel %vm624, %v3001, 0
        %v3066 = vsel %vm624, %v3002, 0
        %v3069 = vsel %vm624, %v3003, 0
        %v3072 = vsel %vm624, %v3004, 0
        %v3075 = vsel %vm624, %v3005, 0
        %v3078 = vsel %vm624, %v3006, 0
        %v3081 = vsel %vm624, %v3007, 0
        %v3084 = vsel %vm624, %v3008, 0
        %v3087 = vsel %vm624, %v3009, 0
        %v3090 = vsel %vm624, %v3010, 0
        %v3093 = vsel %vm624, %v3011, 0
        %v3096 = vsel %vm624, %v3012, 0
        %v3099 = vsel %vm624, %v3013, 0
        %v3102 = vsel %vm624, %v3014, 0
        %v3105 = vsel %vm624, %v3015, 0
        %v3108 = vsel %vm624, %v3016, 0
        %v3111 = vsel %vm624, %v3017, 0
        %v3114 = vsel %vm624, %v3018, 0
        %v3117 = vsel %vm624, %v3019, 0
        %v3120 = vsel %vm624, %v3020, 0
        %3122 = vmatprep.subr.mxu0 0.0
        %3123 = vmatpush1.msra.mxu0 %v3022
        %3124 = vmatprep.subr.mxu0 0.0
        %3125 = vmatpush1.msra.mxu0 %v3023
        %3126 = vmatprep.subr.mxu0 0.0
        %3127 = vmatpush1.msra.mxu0 %v3024
        %3128 = vmatprep.subr.mxu0 0.0
        %3129 = vmatpush1.msra.mxu0 %v3025
        %3130 = vmatprep.subr.mxu0 0.0
        %3131 = vmatpush1.msra.mxu0 0.0
        %3132 = vmatprep.subr.mxu0 0.0
        %3133 = vmatpush1.msra.mxu0 0.0
        %3134 = vmatprep.subr.mxu0 0.0
        %3135 = vmatpush1.msra.mxu0 0.0
        %3136 = vmatprep.subr.mxu0 0.0
        %3137 = vmatpush1.msra.mxu0 0.0
        %3138 = vmatprep.subr.mxu0 0.0
        %3139 = vmatpush1.msra.mxu0 0.0
        %3140 = vmatprep.subr.mxu0 0.0
        %3141 = vmatpush1.msra.mxu0 0.0
        %3142 = vmatprep.subr.mxu0 0.0
        %3143 = vmatpush1.msra.mxu0 0.0
        %3144 = vmatprep.subr.mxu0 0.0
        %3145 = vmatpush1.msra.mxu0 0.0
        %3146 = vmatprep.subr.mxu0 0.0
        %3147 = vmatpush1.msra.mxu0 0.0
        %3148 = vmatprep.subr.mxu0 0.0
        %3149 = vmatpush1.msra.mxu0 0.0
        %3150 = vmatprep.subr.mxu0 0.0
        %3151 = vmatpush1.msra.mxu0 0.0
        %3152 = vmatprep.subr.mxu0 0.0
        %3153 = vmatpush1.msra.mxu0 0.0
        %3154 = vmatprep.subr.mxu0 0.0
        %3155 = vmatpush1.msra.mxu0 0.0
        %3156 = vmatprep.subr.mxu0 0.0
        %3157 = vmatpush1.msra.mxu0 0.0
        %3158 = vmatprep.subr.mxu0 0.0
        %3159 = vmatpush1.msra.mxu0 0.0
        %3160 = vmatprep.subr.mxu0 0.0
        %3161 = vmatpush1.msra.mxu0 0.0
        %3162 = vmatprep.subr.mxu0 0.0
        %3163 = vmatpush1.msra.mxu0 0.0
        %3164 = vmatprep.subr.mxu0 0.0
        %3165 = vmatpush1.msra.mxu0 0.0
        %3166 = vmatprep.subr.mxu0 0.0
        %3167 = vmatpush1.msra.mxu0 0.0
        %3168 = vmatprep.subr.mxu0 0.0
        %3169 = vmatpush1.msra.mxu0 0.0
        %3170 = vmatprep.subr.mxu0 0.0
        %3171 = vmatpush1.msra.mxu0 0.0
        %3172 = vmatprep.subr.mxu0 0.0
        %3173 = vmatpush1.msra.mxu0 0.0
        %3174 = vmatprep.subr.mxu0 0.0
        %3175 = vmatpush1.msra.mxu0 0.0
        %3176 = vmatprep.subr.mxu0 0.0
        %3177 = vmatpush1.msra.mxu0 0.0
        %3178 = vmatprep.subr.mxu0 0.0
        %3179 = vmatpush1.msra.mxu0 0.0
        %3180 = vmatprep.subr.mxu0 0.0
        %3181 = vmatpush1.msra.mxu0 0.0
        %3182 = vmatprep.subr.mxu0 0.0
        %3183 = vmatpush1.msra.mxu0 0.0
        %3184 = vmatprep.subr.mxu0 0.0
        %3185 = vmatpush1.msra.mxu0 0.0
        %3186 = vmatprep.mubr.f32.mxu0 0.0
        %3187 = vmatmul.mubr.f32.gmra.mrb[0].mxu0 %v3027
        %v3188 = vpop.f32.mrb[0].mxu0
        %v3189 = vadd.f32 0.0, %v3188
        %v3190 = vpop.f32.mrb[0].mxu0
        %3191 = vmatprep.mubr.f32.mxu0 0.0
        %3192 = vmatmul.mubr.f32.gmra.mrb[0].mxu0 %v3030
        %v3193 = vpop.f32.mrb[0].mxu0
        %v3194 = vadd.f32 0.0, %v3193
        %v3195 = vpop.f32.mrb[0].mxu0
        %3196 = vmatprep.mubr.f32.mxu0 0.0
        %3197 = vmatmul.mubr.f32.gmra.mrb[0].mxu0 %v3033
        %v3198 = vpop.f32.mrb[0].mxu0
        %v3199 = vadd.f32 0.0, %v3198
        %v3200 = vpop.f32.mrb[0].mxu0
        %3201 = vmatprep.mubr.f32.mxu0 0.0
        %3202 = vmatmul.mubr.f32.gmra.mrb[0].mxu0 %v3036
        %v3203 = vpop.f32.mrb[0].mxu0
        %v3204 = vadd.f32 0.0, %v3203
        %v3205 = vpop.f32.mrb[0].mxu0
        %3206 = vmatprep.mubr.f32.mxu0 0.0
        %3207 = vmatmul.mubr.f32.gmra.mrb[0].mxu0 %v3039
        %v3208 = vpop.f32.mrb[0].mxu0
        %v3209 = vadd.f32 0.0, %v3208
        %v3210 = vpop.f32.mrb[0].mxu0
        %3211 = vmatprep.mubr.f32.mxu0 0.0
        %3212 = vmatmul.mubr.f32.gmra.mrb[0].mxu0 %v3042
        %v3213 = vpop.f32.mrb[0].mxu0
        %v3214 = vadd.f32 0.0, %v3213
        %v3215 = vpop.f32.mrb[0].mxu0
        %3216 = vmatprep.mubr.f32.mxu0 0.0
        %3217 = vmatmul.mubr.f32.gmra.mrb[0].mxu0 %v3045
        %v3218 = vpop.f32.mrb[0].mxu0
        %v3219 = vadd.f32 0.0, %v3218
        %v3220 = vpop.f32.mrb[0].mxu0
        %3221 = vmatprep.mubr.f32.mxu0 0.0
        %3222 = vmatmul.mubr.f32.gmra.mrb[0].mxu0 %v3048
        %v3223 = vpop.f32.mrb[0].mxu0
        %v3224 = vadd.f32 0.0, %v3223
        %v3225 = vpop.f32.mrb[0].mxu0
        %3226 = vmatprep.mubr.f32.mxu0 0.0
        %3227 = vmatmul.mubr.f32.gmra.mrb[0].mxu0 %v3051
        %v3228 = vpop.f32.mrb[0].mxu0
        %v3229 = vadd.f32 0.0, %v3228
        %v3230 = vpop.f32.mrb[0].mxu0
        %3231 = vmatprep.mubr.f32.mxu0 0.0
        %3232 = vmatmul.mubr.f32.gmra.mrb[0].mxu0 %v3054
        %v3233 = vpop.f32.mrb[0].mxu0
        %v3234 = vadd.f32 0.0, %v3233
        %v3235 = vpop.f32.mrb[0].mxu0
        %3236 = vmatprep.mubr.f32.mxu0 0.0
        %3237 = vmatmul.mubr.f32.gmra.mrb[0].mxu0 %v3057
        %v3238 = vpop.f32.mrb[0].mxu0
        %v3239 = vadd.f32 0.0, %v3238
        %v3240 = vpop.f32.mrb[0].mxu0
        %3241 = vmatprep.mubr.f32.mxu0 0.0
        %3242 = vmatmul.mubr.f32.gmra.mrb[0].mxu0 %v3060
        %v3243 = vpop.f32.mrb[0].mxu0
        %v3244 = vadd.f32 0.0, %v3243
        %v3245 = vpop.f32.mrb[0].mxu0
        %3246 = vmatprep.mubr.f32.mxu0 0.0
        %3247 = vmatmul.mubr.f32.gmra.mrb[0].mxu0 %v3063
        %v3248 = vpop.f32.mrb[0].mxu0
        %v3249 = vadd.f32 0.0, %v3248
        %v3250 = vpop.f32.mrb[0].mxu0
        %3251 = vmatprep.mubr.f32.mxu0 0.0
        %3252 = vmatmul.mubr.f32.gmra.mrb[0].mxu0 %v3066
        %v3253 = vpop.f32.mrb[0].mxu0
        %v3254 = vadd.f32 0.0, %v3253
        %v3255 = vpop.f32.mrb[0].mxu0
        %3256 = vmatprep.mubr.f32.mxu0 0.0
        %3257 = vmatmul.mubr.f32.gmra.mrb[0].mxu0 %v3069
        %v3258 = vpop.f32.mrb[0].mxu0
        %v3259 = vadd.f32 0.0, %v3258
        %v3260 = vpop.f32.mrb[0].mxu0
        %3261 = vmatprep.mubr.f32.mxu0 0.0
        %3262 = vmatmul.mubr.f32.gmra.mrb[0].mxu0 %v3072
        %v3263 = vpop.f32.mrb[0].mxu0
        %v3264 = vadd.f32 0.0, %v3263
        %v3265 = vpop.f32.mrb[0].mxu0
        %3266 = vmatprep.mubr.f32.mxu0 0.0
        %3267 = vmatmul.mubr.f32.gmra.mrb[0].mxu0 %v3075
        %v3268 = vpop.f32.mrb[0].mxu0
        %v3269 = vadd.f32 0.0, %v3268
        %v3270 = vpop.f32.mrb[0].mxu0
        %3271 = vmatprep.mubr.f32.mxu0 0.0
        %3272 = vmatmul.mubr.f32.gmra.mrb[0].mxu0 %v3078
        %v3273 = vpop.f32.mrb[0].mxu0
        %v3274 = vadd.f32 0.0, %v3273
        %v3275 = vpop.f32.mrb[0].mxu0
        %3276 = vmatprep.mubr.f32.mxu0 0.0
        %3277 = vmatmul.mubr.f32.gmra.mrb[0].mxu0 %v3081
        %v3278 = vpop.f32.mrb[0].mxu0
        %v3279 = vadd.f32 0.0, %v3278
        %v3280 = vpop.f32.mrb[0].mxu0
        %3281 = vmatprep.mubr.f32.mxu0 0.0
        %3282 = vmatmul.mubr.f32.gmra.mrb[0].mxu0 %v3084
        %v3283 = vpop.f32.mrb[0].mxu0
        %v3284 = vadd.f32 0.0, %v3283
        %v3285 = vpop.f32.mrb[0].mxu0
        %3286 = vmatprep.mubr.f32.mxu0 0.0
        %3287 = vmatmul.mubr.f32.gmra.mrb[0].mxu0 %v3087
        %v3288 = vpop.f32.mrb[0].mxu0
        %v3289 = vadd.f32 0.0, %v3288
        %v3290 = vpop.f32.mrb[0].mxu0
        %3291 = vmatprep.mubr.f32.mxu0 0.0
        %3292 = vmatmul.mubr.f32.gmra.mrb[0].mxu0 %v3090
        %v3293 = vpop.f32.mrb[0].mxu0
        %v3294 = vadd.f32 0.0, %v3293
        %v3295 = vpop.f32.mrb[0].mxu0
        %3296 = vmatprep.mubr.f32.mxu0 0.0
        %3297 = vmatmul.mubr.f32.gmra.mrb[0].mxu0 %v3093
        %v3298 = vpop.f32.mrb[0].mxu0
        %v3299 = vadd.f32 0.0, %v3298
        %v3300 = vpop.f32.mrb[0].mxu0
        %3301 = vmatprep.mubr.f32.mxu0 0.0
        %3302 = vmatmul.mubr.f32.gmra.mrb[0].mxu0 %v3096
        %v3303 = vpop.f32.mrb[0].mxu0
        %v3304 = vadd.f32 0.0, %v3303
        %v3305 = vpop.f32.mrb[0].mxu0
        %3306 = vmatprep.mubr.f32.mxu0 0.0
        %3307 = vmatmul.mubr.f32.gmra.mrb[0].mxu0 %v3099
        %v3308 = vpop.f32.mrb[0].mxu0
        %v3309 = vadd.f32 0.0, %v3308
        %v3310 = vpop.f32.mrb[0].mxu0
        %3311 = vmatprep.mubr.f32.mxu0 0.0
        %3312 = vmatmul.mubr.f32.gmra.mrb[0].mxu0 %v3102
        %v3313 = vpop.f32.mrb[0].mxu0
        %v3314 = vadd.f32 0.0, %v3313
        %v3315 = vpop.f32.mrb[0].mxu0
        %3316 = vmatprep.mubr.f32.mxu0 0.0
        %3317 = vmatmul.mubr.f32.gmra.mrb[0].mxu0 %v3105
        %v3318 = vpop.f32.mrb[0].mxu0
        %v3319 = vadd.f32 0.0, %v3318
        %v3320 = vpop.f32.mrb[0].mxu0
        %3321 = vmatprep.mubr.f32.mxu0 0.0
        %3322 = vmatmul.mubr.f32.gmra.mrb[0].mxu0 %v3108
        %v3323 = vpop.f32.mrb[0].mxu0
        %v3324 = vadd.f32 0.0, %v3323
        %v3325 = vpop.f32.mrb[0].mxu0
        %3326 = vmatprep.mubr.f32.mxu0 0.0
        %3327 = vmatmul.mubr.f32.gmra.mrb[0].mxu0 %v3111
        %v3328 = vpop.f32.mrb[0].mxu0
        %v3329 = vadd.f32 0.0, %v3328
        %v3330 = vpop.f32.mrb[0].mxu0
        %3331 = vmatprep.mubr.f32.mxu0 0.0
        %3332 = vmatmul.mubr.f32.gmra.mrb[0].mxu0 %v3114
        %v3333 = vpop.f32.mrb[0].mxu0
        %v3334 = vadd.f32 0.0, %v3333
        %v3335 = vpop.f32.mrb[0].mxu0
        %3336 = vmatprep.mubr.f32.mxu0 0.0
        %3337 = vmatmul.mubr.f32.gmra.mrb[0].mxu0 %v3117
        %v3338 = vpop.f32.mrb[0].mxu0
        %v3339 = vadd.f32 0.0, %v3338
        %v3340 = vpop.f32.mrb[0].mxu0
        %3341 = vmatprep.mubr.f32.mxu0 0.0
        %3342 = vmatmul.mubr.f32.gmra.mrb[0].mxu0 %v3120
        %v3343 = vpop.f32.mrb[0].mxu0
        %v3344 = vadd.f32 0.0, %v3343
        %v3345 = vpop.f32.mrb[0].mxu0
        %3346 = vdwg.mxu0
        %v3347 = vadd.f32 %v2956, %v3189
        %v3348 = vadd.f32 %v2957, %v3194
        %v3349 = vadd.f32 %v2958, %v3199
        %v3350 = vadd.f32 %v2959, %v3204
        %v3351 = vadd.f32 %v2960, %v3209
        %v3352 = vadd.f32 %v2961, %v3214
        %v3353 = vadd.f32 %v2962, %v3219
        %v3354 = vadd.f32 %v2963, %v3224
        %v3355 = vadd.f32 %v2964, %v3229
        %v3356 = vadd.f32 %v2965, %v3234
        %v3357 = vadd.f32 %v2966, %v3239
        %v3358 = vadd.f32 %v2967, %v3244
        %v3359 = vadd.f32 %v2968, %v3249
        %v3360 = vadd.f32 %v2969, %v3254
        %v3361 = vadd.f32 %v2970, %v3259
        %v3362 = vadd.f32 %v2971, %v3264
        %v3363 = vadd.f32 %v2972, %v3269
        %v3364 = vadd.f32 %v2973, %v3274
        %v3365 = vadd.f32 %v2974, %v3279
        %v3366 = vadd.f32 %v2975, %v3284
        %v3367 = vadd.f32 %v2976, %v3289
        %v3368 = vadd.f32 %v2977, %v3294
        %v3369 = vadd.f32 %v2978, %v3299
        %v3370 = vadd.f32 %v2979, %v3304
        %v3371 = vadd.f32 %v2980, %v3309
        %v3372 = vadd.f32 %v2981, %v3314
        %v3373 = vadd.f32 %v2982, %v3319
        %v3374 = vadd.f32 %v2983, %v3324
        %v3375 = vadd.f32 %v2984, %v3329
        %v3376 = vadd.f32 %v2985, %v3334
        %v3377 = vadd.f32 %v2986, %v3339
        %v3378 = vadd.f32 %v2987, %v3344
        %v3379 = vld [vmem:[%s2988 + $0x1] sm:$0xff]
        %v3380 = vld [vmem:[%s2988 + $0x9] sm:$0xff]
        %v3381 = vld [vmem:[%s2988 + $0x19] sm:$0xff]
        %v3382 = vld [vmem:[%s2988 + $0x21] sm:$0xff]
        %v3383 = vld [vmem:[%s2988 + $0x31] sm:$0xff]
        %v3384 = vld [vmem:[%s2988 + $0x39] sm:$0xff]
        %v3385 = vld [vmem:[%s2988 + $0x49] sm:$0xff]
        %v3386 = vld [vmem:[%s2988 + $0x51] sm:$0xff]
        %v3387 = vld [vmem:[%s2988 + $0x61] sm:$0xff]
        %v3388 = vld [vmem:[%s2988 + $0x69] sm:$0xff]
        %v3389 = vld [vmem:[%s2988 + $0x79] sm:$0xff]
        %v3390 = vld [vmem:[%s2988 + $0x81] sm:$0xff]
        %v3391 = vld [vmem:[%s2988 + $0x91] sm:$0xff]
        %v3392 = vld [vmem:[%s2988 + $0x99] sm:$0xff]
        %v3393 = vld [vmem:[%s2988 + $0xa9] sm:$0xff]
        %v3394 = vld [vmem:[%s2988 + $0xb1] sm:$0xff]
        %v3395 = vld [vmem:[%s2988 + $0xc1] sm:$0xff]
        %v3396 = vld [vmem:[%s2988 + $0xc9] sm:$0xff]
        %v3397 = vld [vmem:[%s2988 + $0xd9] sm:$0xff]
        %v3398 = vld [vmem:[%s2988 + $0xe1] sm:$0xff]
        %v3399 = vld [vmem:[%s2988 + $0xf1] sm:$0xff]
        %v3400 = vld [vmem:[%s2988 + $0xf9] sm:$0xff]
        %v3401 = vld [vmem:[%s2988 + $0x109] sm:$0xff]
        %v3402 = vld [vmem:[%s2988 + $0x111] sm:$0xff]
        %v3403 = vld [vmem:[%s2988 + $0x121] sm:$0xff]
        %v3404 = vld [vmem:[%s2988 + $0x129] sm:$0xff]
        %v3405 = vld [vmem:[%s2988 + $0x139] sm:$0xff]
        %v3406 = vld [vmem:[%s2988 + $0x141] sm:$0xff]
        %v3407 = vld [vmem:[%s2988 + $0x151] sm:$0xff]
        %v3408 = vld [vmem:[%s2988 + $0x159] sm:$0xff]
        %v3409 = vld [vmem:[%s2988 + $0x169] sm:$0xff]
        %v3410 = vld [vmem:[%s2988 + $0x171] sm:$0xff]
        %s3411 = scalar_lea.vmem [#allocation6], 224
        %v3412 = vld [vmem:[%s3411] sm:$0xff]
        %v3413 = vld [vmem:[%s3411 + $0x8] sm:$0xff]
        %v3414 = vld [vmem:[%s3411 + $0x10] sm:$0xff]
        %v3415 = vld [vmem:[%s3411 + $0x18] sm:$0xff]
        %v3417 = vsel %vm624, %v3379, 0
        %v3420 = vsel %vm624, %v3380, 0
        %v3423 = vsel %vm624, %v3381, 0
        %v3426 = vsel %vm624, %v3382, 0
        %v3429 = vsel %vm624, %v3383, 0
        %v3432 = vsel %vm624, %v3384, 0
        %v3435 = vsel %vm624, %v3385, 0
        %v3438 = vsel %vm624, %v3386, 0
        %v3441 = vsel %vm624, %v3387, 0
        %v3444 = vsel %vm624, %v3388, 0
        %v3447 = vsel %vm624, %v3389, 0
        %v3450 = vsel %vm624, %v3390, 0
        %v3453 = vsel %vm624, %v3391, 0
        %v3456 = vsel %vm624, %v3392, 0
        %v3459 = vsel %vm624, %v3393, 0
        %v3462 = vsel %vm624, %v3394, 0
        %v3465 = vsel %vm624, %v3395, 0
        %v3468 = vsel %vm624, %v3396, 0
        %v3471 = vsel %vm624, %v3397, 0
        %v3474 = vsel %vm624, %v3398, 0
        %v3477 = vsel %vm624, %v3399, 0
        %v3480 = vsel %vm624, %v3400, 0
        %v3483 = vsel %vm624, %v3401, 0
        %v3486 = vsel %vm624, %v3402, 0
        %v3489 = vsel %vm624, %v3403, 0
        %v3492 = vsel %vm624, %v3404, 0
        %v3495 = vsel %vm624, %v3405, 0
        %v3498 = vsel %vm624, %v3406, 0
        %v3501 = vsel %vm624, %v3407, 0
        %v3504 = vsel %vm624, %v3408, 0
        %v3507 = vsel %vm624, %v3409, 0
        %v3510 = vsel %vm624, %v3410, 0
        %3512 = vmatprep.subr.mxu0 0.0
        %3513 = vmatpush1.msra.mxu0 %v3412
        %3514 = vmatprep.subr.mxu0 0.0
        %3515 = vmatpush1.msra.mxu0 %v3413
        %3516 = vmatprep.subr.mxu0 0.0
        %3517 = vmatpush1.msra.mxu0 %v3414
        %3518 = vmatprep.subr.mxu0 0.0
        %3519 = vmatpush1.msra.mxu0 %v3415
        %3520 = vmatprep.subr.mxu0 0.0
        %3521 = vmatpush1.msra.mxu0 0.0
        %3522 = vmatprep.subr.mxu0 0.0
        %3523 = vmatpush1.msra.mxu0 0.0
        %3524 = vmatprep.subr.mxu0 0.0
        %3525 = vmatpush1.msra.mxu0 0.0
        %3526 = vmatprep.subr.mxu0 0.0
        %3527 = vmatpush1.msra.mxu0 0.0
        %3528 = vmatprep.subr.mxu0 0.0
        %3529 = vmatpush1.msra.mxu0 0.0
        %3530 = vmatprep.subr.mxu0 0.0
        %3531 = vmatpush1.msra.mxu0 0.0
        %3532 = vmatprep.subr.mxu0 0.0
        %3533 = vmatpush1.msra.mxu0 0.0
        %3534 = vmatprep.subr.mxu0 0.0
        %3535 = vmatpush1.msra.mxu0 0.0
        %3536 = vmatprep.subr.mxu0 0.0
        %3537 = vmatpush1.msra.mxu0 0.0
        %3538 = vmatprep.subr.mxu0 0.0
        %3539 = vmatpush1.msra.mxu0 0.0
        %3540 = vmatprep.subr.mxu0 0.0
        %3541 = vmatpush1.msra.mxu0 0.0
        %3542 = vmatprep.subr.mxu0 0.0
        %3543 = vmatpush1.msra.mxu0 0.0
        %3544 = vmatprep.subr.mxu0 0.0
        %3545 = vmatpush1.msra.mxu0 0.0
        %3546 = vmatprep.subr.mxu0 0.0
        %3547 = vmatpush1.msra.mxu0 0.0
        %3548 = vmatprep.subr.mxu0 0.0
        %3549 = vmatpush1.msra.mxu0 0.0
        %3550 = vmatprep.subr.mxu0 0.0
        %3551 = vmatpush1.msra.mxu0 0.0
        %3552 = vmatprep.subr.mxu0 0.0
        %3553 = vmatpush1.msra.mxu0 0.0
        %3554 = vmatprep.subr.mxu0 0.0
        %3555 = vmatpush1.msra.mxu0 0.0
        %3556 = vmatprep.subr.mxu0 0.0
        %3557 = vmatpush1.msra.mxu0 0.0
        %3558 = vmatprep.subr.mxu0 0.0
        %3559 = vmatpush1.msra.mxu0 0.0
        %3560 = vmatprep.subr.mxu0 0.0
        %3561 = vmatpush1.msra.mxu0 0.0
        %3562 = vmatprep.subr.mxu0 0.0
        %3563 = vmatpush1.msra.mxu0 0.0
        %3564 = vmatprep.subr.mxu0 0.0
        %3565 = vmatpush1.msra.mxu0 0.0
        %3566 = vmatprep.subr.mxu0 0.0
        %3567 = vmatpush1.msra.mxu0 0.0
        %3568 = vmatprep.subr.mxu0 0.0
        %3569 = vmatpush1.msra.mxu0 0.0
        %3570 = vmatprep.subr.mxu0 0.0
        %3571 = vmatpush1.msra.mxu0 0.0
        %3572 = vmatprep.subr.mxu0 0.0
        %3573 = vmatpush1.msra.mxu0 0.0
        %3574 = vmatprep.subr.mxu0 0.0
        %3575 = vmatpush1.msra.mxu0 0.0
        %3576 = vmatprep.mubr.f32.mxu0 0.0
        %3577 = vmatmul.mubr.f32.gmra.mrb[0].mxu0 %v3417
        %v3578 = vpop.f32.mrb[0].mxu0
        %v3579 = vadd.f32 0.0, %v3578
        %v3580 = vpop.f32.mrb[0].mxu0
        %3581 = vmatprep.mubr.f32.mxu0 0.0
        %3582 = vmatmul.mubr.f32.gmra.mrb[0].mxu0 %v3420
        %v3583 = vpop.f32.mrb[0].mxu0
        %v3584 = vadd.f32 0.0, %v3583
        %v3585 = vpop.f32.mrb[0].mxu0
        %3586 = vmatprep.mubr.f32.mxu0 0.0
        %3587 = vmatmul.mubr.f32.gmra.mrb[0].mxu0 %v3423
        %v3588 = vpop.f32.mrb[0].mxu0
        %v3589 = vadd.f32 0.0, %v3588
        %v3590 = vpop.f32.mrb[0].mxu0
        %3591 = vmatprep.mubr.f32.mxu0 0.0
        %3592 = vmatmul.mubr.f32.gmra.mrb[0].mxu0 %v3426
        %v3593 = vpop.f32.mrb[0].mxu0
        %v3594 = vadd.f32 0.0, %v3593
        %v3595 = vpop.f32.mrb[0].mxu0
        %3596 = vmatprep.mubr.f32.mxu0 0.0
        %3597 = vmatmul.mubr.f32.gmra.mrb[0].mxu0 %v3429
        %v3598 = vpop.f32.mrb[0].mxu0
        %v3599 = vadd.f32 0.0, %v3598
        %v3600 = vpop.f32.mrb[0].mxu0
        %3601 = vmatprep.mubr.f32.mxu0 0.0
        %3602 = vmatmul.mubr.f32.gmra.mrb[0].mxu0 %v3432
        %v3603 = vpop.f32.mrb[0].mxu0
        %v3604 = vadd.f32 0.0, %v3603
        %v3605 = vpop.f32.mrb[0].mxu0
        %3606 = vmatprep.mubr.f32.mxu0 0.0
        %3607 = vmatmul.mubr.f32.gmra.mrb[0].mxu0 %v3435
        %v3608 = vpop.f32.mrb[0].mxu0
        %v3609 = vadd.f32 0.0, %v3608
        %v3610 = vpop.f32.mrb[0].mxu0
        %3611 = vmatprep.mubr.f32.mxu0 0.0
        %3612 = vmatmul.mubr.f32.gmra.mrb[0].mxu0 %v3438
        %v3613 = vpop.f32.mrb[0].mxu0
        %v3614 = vadd.f32 0.0, %v3613
        %v3615 = vpop.f32.mrb[0].mxu0
        %3616 = vmatprep.mubr.f32.mxu0 0.0
        %3617 = vmatmul.mubr.f32.gmra.mrb[0].mxu0 %v3441
        %v3618 = vpop.f32.mrb[0].mxu0
        %v3619 = vadd.f32 0.0, %v3618
        %v3620 = vpop.f32.mrb[0].mxu0
        %3621 = vmatprep.mubr.f32.mxu0 0.0
        %3622 = vmatmul.mubr.f32.gmra.mrb[0].mxu0 %v3444
        %v3623 = vpop.f32.mrb[0].mxu0
        %v3624 = vadd.f32 0.0, %v3623
        %v3625 = vpop.f32.mrb[0].mxu0
        %3626 = vmatprep.mubr.f32.mxu0 0.0
        %3627 = vmatmul.mubr.f32.gmra.mrb[0].mxu0 %v3447
        %v3628 = vpop.f32.mrb[0].mxu0
        %v3629 = vadd.f32 0.0, %v3628
        %v3630 = vpop.f32.mrb[0].mxu0
        %3631 = vmatprep.mubr.f32.mxu0 0.0
        %3632 = vmatmul.mubr.f32.gmra.mrb[0].mxu0 %v3450
        %v3633 = vpop.f32.mrb[0].mxu0
        %v3634 = vadd.f32 0.0, %v3633
        %v3635 = vpop.f32.mrb[0].mxu0
        %3636 = vmatprep.mubr.f32.mxu0 0.0
        %3637 = vmatmul.mubr.f32.gmra.mrb[0].mxu0 %v3453
        %v3638 = vpop.f32.mrb[0].mxu0
        %v3639 = vadd.f32 0.0, %v3638
        %v3640 = vpop.f32.mrb[0].mxu0
        %3641 = vmatprep.mubr.f32.mxu0 0.0
        %3642 = vmatmul.mubr.f32.gmra.mrb[0].mxu0 %v3456
        %v3643 = vpop.f32.mrb[0].mxu0
        %v3644 = vadd.f32 0.0, %v3643
        %v3645 = vpop.f32.mrb[0].mxu0
        %3646 = vmatprep.mubr.f32.mxu0 0.0
        %3647 = vmatmul.mubr.f32.gmra.mrb[0].mxu0 %v3459
        %v3648 = vpop.f32.mrb[0].mxu0
        %v3649 = vadd.f32 0.0, %v3648
        %v3650 = vpop.f32.mrb[0].mxu0
        %3651 = vmatprep.mubr.f32.mxu0 0.0
        %3652 = vmatmul.mubr.f32.gmra.mrb[0].mxu0 %v3462
        %v3653 = vpop.f32.mrb[0].mxu0
        %v3654 = vadd.f32 0.0, %v3653
        %v3655 = vpop.f32.mrb[0].mxu0
        %3656 = vmatprep.mubr.f32.mxu0 0.0
        %3657 = vmatmul.mubr.f32.gmra.mrb[0].mxu0 %v3465
        %v3658 = vpop.f32.mrb[0].mxu0
        %v3659 = vadd.f32 0.0, %v3658
        %v3660 = vpop.f32.mrb[0].mxu0
        %3661 = vmatprep.mubr.f32.mxu0 0.0
        %3662 = vmatmul.mubr.f32.gmra.mrb[0].mxu0 %v3468
        %v3663 = vpop.f32.mrb[0].mxu0
        %v3664 = vadd.f32 0.0, %v3663
        %v3665 = vpop.f32.mrb[0].mxu0
        %3666 = vmatprep.mubr.f32.mxu0 0.0
        %3667 = vmatmul.mubr.f32.gmra.mrb[0].mxu0 %v3471
        %v3668 = vpop.f32.mrb[0].mxu0
        %v3669 = vadd.f32 0.0, %v3668
        %v3670 = vpop.f32.mrb[0].mxu0
        %3671 = vmatprep.mubr.f32.mxu0 0.0
        %3672 = vmatmul.mubr.f32.gmra.mrb[0].mxu0 %v3474
        %v3673 = vpop.f32.mrb[0].mxu0
        %v3674 = vadd.f32 0.0, %v3673
        %v3675 = vpop.f32.mrb[0].mxu0
        %3676 = vmatprep.mubr.f32.mxu0 0.0
        %3677 = vmatmul.mubr.f32.gmra.mrb[0].mxu0 %v3477
        %v3678 = vpop.f32.mrb[0].mxu0
        %v3679 = vadd.f32 0.0, %v3678
        %v3680 = vpop.f32.mrb[0].mxu0
        %3681 = vmatprep.mubr.f32.mxu0 0.0
        %3682 = vmatmul.mubr.f32.gmra.mrb[0].mxu0 %v3480
        %v3683 = vpop.f32.mrb[0].mxu0
        %v3684 = vadd.f32 0.0, %v3683
        %v3685 = vpop.f32.mrb[0].mxu0
        %3686 = vmatprep.mubr.f32.mxu0 0.0
        %3687 = vmatmul.mubr.f32.gmra.mrb[0].mxu0 %v3483
        %v3688 = vpop.f32.mrb[0].mxu0
        %v3689 = vadd.f32 0.0, %v3688
        %v3690 = vpop.f32.mrb[0].mxu0
        %3691 = vmatprep.mubr.f32.mxu0 0.0
        %3692 = vmatmul.mubr.f32.gmra.mrb[0].mxu0 %v3486
        %v3693 = vpop.f32.mrb[0].mxu0
        %v3694 = vadd.f32 0.0, %v3693
        %v3695 = vpop.f32.mrb[0].mxu0
        %3696 = vmatprep.mubr.f32.mxu0 0.0
        %3697 = vmatmul.mubr.f32.gmra.mrb[0].mxu0 %v3489
        %v3698 = vpop.f32.mrb[0].mxu0
        %v3699 = vadd.f32 0.0, %v3698
        %v3700 = vpop.f32.mrb[0].mxu0
        %3701 = vmatprep.mubr.f32.mxu0 0.0
        %3702 = vmatmul.mubr.f32.gmra.mrb[0].mxu0 %v3492
        %v3703 = vpop.f32.mrb[0].mxu0
        %v3704 = vadd.f32 0.0, %v3703
        %v3705 = vpop.f32.mrb[0].mxu0
        %3706 = vmatprep.mubr.f32.mxu0 0.0
        %3707 = vmatmul.mubr.f32.gmra.mrb[0].mxu0 %v3495
        %v3708 = vpop.f32.mrb[0].mxu0
        %v3709 = vadd.f32 0.0, %v3708
        %v3710 = vpop.f32.mrb[0].mxu0
        %3711 = vmatprep.mubr.f32.mxu0 0.0
        %3712 = vmatmul.mubr.f32.gmra.mrb[0].mxu0 %v3498
        %v3713 = vpop.f32.mrb[0].mxu0
        %v3714 = vadd.f32 0.0, %v3713
        %v3715 = vpop.f32.mrb[0].mxu0
        %3716 = vmatprep.mubr.f32.mxu0 0.0
        %3717 = vmatmul.mubr.f32.gmra.mrb[0].mxu0 %v3501
        %v3718 = vpop.f32.mrb[0].mxu0
        %v3719 = vadd.f32 0.0, %v3718
        %v3720 = vpop.f32.mrb[0].mxu0
        %3721 = vmatprep.mubr.f32.mxu0 0.0
        %3722 = vmatmul.mubr.f32.gmra.mrb[0].mxu0 %v3504
        %v3723 = vpop.f32.mrb[0].mxu0
        %v3724 = vadd.f32 0.0, %v3723
        %v3725 = vpop.f32.mrb[0].mxu0
        %3726 = vmatprep.mubr.f32.mxu0 0.0
        %3727 = vmatmul.mubr.f32.gmra.mrb[0].mxu0 %v3507
        %v3728 = vpop.f32.mrb[0].mxu0
        %v3729 = vadd.f32 0.0, %v3728
        %v3730 = vpop.f32.mrb[0].mxu0
        %3731 = vmatprep.mubr.f32.mxu0 0.0
        %3732 = vmatmul.mubr.f32.gmra.mrb[0].mxu0 %v3510
        %v3733 = vpop.f32.mrb[0].mxu0
        %v3734 = vadd.f32 0.0, %v3733
        %v3735 = vpop.f32.mrb[0].mxu0
        %3736 = vdwg.mxu0
        %v3737 = vadd.f32 %v3347, %v3579
        %v3738 = vadd.f32 %v3348, %v3584
        %v3739 = vadd.f32 %v3349, %v3589
        %v3740 = vadd.f32 %v3350, %v3594
        %v3741 = vadd.f32 %v3351, %v3599
        %v3742 = vadd.f32 %v3352, %v3604
        %v3743 = vadd.f32 %v3353, %v3609
        %v3744 = vadd.f32 %v3354, %v3614
        %v3745 = vadd.f32 %v3355, %v3619
        %v3746 = vadd.f32 %v3356, %v3624
        %v3747 = vadd.f32 %v3357, %v3629
        %v3748 = vadd.f32 %v3358, %v3634
        %v3749 = vadd.f32 %v3359, %v3639
        %v3750 = vadd.f32 %v3360, %v3644
        %v3751 = vadd.f32 %v3361, %v3649
        %v3752 = vadd.f32 %v3362, %v3654
        %v3753 = vadd.f32 %v3363, %v3659
        %v3754 = vadd.f32 %v3364, %v3664
        %v3755 = vadd.f32 %v3365, %v3669
        %v3756 = vadd.f32 %v3366, %v3674
        %v3757 = vadd.f32 %v3367, %v3679
        %v3758 = vadd.f32 %v3368, %v3684
        %v3759 = vadd.f32 %v3369, %v3689
        %v3760 = vadd.f32 %v3370, %v3694
        %v3761 = vadd.f32 %v3371, %v3699
        %v3762 = vadd.f32 %v3372, %v3704
        %v3763 = vadd.f32 %v3373, %v3709
        %v3764 = vadd.f32 %v3374, %v3714
        %v3765 = vadd.f32 %v3375, %v3719
        %v3766 = vadd.f32 %v3376, %v3724
        %v3767 = vadd.f32 %v3377, %v3729
        %v3768 = vadd.f32 %v3378, %v3734
        %v3769 = vld [vmem:[%s2988 + $0x2] sm:$0xff]
        %v3770 = vld [vmem:[%s2988 + $0xa] sm:$0xff]
        %v3771 = vld [vmem:[%s2988 + $0x1a] sm:$0xff]
        %v3772 = vld [vmem:[%s2988 + $0x22] sm:$0xff]
        %v3773 = vld [vmem:[%s2988 + $0x32] sm:$0xff]
        %v3774 = vld [vmem:[%s2988 + $0x3a] sm:$0xff]
        %v3775 = vld [vmem:[%s2988 + $0x4a] sm:$0xff]
        %v3776 = vld [vmem:[%s2988 + $0x52] sm:$0xff]
        %v3777 = vld [vmem:[%s2988 + $0x62] sm:$0xff]
        %v3778 = vld [vmem:[%s2988 + $0x6a] sm:$0xff]
        %v3779 = vld [vmem:[%s2988 + $0x7a] sm:$0xff]
        %v3780 = vld [vmem:[%s2988 + $0x82] sm:$0xff]
        %v3781 = vld [vmem:[%s2988 + $0x92] sm:$0xff]
        %v3782 = vld [vmem:[%s2988 + $0x9a] sm:$0xff]
        %v3783 = vld [vmem:[%s2988 + $0xaa] sm:$0xff]
        %v3784 = vld [vmem:[%s2988 + $0xb2] sm:$0xff]
        %v3785 = vld [vmem:[%s2988 + $0xc2] sm:$0xff]
        %v3786 = vld [vmem:[%s2988 + $0xca] sm:$0xff]
        %v3787 = vld [vmem:[%s2988 + $0xda] sm:$0xff]
        %v3788 = vld [vmem:[%s2988 + $0xe2] sm:$0xff]
        %v3789 = vld [vmem:[%s2988 + $0xf2] sm:$0xff]
        %v3790 = vld [vmem:[%s2988 + $0xfa] sm:$0xff]
        %v3791 = vld [vmem:[%s2988 + $0x10a] sm:$0xff]
        %v3792 = vld [vmem:[%s2988 + $0x112] sm:$0xff]
        %v3793 = vld [vmem:[%s2988 + $0x122] sm:$0xff]
        %v3794 = vld [vmem:[%s2988 + $0x12a] sm:$0xff]
        %v3795 = vld [vmem:[%s2988 + $0x13a] sm:$0xff]
        %v3796 = vld [vmem:[%s2988 + $0x142] sm:$0xff]
        %v3797 = vld [vmem:[%s2988 + $0x152] sm:$0xff]
        %v3798 = vld [vmem:[%s2988 + $0x15a] sm:$0xff]
        %v3799 = vld [vmem:[%s2988 + $0x16a] sm:$0xff]
        %v3800 = vld [vmem:[%s2988 + $0x172] sm:$0xff]
        %s3801 = scalar_lea.vmem [#allocation6], 256
        %v3802 = vld [vmem:[%s3801] sm:$0xff]
        %v3803 = vld [vmem:[%s3801 + $0x8] sm:$0xff]
        %v3804 = vld [vmem:[%s3801 + $0x10] sm:$0xff]
        %v3805 = vld [vmem:[%s3801 + $0x18] sm:$0xff]
        %v3807 = vsel %vm624, %v3769, 0
        %v3810 = vsel %vm624, %v3770, 0
        %v3813 = vsel %vm624, %v3771, 0
        %v3816 = vsel %vm624, %v3772, 0
        %v3819 = vsel %vm624, %v3773, 0
        %v3822 = vsel %vm624, %v3774, 0
        %v3825 = vsel %vm624, %v3775, 0
        %v3828 = vsel %vm624, %v3776, 0
        %v3831 = vsel %vm624, %v3777, 0
        %v3834 = vsel %vm624, %v3778, 0
        %v3837 = vsel %vm624, %v3779, 0
        %v3840 = vsel %vm624, %v3780, 0
        %v3843 = vsel %vm624, %v3781, 0
        %v3846 = vsel %vm624, %v3782, 0
        %v3849 = vsel %vm624, %v3783, 0
        %v3852 = vsel %vm624, %v3784, 0
        %v3855 = vsel %vm624, %v3785, 0
        %v3858 = vsel %vm624, %v3786, 0
        %v3861 = vsel %vm624, %v3787, 0
        %v3864 = vsel %vm624, %v3788, 0
        %v3867 = vsel %vm624, %v3789, 0
        %v3870 = vsel %vm624, %v3790, 0
        %v3873 = vsel %vm624, %v3791, 0
        %v3876 = vsel %vm624, %v3792, 0
        %v3879 = vsel %vm624, %v3793, 0
        %v3882 = vsel %vm624, %v3794, 0
        %v3885 = vsel %vm624, %v3795, 0
        %v3888 = vsel %vm624, %v3796, 0
        %v3891 = vsel %vm624, %v3797, 0
        %v3894 = vsel %vm624, %v3798, 0
        %v3897 = vsel %vm624, %v3799, 0
        %v3900 = vsel %vm624, %v3800, 0
        %3902 = vmatprep.subr.mxu0 0.0
        %3903 = vmatpush1.msra.mxu0 %v3802
        %3904 = vmatprep.subr.mxu0 0.0
        %3905 = vmatpush1.msra.mxu0 %v3803
        %3906 = vmatprep.subr.mxu0 0.0
        %3907 = vmatpush1.msra.mxu0 %v3804
        %3908 = vmatprep.subr.mxu0 0.0
        %3909 = vmatpush1.msra.mxu0 %v3805
        %3910 = vmatprep.subr.mxu0 0.0
        %3911 = vmatpush1.msra.mxu0 0.0
        %3912 = vmatprep.subr.mxu0 0.0
        %3913 = vmatpush1.msra.mxu0 0.0
        %3914 = vmatprep.subr.mxu0 0.0
        %3915 = vmatpush1.msra.mxu0 0.0
        %3916 = vmatprep.subr.mxu0 0.0
        %3917 = vmatpush1.msra.mxu0 0.0
        %3918 = vmatprep.subr.mxu0 0.0
        %3919 = vmatpush1.msra.mxu0 0.0
        %3920 = vmatprep.subr.mxu0 0.0
        %3921 = vmatpush1.msra.mxu0 0.0
        %3922 = vmatprep.subr.mxu0 0.0
        %3923 = vmatpush1.msra.mxu0 0.0
        %3924 = vmatprep.subr.mxu0 0.0
        %3925 = vmatpush1.msra.mxu0 0.0
        %3926 = vmatprep.subr.mxu0 0.0
        %3927 = vmatpush1.msra.mxu0 0.0
        %3928 = vmatprep.subr.mxu0 0.0
        %3929 = vmatpush1.msra.mxu0 0.0
        %3930 = vmatprep.subr.mxu0 0.0
        %3931 = vmatpush1.msra.mxu0 0.0
        %3932 = vmatprep.subr.mxu0 0.0
        %3933 = vmatpush1.msra.mxu0 0.0
        %3934 = vmatprep.subr.mxu0 0.0
        %3935 = vmatpush1.msra.mxu0 0.0
        %3936 = vmatprep.subr.mxu0 0.0
        %3937 = vmatpush1.msra.mxu0 0.0
        %3938 = vmatprep.subr.mxu0 0.0
        %3939 = vmatpush1.msra.mxu0 0.0
        %3940 = vmatprep.subr.mxu0 0.0
        %3941 = vmatpush1.msra.mxu0 0.0
        %3942 = vmatprep.subr.mxu0 0.0
        %3943 = vmatpush1.msra.mxu0 0.0
        %3944 = vmatprep.subr.mxu0 0.0
        %3945 = vmatpush1.msra.mxu0 0.0
        %3946 = vmatprep.subr.mxu0 0.0
        %3947 = vmatpush1.msra.mxu0 0.0
        %3948 = vmatprep.subr.mxu0 0.0
        %3949 = vmatpush1.msra.mxu0 0.0
        %3950 = vmatprep.subr.mxu0 0.0
        %3951 = vmatpush1.msra.mxu0 0.0
        %3952 = vmatprep.subr.mxu0 0.0
        %3953 = vmatpush1.msra.mxu0 0.0
        %3954 = vmatprep.subr.mxu0 0.0
        %3955 = vmatpush1.msra.mxu0 0.0
        %3956 = vmatprep.subr.mxu0 0.0
        %3957 = vmatpush1.msra.mxu0 0.0
        %3958 = vmatprep.subr.mxu0 0.0
        %3959 = vmatpush1.msra.mxu0 0.0
        %3960 = vmatprep.subr.mxu0 0.0
        %3961 = vmatpush1.msra.mxu0 0.0
        %3962 = vmatprep.subr.mxu0 0.0
        %3963 = vmatpush1.msra.mxu0 0.0
        %3964 = vmatprep.subr.mxu0 0.0
        %3965 = vmatpush1.msra.mxu0 0.0
        %3966 = vmatprep.mubr.f32.mxu0 0.0
        %3967 = vmatmul.mubr.f32.gmra.mrb[0].mxu0 %v3807
        %v3968 = vpop.f32.mrb[0].mxu0
        %v3969 = vadd.f32 0.0, %v3968
        %v3970 = vpop.f32.mrb[0].mxu0
        %3971 = vmatprep.mubr.f32.mxu0 0.0
        %3972 = vmatmul.mubr.f32.gmra.mrb[0].mxu0 %v3810
        %v3973 = vpop.f32.mrb[0].mxu0
        %v3974 = vadd.f32 0.0, %v3973
        %v3975 = vpop.f32.mrb[0].mxu0
        %3976 = vmatprep.mubr.f32.mxu0 0.0
        %3977 = vmatmul.mubr.f32.gmra.mrb[0].mxu0 %v3813
        %v3978 = vpop.f32.mrb[0].mxu0
        %v3979 = vadd.f32 0.0, %v3978
        %v3980 = vpop.f32.mrb[0].mxu0
        %3981 = vmatprep.mubr.f32.mxu0 0.0
        %3982 = vmatmul.mubr.f32.gmra.mrb[0].mxu0 %v3816
        %v3983 = vpop.f32.mrb[0].mxu0
        %v3984 = vadd.f32 0.0, %v3983
        %v3985 = vpop.f32.mrb[0].mxu0
        %3986 = vmatprep.mubr.f32.mxu0 0.0
        %3987 = vmatmul.mubr.f32.gmra.mrb[0].mxu0 %v3819
        %v3988 = vpop.f32.mrb[0].mxu0
        %v3989 = vadd.f32 0.0, %v3988
        %v3990 = vpop.f32.mrb[0].mxu0
        %3991 = vmatprep.mubr.f32.mxu0 0.0
        %3992 = vmatmul.mubr.f32.gmra.mrb[0].mxu0 %v3822
        %v3993 = vpop.f32.mrb[0].mxu0
        %v3994 = vadd.f32 0.0, %v3993
        %v3995 = vpop.f32.mrb[0].mxu0
        %3996 = vmatprep.mubr.f32.mxu0 0.0
        %3997 = vmatmul.mubr.f32.gmra.mrb[0].mxu0 %v3825
        %v3998 = vpop.f32.mrb[0].mxu0
        %v3999 = vadd.f32 0.0, %v3998
        %v4000 = vpop.f32.mrb[0].mxu0
        %4001 = vmatprep.mubr.f32.mxu0 0.0
        %4002 = vmatmul.mubr.f32.gmra.mrb[0].mxu0 %v3828
        %v4003 = vpop.f32.mrb[0].mxu0
        %v4004 = vadd.f32 0.0, %v4003
        %v4005 = vpop.f32.mrb[0].mxu0
        %4006 = vmatprep.mubr.f32.mxu0 0.0
        %4007 = vmatmul.mubr.f32.gmra.mrb[0].mxu0 %v3831
        %v4008 = vpop.f32.mrb[0].mxu0
        %v4009 = vadd.f32 0.0, %v4008
        %v4010 = vpop.f32.mrb[0].mxu0
        %4011 = vmatprep.mubr.f32.mxu0 0.0
        %4012 = vmatmul.mubr.f32.gmra.mrb[0].mxu0 %v3834
        %v4013 = vpop.f32.mrb[0].mxu0
        %v4014 = vadd.f32 0.0, %v4013
        %v4015 = vpop.f32.mrb[0].mxu0
        %4016 = vmatprep.mubr.f32.mxu0 0.0
        %4017 = vmatmul.mubr.f32.gmra.mrb[0].mxu0 %v3837
        %v4018 = vpop.f32.mrb[0].mxu0
        %v4019 = vadd.f32 0.0, %v4018
        %v4020 = vpop.f32.mrb[0].mxu0
        %4021 = vmatprep.mubr.f32.mxu0 0.0
        %4022 = vmatmul.mubr.f32.gmra.mrb[0].mxu0 %v3840
        %v4023 = vpop.f32.mrb[0].mxu0
        %v4024 = vadd.f32 0.0, %v4023
        %v4025 = vpop.f32.mrb[0].mxu0
        %4026 = vmatprep.mubr.f32.mxu0 0.0
        %4027 = vmatmul.mubr.f32.gmra.mrb[0].mxu0 %v3843
        %v4028 = vpop.f32.mrb[0].mxu0
        %v4029 = vadd.f32 0.0, %v4028
        %v4030 = vpop.f32.mrb[0].mxu0
        %4031 = vmatprep.mubr.f32.mxu0 0.0
        %4032 = vmatmul.mubr.f32.gmra.mrb[0].mxu0 %v3846
        %v4033 = vpop.f32.mrb[0].mxu0
        %v4034 = vadd.f32 0.0, %v4033
        %v4035 = vpop.f32.mrb[0].mxu0
        %4036 = vmatprep.mubr.f32.mxu0 0.0
        %4037 = vmatmul.mubr.f32.gmra.mrb[0].mxu0 %v3849
        %v4038 = vpop.f32.mrb[0].mxu0
        %v4039 = vadd.f32 0.0, %v4038
        %v4040 = vpop.f32.mrb[0].mxu0
        %4041 = vmatprep.mubr.f32.mxu0 0.0
        %4042 = vmatmul.mubr.f32.gmra.mrb[0].mxu0 %v3852
        %v4043 = vpop.f32.mrb[0].mxu0
        %v4044 = vadd.f32 0.0, %v4043
        %v4045 = vpop.f32.mrb[0].mxu0
        %4046 = vmatprep.mubr.f32.mxu0 0.0
        %4047 = vmatmul.mubr.f32.gmra.mrb[0].mxu0 %v3855
        %v4048 = vpop.f32.mrb[0].mxu0
        %v4049 = vadd.f32 0.0, %v4048
        %v4050 = vpop.f32.mrb[0].mxu0
        %4051 = vmatprep.mubr.f32.mxu0 0.0
        %4052 = vmatmul.mubr.f32.gmra.mrb[0].mxu0 %v3858
        %v4053 = vpop.f32.mrb[0].mxu0
        %v4054 = vadd.f32 0.0, %v4053
        %v4055 = vpop.f32.mrb[0].mxu0
        %4056 = vmatprep.mubr.f32.mxu0 0.0
        %4057 = vmatmul.mubr.f32.gmra.mrb[0].mxu0 %v3861
        %v4058 = vpop.f32.mrb[0].mxu0
        %v4059 = vadd.f32 0.0, %v4058
        %v4060 = vpop.f32.mrb[0].mxu0
        %4061 = vmatprep.mubr.f32.mxu0 0.0
        %4062 = vmatmul.mubr.f32.gmra.mrb[0].mxu0 %v3864
        %v4063 = vpop.f32.mrb[0].mxu0
        %v4064 = vadd.f32 0.0, %v4063
        %v4065 = vpop.f32.mrb[0].mxu0
        %4066 = vmatprep.mubr.f32.mxu0 0.0
        %4067 = vmatmul.mubr.f32.gmra.mrb[0].mxu0 %v3867
        %v4068 = vpop.f32.mrb[0].mxu0
        %v4069 = vadd.f32 0.0, %v4068
        %v4070 = vpop.f32.mrb[0].mxu0
        %4071 = vmatprep.mubr.f32.mxu0 0.0
        %4072 = vmatmul.mubr.f32.gmra.mrb[0].mxu0 %v3870
        %v4073 = vpop.f32.mrb[0].mxu0
        %v4074 = vadd.f32 0.0, %v4073
        %v4075 = vpop.f32.mrb[0].mxu0
        %4076 = vmatprep.mubr.f32.mxu0 0.0
        %4077 = vmatmul.mubr.f32.gmra.mrb[0].mxu0 %v3873
        %v4078 = vpop.f32.mrb[0].mxu0
        %v4079 = vadd.f32 0.0, %v4078
        %v4080 = vpop.f32.mrb[0].mxu0
        %4081 = vmatprep.mubr.f32.mxu0 0.0
        %4082 = vmatmul.mubr.f32.gmra.mrb[0].mxu0 %v3876
        %v4083 = vpop.f32.mrb[0].mxu0
        %v4084 = vadd.f32 0.0, %v4083
        %v4085 = vpop.f32.mrb[0].mxu0
        %4086 = vmatprep.mubr.f32.mxu0 0.0
        %4087 = vmatmul.mubr.f32.gmra.mrb[0].mxu0 %v3879
        %v4088 = vpop.f32.mrb[0].mxu0
        %v4089 = vadd.f32 0.0, %v4088
        %v4090 = vpop.f32.mrb[0].mxu0
        %4091 = vmatprep.mubr.f32.mxu0 0.0
        %4092 = vmatmul.mubr.f32.gmra.mrb[0].mxu0 %v3882
        %v4093 = vpop.f32.mrb[0].mxu0
        %v4094 = vadd.f32 0.0, %v4093
        %v4095 = vpop.f32.mrb[0].mxu0
        %4096 = vmatprep.mubr.f32.mxu0 0.0
        %4097 = vmatmul.mubr.f32.gmra.mrb[0].mxu0 %v3885
        %v4098 = vpop.f32.mrb[0].mxu0
        %v4099 = vadd.f32 0.0, %v4098
        %v4100 = vpop.f32.mrb[0].mxu0
        %4101 = vmatprep.mubr.f32.mxu0 0.0
        %4102 = vmatmul.mubr.f32.gmra.mrb[0].mxu0 %v3888
        %v4103 = vpop.f32.mrb[0].mxu0
        %v4104 = vadd.f32 0.0, %v4103
        %v4105 = vpop.f32.mrb[0].mxu0
        %4106 = vmatprep.mubr.f32.mxu0 0.0
        %4107 = vmatmul.mubr.f32.gmra.mrb[0].mxu0 %v3891
        %v4108 = vpop.f32.mrb[0].mxu0
        %v4109 = vadd.f32 0.0, %v4108
        %v4110 = vpop.f32.mrb[0].mxu0
        %4111 = vmatprep.mubr.f32.mxu0 0.0
        %4112 = vmatmul.mubr.f32.gmra.mrb[0].mxu0 %v3894
        %v4113 = vpop.f32.mrb[0].mxu0
        %v4114 = vadd.f32 0.0, %v4113
        %v4115 = vpop.f32.mrb[0].mxu0
        %4116 = vmatprep.mubr.f32.mxu0 0.0
        %4117 = vmatmul.mubr.f32.gmra.mrb[0].mxu0 %v3897
        %v4118 = vpop.f32.mrb[0].mxu0
        %v4119 = vadd.f32 0.0, %v4118
        %v4120 = vpop.f32.mrb[0].mxu0
        %4121 = vmatprep.mubr.f32.mxu0 0.0
        %4122 = vmatmul.mubr.f32.gmra.mrb[0].mxu0 %v3900
        %v4123 = vpop.f32.mrb[0].mxu0
        %v4124 = vadd.f32 0.0, %v4123
        %v4125 = vpop.f32.mrb[0].mxu0
        %4126 = vdwg.mxu0
        %v4127 = vadd.f32 %v3737, %v3969
        %v4128 = vadd.f32 %v3738, %v3974
        %v4129 = vadd.f32 %v3739, %v3979
        %v4130 = vadd.f32 %v3740, %v3984
        %v4131 = vadd.f32 %v3741, %v3989
        %v4132 = vadd.f32 %v3742, %v3994
        %v4133 = vadd.f32 %v3743, %v3999
        %v4134 = vadd.f32 %v3744, %v4004
        %v4135 = vadd.f32 %v3745, %v4009
        %v4136 = vadd.f32 %v3746, %v4014
        %v4137 = vadd.f32 %v3747, %v4019
        %v4138 = vadd.f32 %v3748, %v4024
        %v4139 = vadd.f32 %v3749, %v4029
        %v4140 = vadd.f32 %v3750, %v4034
        %v4141 = vadd.f32 %v3751, %v4039
        %v4142 = vadd.f32 %v3752, %v4044
        %v4143 = vadd.f32 %v3753, %v4049
        %v4144 = vadd.f32 %v3754, %v4054
        %v4145 = vadd.f32 %v3755, %v4059
        %v4146 = vadd.f32 %v3756, %v4064
        %v4147 = vadd.f32 %v3757, %v4069
        %v4148 = vadd.f32 %v3758, %v4074
        %v4149 = vadd.f32 %v3759, %v4079
        %v4150 = vadd.f32 %v3760, %v4084
        %v4151 = vadd.f32 %v3761, %v4089
        %v4152 = vadd.f32 %v3762, %v4094
        %v4153 = vadd.f32 %v3763, %v4099
        %v4154 = vadd.f32 %v3764, %v4104
        %v4155 = vadd.f32 %v3765, %v4109
        %v4156 = vadd.f32 %v3766, %v4114
        %v4157 = vadd.f32 %v3767, %v4119
        %v4158 = vadd.f32 %v3768, %v4124
        %v4159 = vld [vmem:[%s4] sm:$0x1]
        %v4161 = vlaneseq
        %v4162 = vshrl.u32 %v4161, 7
        %v4163 = vsub.s32 0, %v4162
        %v4164 = vrot.slane %v4159, %v4163
        %v4166 = vadd.f32 %v4127, %v4164
        %v4167 = vadd.f32 %v4128, %v4164
        %v4168 = vadd.f32 %v4129, %v4164
        %v4169 = vadd.f32 %v4130, %v4164
        %v4170 = vadd.f32 %v4131, %v4164
        %v4171 = vadd.f32 %v4132, %v4164
        %v4172 = vadd.f32 %v4133, %v4164
        %v4173 = vadd.f32 %v4134, %v4164
        %v4174 = vadd.f32 %v4135, %v4164
        %v4175 = vadd.f32 %v4136, %v4164
        %v4176 = vadd.f32 %v4137, %v4164
        %v4177 = vadd.f32 %v4138, %v4164
        %v4178 = vadd.f32 %v4139, %v4164
        %v4179 = vadd.f32 %v4140, %v4164
        %v4180 = vadd.f32 %v4141, %v4164
        %v4181 = vadd.f32 %v4142, %v4164
        %v4182 = vadd.f32 %v4143, %v4164
        %v4183 = vadd.f32 %v4144, %v4164
        %v4184 = vadd.f32 %v4145, %v4164
        %v4185 = vadd.f32 %v4146, %v4164
        %v4186 = vadd.f32 %v4147, %v4164
        %v4187 = vadd.f32 %v4148, %v4164
        %v4188 = vadd.f32 %v4149, %v4164
        %v4189 = vadd.f32 %v4150, %v4164
        %v4190 = vadd.f32 %v4151, %v4164
        %v4191 = vadd.f32 %v4152, %v4164
        %v4192 = vadd.f32 %v4153, %v4164
        %v4193 = vadd.f32 %v4154, %v4164
        %v4194 = vadd.f32 %v4155, %v4164
        %v4195 = vadd.f32 %v4156, %v4164
        %v4196 = vadd.f32 %v4157, %v4164
        %v4197 = vadd.f32 %v4158, %v4164
        %v4198 = vmax.f32 %v4166, 0.0
        %v4199 = vmax.f32 %v4167, 0.0
        %v4200 = vmax.f32 %v4168, 0.0
        %v4201 = vmax.f32 %v4169, 0.0
        %v4202 = vmax.f32 %v4170, 0.0
        %v4203 = vmax.f32 %v4171, 0.0
        %v4204 = vmax.f32 %v4172, 0.0
        %v4205 = vmax.f32 %v4173, 0.0
        %v4206 = vmax.f32 %v4174, 0.0
        %v4207 = vmax.f32 %v4175, 0.0
        %v4208 = vmax.f32 %v4176, 0.0
        %v4209 = vmax.f32 %v4177, 0.0
        %v4210 = vmax.f32 %v4178, 0.0
        %v4211 = vmax.f32 %v4179, 0.0
        %v4212 = vmax.f32 %v4180, 0.0
        %v4213 = vmax.f32 %v4181, 0.0
        %v4214 = vmax.f32 %v4182, 0.0
        %v4215 = vmax.f32 %v4183, 0.0
        %v4216 = vmax.f32 %v4184, 0.0
        %v4217 = vmax.f32 %v4185, 0.0
        %v4218 = vmax.f32 %v4186, 0.0
        %v4219 = vmax.f32 %v4187, 0.0
        %v4220 = vmax.f32 %v4188, 0.0
        %v4221 = vmax.f32 %v4189, 0.0
        %v4222 = vmax.f32 %v4190, 0.0
        %v4223 = vmax.f32 %v4191, 0.0
        %v4224 = vmax.f32 %v4192, 0.0
        %v4225 = vmax.f32 %v4193, 0.0
        %v4226 = vmax.f32 %v4194, 0.0
        %v4227 = vmax.f32 %v4195, 0.0
        %v4228 = vmax.f32 %v4196, 0.0
        %v4229 = vmax.f32 %v4197, 0.0
        %v4230 = vld [vmem:[%s5] sm:$0xff]
        %v4231 = vld [vmem:[%s5 + $0x8] sm:$0xff]
        %v4232 = vld [vmem:[%s5 + $0x10] sm:$0xff]
        %v4233 = vld [vmem:[%s5 + $0x18] sm:$0xff]
        %v4234 = vld [vmem:[%s6] sm:$0x1]
        %v4236 = vlaneseq
        %v4237 = vshrl.u32 %v4236, 7
        %v4238 = vsub.s32 0, %v4237
        %v4239 = vrot.slane %v4234, %v4238
        %v4242 = vsel %vm624, %v4198, 0
        %v4245 = vsel %vm624, %v4199, 0
        %v4248 = vsel %vm624, %v4200, 0
        %v4251 = vsel %vm624, %v4201, 0
        %v4254 = vsel %vm624, %v4202, 0
        %v4257 = vsel %vm624, %v4203, 0
        %v4260 = vsel %vm624, %v4204, 0
        %v4263 = vsel %vm624, %v4205, 0
        %v4266 = vsel %vm624, %v4206, 0
        %v4269 = vsel %vm624, %v4207, 0
        %v4272 = vsel %vm624, %v4208, 0
        %v4275 = vsel %vm624, %v4209, 0
        %v4278 = vsel %vm624, %v4210, 0
        %v4281 = vsel %vm624, %v4211, 0
        %v4284 = vsel %vm624, %v4212, 0
        %v4287 = vsel %vm624, %v4213, 0
        %v4290 = vsel %vm624, %v4214, 0
        %v4293 = vsel %vm624, %v4215, 0
        %v4296 = vsel %vm624, %v4216, 0
        %v4299 = vsel %vm624, %v4217, 0
        %v4302 = vsel %vm624, %v4218, 0
        %v4305 = vsel %vm624, %v4219, 0
        %v4308 = vsel %vm624, %v4220, 0
        %v4311 = vsel %vm624, %v4221, 0
        %v4314 = vsel %vm624, %v4222, 0
        %v4317 = vsel %vm624, %v4223, 0
        %v4320 = vsel %vm624, %v4224, 0
        %v4323 = vsel %vm624, %v4225, 0
        %v4326 = vsel %vm624, %v4226, 0
        %v4329 = vsel %vm624, %v4227, 0
        %v4332 = vsel %vm624, %v4228, 0
        %v4335 = vsel %vm624, %v4229, 0
        %4337 = vmatprep.subr.mxu0 0.0
        %4338 = vmatpush1.msra.mxu0 %v4230
        %4339 = vmatprep.subr.mxu0 0.0
        %4340 = vmatpush1.msra.mxu0 %v4231
        %4341 = vmatprep.subr.mxu0 0.0
        %4342 = vmatpush1.msra.mxu0 %v4232
        %4343 = vmatprep.subr.mxu0 0.0
        %4344 = vmatpush1.msra.mxu0 %v4233
        %4345 = vmatprep.subr.mxu0 0.0
        %4346 = vmatpush1.msra.mxu0 0.0
        %4347 = vmatprep.subr.mxu0 0.0
        %4348 = vmatpush1.msra.mxu0 0.0
        %4349 = vmatprep.subr.mxu0 0.0
        %4350 = vmatpush1.msra.mxu0 0.0
        %4351 = vmatprep.subr.mxu0 0.0
        %4352 = vmatpush1.msra.mxu0 0.0
        %4353 = vmatprep.subr.mxu0 0.0
        %4354 = vmatpush1.msra.mxu0 0.0
        %4355 = vmatprep.subr.mxu0 0.0
        %4356 = vmatpush1.msra.mxu0 0.0
        %4357 = vmatprep.subr.mxu0 0.0
        %4358 = vmatpush1.msra.mxu0 0.0
        %4359 = vmatprep.subr.mxu0 0.0
        %4360 = vmatpush1.msra.mxu0 0.0
        %4361 = vmatprep.subr.mxu0 0.0
        %4362 = vmatpush1.msra.mxu0 0.0
        %4363 = vmatprep.subr.mxu0 0.0
        %4364 = vmatpush1.msra.mxu0 0.0
        %4365 = vmatprep.subr.mxu0 0.0
        %4366 = vmatpush1.msra.mxu0 0.0
        %4367 = vmatprep.subr.mxu0 0.0
        %4368 = vmatpush1.msra.mxu0 0.0
        %4369 = vmatprep.subr.mxu0 0.0
        %4370 = vmatpush1.msra.mxu0 0.0
        %4371 = vmatprep.subr.mxu0 0.0
        %4372 = vmatpush1.msra.mxu0 0.0
        %4373 = vmatprep.subr.mxu0 0.0
        %4374 = vmatpush1.msra.mxu0 0.0
        %4375 = vmatprep.subr.mxu0 0.0
        %4376 = vmatpush1.msra.mxu0 0.0
        %4377 = vmatprep.subr.mxu0 0.0
        %4378 = vmatpush1.msra.mxu0 0.0
        %4379 = vmatprep.subr.mxu0 0.0
        %4380 = vmatpush1.msra.mxu0 0.0
        %4381 = vmatprep.subr.mxu0 0.0
        %4382 = vmatpush1.msra.mxu0 0.0
        %4383 = vmatprep.subr.mxu0 0.0
        %4384 = vmatpush1.msra.mxu0 0.0
        %4385 = vmatprep.subr.mxu0 0.0
        %4386 = vmatpush1.msra.mxu0 0.0
        %4387 = vmatprep.subr.mxu0 0.0
        %4388 = vmatpush1.msra.mxu0 0.0
        %4389 = vmatprep.subr.mxu0 0.0
        %4390 = vmatpush1.msra.mxu0 0.0
        %4391 = vmatprep.subr.mxu0 0.0
        %4392 = vmatpush1.msra.mxu0 0.0
        %4393 = vmatprep.subr.mxu0 0.0
        %4394 = vmatpush1.msra.mxu0 0.0
        %4395 = vmatprep.subr.mxu0 0.0
        %4396 = vmatpush1.msra.mxu0 0.0
        %4397 = vmatprep.subr.mxu0 0.0
        %4398 = vmatpush1.msra.mxu0 0.0
        %4399 = vmatprep.subr.mxu0 0.0
        %4400 = vmatpush1.msra.mxu0 0.0
        %4401 = vmatprep.mubr.f32.mxu0 0.0
        %4402 = vmatmul.mubr.f32.gmra.mrb[0].mxu0 %v4242
        %v4403 = vpop.f32.mrb[0].mxu0
        %v4404 = vadd.f32 %v4239, %v4403
        %v4405 = vpop.f32.mrb[0].mxu0
        %4406 = vmatprep.mubr.f32.mxu0 0.0
        %4407 = vmatmul.mubr.f32.gmra.mrb[0].mxu0 %v4245
        %v4408 = vpop.f32.mrb[0].mxu0
        %v4409 = vadd.f32 %v4239, %v4408
        %v4410 = vpop.f32.mrb[0].mxu0
        %4411 = vmatprep.mubr.f32.mxu0 0.0
        %4412 = vmatmul.mubr.f32.gmra.mrb[0].mxu0 %v4248
        %v4413 = vpop.f32.mrb[0].mxu0
        %v4414 = vadd.f32 %v4239, %v4413
        %v4415 = vpop.f32.mrb[0].mxu0
        %4416 = vmatprep.mubr.f32.mxu0 0.0
        %4417 = vmatmul.mubr.f32.gmra.mrb[0].mxu0 %v4251
        %v4418 = vpop.f32.mrb[0].mxu0
        %v4419 = vadd.f32 %v4239, %v4418
        %v4420 = vpop.f32.mrb[0].mxu0
        %4421 = vmatprep.mubr.f32.mxu0 0.0
        %4422 = vmatmul.mubr.f32.gmra.mrb[0].mxu0 %v4254
        %v4423 = vpop.f32.mrb[0].mxu0
        %v4424 = vadd.f32 %v4239, %v4423
        %v4425 = vpop.f32.mrb[0].mxu0
        %4426 = vmatprep.mubr.f32.mxu0 0.0
        %4427 = vmatmul.mubr.f32.gmra.mrb[0].mxu0 %v4257
        %v4428 = vpop.f32.mrb[0].mxu0
        %v4429 = vadd.f32 %v4239, %v4428
        %v4430 = vpop.f32.mrb[0].mxu0
        %4431 = vmatprep.mubr.f32.mxu0 0.0
        %4432 = vmatmul.mubr.f32.gmra.mrb[0].mxu0 %v4260
        %v4433 = vpop.f32.mrb[0].mxu0
        %v4434 = vadd.f32 %v4239, %v4433
        %v4435 = vpop.f32.mrb[0].mxu0
        %4436 = vmatprep.mubr.f32.mxu0 0.0
        %4437 = vmatmul.mubr.f32.gmra.mrb[0].mxu0 %v4263
        %v4438 = vpop.f32.mrb[0].mxu0
        %v4439 = vadd.f32 %v4239, %v4438
        %v4440 = vpop.f32.mrb[0].mxu0
        %4441 = vmatprep.mubr.f32.mxu0 0.0
        %4442 = vmatmul.mubr.f32.gmra.mrb[0].mxu0 %v4266
        %v4443 = vpop.f32.mrb[0].mxu0
        %v4444 = vadd.f32 %v4239, %v4443
        %v4445 = vpop.f32.mrb[0].mxu0
        %4446 = vmatprep.mubr.f32.mxu0 0.0
        %4447 = vmatmul.mubr.f32.gmra.mrb[0].mxu0 %v4269
        %v4448 = vpop.f32.mrb[0].mxu0
        %v4449 = vadd.f32 %v4239, %v4448
        %v4450 = vpop.f32.mrb[0].mxu0
        %4451 = vmatprep.mubr.f32.mxu0 0.0
        %4452 = vmatmul.mubr.f32.gmra.mrb[0].mxu0 %v4272
        %v4453 = vpop.f32.mrb[0].mxu0
        %v4454 = vadd.f32 %v4239, %v4453
        %v4455 = vpop.f32.mrb[0].mxu0
        %4456 = vmatprep.mubr.f32.mxu0 0.0
        %4457 = vmatmul.mubr.f32.gmra.mrb[0].mxu0 %v4275
        %v4458 = vpop.f32.mrb[0].mxu0
        %v4459 = vadd.f32 %v4239, %v4458
        %v4460 = vpop.f32.mrb[0].mxu0
        %4461 = vmatprep.mubr.f32.mxu0 0.0
        %4462 = vmatmul.mubr.f32.gmra.mrb[0].mxu0 %v4278
        %v4463 = vpop.f32.mrb[0].mxu0
        %v4464 = vadd.f32 %v4239, %v4463
        %v4465 = vpop.f32.mrb[0].mxu0
        %4466 = vmatprep.mubr.f32.mxu0 0.0
        %4467 = vmatmul.mubr.f32.gmra.mrb[0].mxu0 %v4281
        %v4468 = vpop.f32.mrb[0].mxu0
        %v4469 = vadd.f32 %v4239, %v4468
        %v4470 = vpop.f32.mrb[0].mxu0
        %4471 = vmatprep.mubr.f32.mxu0 0.0
        %4472 = vmatmul.mubr.f32.gmra.mrb[0].mxu0 %v4284
        %v4473 = vpop.f32.mrb[0].mxu0
        %v4474 = vadd.f32 %v4239, %v4473
        %v4475 = vpop.f32.mrb[0].mxu0
        %4476 = vmatprep.mubr.f32.mxu0 0.0
        %4477 = vmatmul.mubr.f32.gmra.mrb[0].mxu0 %v4287
        %v4478 = vpop.f32.mrb[0].mxu0
        %v4479 = vadd.f32 %v4239, %v4478
        %v4480 = vpop.f32.mrb[0].mxu0
        %4481 = vmatprep.mubr.f32.mxu0 0.0
        %4482 = vmatmul.mubr.f32.gmra.mrb[0].mxu0 %v4290
        %v4483 = vpop.f32.mrb[0].mxu0
        %v4484 = vadd.f32 %v4239, %v4483
        %v4485 = vpop.f32.mrb[0].mxu0
        %4486 = vmatprep.mubr.f32.mxu0 0.0
        %4487 = vmatmul.mubr.f32.gmra.mrb[0].mxu0 %v4293
        %v4488 = vpop.f32.mrb[0].mxu0
        %v4489 = vadd.f32 %v4239, %v4488
        %v4490 = vpop.f32.mrb[0].mxu0
        %4491 = vmatprep.mubr.f32.mxu0 0.0
        %4492 = vmatmul.mubr.f32.gmra.mrb[0].mxu0 %v4296
        %v4493 = vpop.f32.mrb[0].mxu0
        %v4494 = vadd.f32 %v4239, %v4493
        %v4495 = vpop.f32.mrb[0].mxu0
        %4496 = vmatprep.mubr.f32.mxu0 0.0
        %4497 = vmatmul.mubr.f32.gmra.mrb[0].mxu0 %v4299
        %v4498 = vpop.f32.mrb[0].mxu0
        %v4499 = vadd.f32 %v4239, %v4498
        %v4500 = vpop.f32.mrb[0].mxu0
        %4501 = vmatprep.mubr.f32.mxu0 0.0
        %4502 = vmatmul.mubr.f32.gmra.mrb[0].mxu0 %v4302
        %v4503 = vpop.f32.mrb[0].mxu0
        %v4504 = vadd.f32 %v4239, %v4503
        %v4505 = vpop.f32.mrb[0].mxu0
        %4506 = vmatprep.mubr.f32.mxu0 0.0
        %4507 = vmatmul.mubr.f32.gmra.mrb[0].mxu0 %v4305
        %v4508 = vpop.f32.mrb[0].mxu0
        %v4509 = vadd.f32 %v4239, %v4508
        %v4510 = vpop.f32.mrb[0].mxu0
        %4511 = vmatprep.mubr.f32.mxu0 0.0
        %4512 = vmatmul.mubr.f32.gmra.mrb[0].mxu0 %v4308
        %v4513 = vpop.f32.mrb[0].mxu0
        %v4514 = vadd.f32 %v4239, %v4513
        %v4515 = vpop.f32.mrb[0].mxu0
        %4516 = vmatprep.mubr.f32.mxu0 0.0
        %4517 = vmatmul.mubr.f32.gmra.mrb[0].mxu0 %v4311
        %v4518 = vpop.f32.mrb[0].mxu0
        %v4519 = vadd.f32 %v4239, %v4518
        %v4520 = vpop.f32.mrb[0].mxu0
        %4521 = vmatprep.mubr.f32.mxu0 0.0
        %4522 = vmatmul.mubr.f32.gmra.mrb[0].mxu0 %v4314
        %v4523 = vpop.f32.mrb[0].mxu0
        %v4524 = vadd.f32 %v4239, %v4523
        %v4525 = vpop.f32.mrb[0].mxu0
        %4526 = vmatprep.mubr.f32.mxu0 0.0
        %4527 = vmatmul.mubr.f32.gmra.mrb[0].mxu0 %v4317
        %v4528 = vpop.f32.mrb[0].mxu0
        %v4529 = vadd.f32 %v4239, %v4528
        %v4530 = vpop.f32.mrb[0].mxu0
        %4531 = vmatprep.mubr.f32.mxu0 0.0
        %4532 = vmatmul.mubr.f32.gmra.mrb[0].mxu0 %v4320
        %v4533 = vpop.f32.mrb[0].mxu0
        %v4534 = vadd.f32 %v4239, %v4533
        %v4535 = vpop.f32.mrb[0].mxu0
        %4536 = vmatprep.mubr.f32.mxu0 0.0
        %4537 = vmatmul.mubr.f32.gmra.mrb[0].mxu0 %v4323
        %v4538 = vpop.f32.mrb[0].mxu0
        %v4539 = vadd.f32 %v4239, %v4538
        %v4540 = vpop.f32.mrb[0].mxu0
        %4541 = vmatprep.mubr.f32.mxu0 0.0
        %4542 = vmatmul.mubr.f32.gmra.mrb[0].mxu0 %v4326
        %v4543 = vpop.f32.mrb[0].mxu0
        %v4544 = vadd.f32 %v4239, %v4543
        %v4545 = vpop.f32.mrb[0].mxu0
        %4546 = vmatprep.mubr.f32.mxu0 0.0
        %4547 = vmatmul.mubr.f32.gmra.mrb[0].mxu0 %v4329
        %v4548 = vpop.f32.mrb[0].mxu0
        %v4549 = vadd.f32 %v4239, %v4548
        %v4550 = vpop.f32.mrb[0].mxu0
        %4551 = vmatprep.mubr.f32.mxu0 0.0
        %4552 = vmatmul.mubr.f32.gmra.mrb[0].mxu0 %v4332
        %v4553 = vpop.f32.mrb[0].mxu0
        %v4554 = vadd.f32 %v4239, %v4553
        %v4555 = vpop.f32.mrb[0].mxu0
        %4556 = vmatprep.mubr.f32.mxu0 0.0
        %4557 = vmatmul.mubr.f32.gmra.mrb[0].mxu0 %v4335
        %v4558 = vpop.f32.mrb[0].mxu0
        %v4559 = vadd.f32 %v4239, %v4558
        %v4560 = vpop.f32.mrb[0].mxu0
        %4561 = vdwg.mxu0
        %v4562 = vadd.f32 %v4404, %v312
        %v4563 = vadd.f32 %v4409, %v313
        %v4564 = vadd.f32 %v4414, %v314
        %v4565 = vadd.f32 %v4419, %v315
        %v4566 = vadd.f32 %v4424, %v316
        %v4567 = vadd.f32 %v4429, %v317
        %v4568 = vadd.f32 %v4434, %v318
        %v4569 = vadd.f32 %v4439, %v319
        %v4570 = vadd.f32 %v4444, %v320
        %v4571 = vadd.f32 %v4449, %v321
        %v4572 = vadd.f32 %v4454, %v322
        %v4573 = vadd.f32 %v4459, %v323
        %v4574 = vadd.f32 %v4464, %v324
        %v4575 = vadd.f32 %v4469, %v325
        %v4576 = vadd.f32 %v4474, %v326
        %v4577 = vadd.f32 %v4479, %v327
        %v4578 = vadd.f32 %v4484, %v328
        %v4579 = vadd.f32 %v4489, %v329
        %v4580 = vadd.f32 %v4494, %v330
        %v4581 = vadd.f32 %v4499, %v331
        %v4582 = vadd.f32 %v4504, %v332
        %v4583 = vadd.f32 %v4509, %v333
        %v4584 = vadd.f32 %v4514, %v334
        %v4585 = vadd.f32 %v4519, %v335
        %v4586 = vadd.f32 %v4524, %v336
        %v4587 = vadd.f32 %v4529, %v337
        %v4588 = vadd.f32 %v4534, %v338
        %v4589 = vadd.f32 %v4539, %v339
        %v4590 = vadd.f32 %v4544, %v340
        %v4591 = vadd.f32 %v4549, %v341
        %v4592 = vadd.f32 %v4554, %v342
        %v4593 = vadd.f32 %v4559, %v343
        %v4594 = vmax.f32 %v4562, 0.0
        %v4595 = vmax.f32 %v4563, 0.0
        %v4596 = vmax.f32 %v4564, 0.0
        %v4597 = vmax.f32 %v4565, 0.0
        %v4598 = vmax.f32 %v4566, 0.0
        %v4599 = vmax.f32 %v4567, 0.0
        %v4600 = vmax.f32 %v4568, 0.0
        %v4601 = vmax.f32 %v4569, 0.0
        %v4602 = vmax.f32 %v4570, 0.0
        %v4603 = vmax.f32 %v4571, 0.0
        %v4604 = vmax.f32 %v4572, 0.0
        %v4605 = vmax.f32 %v4573, 0.0
        %v4606 = vmax.f32 %v4574, 0.0
        %v4607 = vmax.f32 %v4575, 0.0
        %v4608 = vmax.f32 %v4576, 0.0
        %v4609 = vmax.f32 %v4577, 0.0
        %v4610 = vmax.f32 %v4578, 0.0
        %v4611 = vmax.f32 %v4579, 0.0
        %v4612 = vmax.f32 %v4580, 0.0
        %v4613 = vmax.f32 %v4581, 0.0
        %v4614 = vmax.f32 %v4582, 0.0
        %v4615 = vmax.f32 %v4583, 0.0
        %v4616 = vmax.f32 %v4584, 0.0
        %v4617 = vmax.f32 %v4585, 0.0
        %v4618 = vmax.f32 %v4586, 0.0
        %v4619 = vmax.f32 %v4587, 0.0
        %v4620 = vmax.f32 %v4588, 0.0
        %v4621 = vmax.f32 %v4589, 0.0
        %v4622 = vmax.f32 %v4590, 0.0
        %v4623 = vmax.f32 %v4591, 0.0
        %v4624 = vmax.f32 %v4592, 0.0
        %v4625 = vmax.f32 %v4593, 0.0
        %4626 = vst [vmem:[%s311] sm:$0xff] %v4594
        %4627 = vst [vmem:[%s311 + $0x8] sm:$0xff] %v4595
        %4628 = vst [vmem:[%s311 + $0x10] sm:$0xff] %v4596
        %4629 = vst [vmem:[%s311 + $0x18] sm:$0xff] %v4597
        %4630 = vst [vmem:[%s311 + $0x20] sm:$0xff] %v4598
        %4631 = vst [vmem:[%s311 + $0x28] sm:$0xff] %v4599
        %4632 = vst [vmem:[%s311 + $0x30] sm:$0xff] %v4600
        %4633 = vst [vmem:[%s311 + $0x38] sm:$0xff] %v4601
        %4634 = vst [vmem:[%s311 + $0x40] sm:$0xff] %v4602
        %4635 = vst [vmem:[%s311 + $0x48] sm:$0xff] %v4603
        %4636 = vst [vmem:[%s311 + $0x50] sm:$0xff] %v4604
        %4637 = vst [vmem:[%s311 + $0x58] sm:$0xff] %v4605
        %4638 = vst [vmem:[%s311 + $0x60] sm:$0xff] %v4606
        %4639 = vst [vmem:[%s311 + $0x68] sm:$0xff] %v4607
        %4640 = vst [vmem:[%s311 + $0x70] sm:$0xff] %v4608
        %4641 = vst [vmem:[%s311 + $0x78] sm:$0xff] %v4609
        %4642 = vst [vmem:[%s311 + $0x80] sm:$0xff] %v4610
        %4643 = vst [vmem:[%s311 + $0x88] sm:$0xff] %v4611
        %4644 = vst [vmem:[%s311 + $0x90] sm:$0xff] %v4612
        %4645 = vst [vmem:[%s311 + $0x98] sm:$0xff] %v4613
        %4646 = vst [vmem:[%s311 + $0xa0] sm:$0xff] %v4614
        %4647 = vst [vmem:[%s311 + $0xa8] sm:$0xff] %v4615
        %4648 = vst [vmem:[%s311 + $0xb0] sm:$0xff] %v4616
        %4649 = vst [vmem:[%s311 + $0xb8] sm:$0xff] %v4617
        %4650 = vst [vmem:[%s311 + $0xc0] sm:$0xff] %v4618
        %4651 = vst [vmem:[%s311 + $0xc8] sm:$0xff] %v4619
        %4652 = vst [vmem:[%s311 + $0xd0] sm:$0xff] %v4620
        %4653 = vst [vmem:[%s311 + $0xd8] sm:$0xff] %v4621
        %4654 = vst [vmem:[%s311 + $0xe0] sm:$0xff] %v4622
        %4655 = vst [vmem:[%s311 + $0xe8] sm:$0xff] %v4623
        %4656 = vst [vmem:[%s311 + $0xf0] sm:$0xff] %v4624
        %4657 = vst [vmem:[%s311 + $0xf8] sm:$0xff] %v4625
        %s4658 = sand.u32 %s185, 1
        %s4659 = scalar_lea.sflag [#allocation5], %s4658
        %s4660 = sand.u32 %s185, 1
        %s4661 = smul.addr %s4660, 256
        %s4662 = scalar_lea.vmem [#allocation8], %s4661
        // Predicated region
        $region57: #{tpu_custom_call.1} parent=47 // pred_check
          %p4663 = pneg %p195
        $region58: #{tpu_custom_call.1} parent=47 // pred_check_branch
          %4665 = sbr.rel (%p4663) target = $region60
        $region59: #{tpu_custom_call.1} parent=47 // pred_region
          %s4667 = ssub.s32 4096, 4096
          %4668 = vsyncadd %s4659, %s4667
          %s4669 = smul.addr %s25, 32
          %s4670 = smul.addr %s4669, 128
          %s4671 = scalar_lea.hbm %s7, %s4670
          %s4672 = sshll.u32 %s4662, 4
          %s4673 = int_to_ptr.vmem [resolvable:$true] %s4672
          %4678 = dma.vmem_to_hbm [thread:$0]  %s4673, 4096, %s4671, %s4659, 128, 128, 8
        $region60: #{tpu_custom_call.1} parent=47 // pred_fallthru
          _
      $region48: #{tpu_custom_call.1} parent=5 // pred_fallthru
        _
      %p4679 = scmp.le.s32.totalorder 2, %s20
      // Predicated region
      $region61: #{tpu_custom_call.1} parent=5 // pred_check
        %p4680 = pneg %p4679
      $region62: #{tpu_custom_call.1} parent=5 // pred_check_branch
        %4682 = sbr.rel (%p4680) target = $region64
      $region63: #{tpu_custom_call.1} parent=5 // pred_region
        %s4683 = ssub.s32 %s20, 2
        // Predicated region
        $region65: #{tpu_custom_call.1} parent=63 // pred_check
          %p4684 = pneg %p201
        $region66: #{tpu_custom_call.1} parent=63 // pred_check_branch
          %4686 = sbr.rel (%p4684) target = $region68
        $region67: #{tpu_custom_call.1} parent=63 // pred_region
          %s4687 = sand.u32 %s186, 1
          %s4688 = scalar_lea.sflag [#allocation5], %s4687
          %s4689 = sand.u32 %s186, 1
          %s4690 = smul.addr %s4689, 256
          %s4691 = scalar_lea.vmem [#allocation8], %s4690
          %4692 = dma.done %s4688, 4096
        $region68: #{tpu_custom_call.1} parent=63 // pred_fallthru
          _
      $region64: #{tpu_custom_call.1} parent=5 // pred_fallthru
        _
    $region6: #{tpu_custom_call.1} parent=1 // loop_footer
      %s24 = sadd.s32 1, %s20
    $region7: #{tpu_custom_call.1} parent=1 // loop_footer_branch
      %19 = sbr.rel target = $region3
    $region8: #{tpu_custom_call.1} parent=1 // loop_exit
      _
    %4693 = vsyncpa [#allocation4], 1
    %s4694 = scalar_lea.sflag [#allocation4], 1
    %4695 = vsyncpa %s4694, 1
    %4696 = vsyncpa [#allocation7], 1
    %4697 = vsyncpa [#allocation5], 1
    %s4698 = scalar_lea.sflag [#allocation5], 1
    %4699 = vsyncpa %s4698, 1

</llo_original>
